<compile_context>
chip_gen: v7x
topology: tpu7x:2x2x1
jax: 0.10.0
libtpu: 0.0.40
codegen_flags: <defaults>
</compile_context>

<pallas_src>
import numpy as np
import jax
import jax.numpy as jnp
from jax.experimental import pallas as pl
from jax.experimental.pallas import tpu as pltpu


# ---------------------------------------------------------------------------
# Kernel
# ---------------------------------------------------------------------------
def _xf_kernel(x_ref, k0_ref, m_ref, wf2_ref, wxf_ref, wixf_ref,
               xfd_ref, xfa_ref):
    """One grid step = one block of B batch elements.

    Rows are [real_flat(nf_pad) | imag_flat(nf_pad)].  Complex linear
    operators are real-embedded (c2, c2) matrices, so every transform is one
    MXU matmul (bf16 operands, f32 accumulation).
    """
    B, nt, c2 = x_ref.shape
    nf = c2 // 2

    x = x_ref[...]                                   # (B, nt, c2) f32
    m = m_ref[...]
    k0 = k0_ref[...]

    def dot(a, w_ref):
        # Weights are stored bf16; cast LHS explicitly so this is a single
        # native bf16 MXU pass with f32 accumulation (numerically identical
        # to a default-precision f32 dot).
        return jnp.dot(a.astype(jnp.bfloat16), w_ref[...],
                       preferred_element_type=jnp.float32)

    # ---- temporal sums: sum_t fft2(x_t) == fft2(sum_t x_t) -> 1-frame fft2 --
    x_sum = jnp.sum(x, axis=1)                       # (B, c2)
    m_sum = jnp.sum(m, axis=1)                       # (B, c2)

    # k_avg = sum_t(k) / clamp(sum_t(mask), min=1), per real/imag channel.
    k_sum = dot(x_sum, wf2_ref)                      # ortho fft2 of summed frame
    inv_den = pl.reciprocal(jnp.maximum(m_sum, 1.0), approx=True)
    k_avg = k_sum * inv_den                          # (B, c2) f32

    # ---- per-frame direct x->f transform (used by the difference branch) ----
    xf_dir = dot(x.reshape(B * nt, c2), wxf_ref).reshape(B, nt, c2)

    # ---- DC baseline branch: k_dc = k_avg + mask * (k0 - k_avg)  (complex) --
    k_avg_b = k_avg[:, None, :]                      # (B, 1, c2)
    d = k0 - k_avg_b
    dr, di = d[..., :nf], d[..., nf:]
    mr, mi = m[..., :nf], m[..., nf:]
    pr = mr * dr - mi * di
    pi = mr * di + mi * dr
    k_dc = k_avg_b + jnp.concatenate([pr, pi], axis=-1)   # (B, nt, c2)

    # ---- single merged W_IXF pass over [k_dc frames ; k_avg] ----------------
    #   rows 0 .. B*nt-1 : x_f_avg frames      = G(ifft2(k_dc))
    #   rows B*nt ..     : x_f "base" (per b)  = G(ifft2(k_avg))
    stacked = jnp.concatenate([k_dc.reshape(B * nt, c2), k_avg], axis=0)
    res = dot(stacked, wixf_ref)                     # (B*nt + B, c2)
    xfa_ref[...] = res[:B * nt].reshape(B, nt, c2)
    xf_base = res[B * nt:]                           # (B, c2)

    # x_f_diff = G(x) - G(ifft2(k_avg))   (uses ifft2(fft2(x)) == x)
    xfd_ref[...] = xf_dir - xf_base[:, None, :]


# ---------------------------------------------------------------------------
# Matrix construction (host-side, numpy)
# ---------------------------------------------------------------------------
def _dft_matrix(nn):
    idx = np.arange(nn)
    ang = -2.0 * np.pi * np.outer(idx, idx) / nn
    return np.exp(1j * ang) / np.sqrt(nn)            # complex128, ortho


def _real_embed(op_c):
    """Complex operator Op (out = Op @ v) -> real weight W so that
    [vr | vi] @ W = [Re(Op v) | Im(Op v)].  Stored in bf16 (MXU rounds the
    operands to bf16 at default precision anyway)."""
    w = op_c.T                                       # row-vector convention
    wr = np.real(w).astype(np.float32)
    wi = np.imag(w).astype(np.float32)
    top = np.concatenate([wr, wi], axis=1)
    bot = np.concatenate([-wi, wr], axis=1)
    return jnp.asarray(np.concatenate([top, bot], axis=0), dtype=jnp.bfloat16)


def _build_matrices(nx, ny, nf_pad, norm=True):
    nf = nx * ny
    fx = _dft_matrix(nx)
    fy = _dft_matrix(ny)

    # Shifted DFT along ny (torch ifftshift / fft / fftshift folded):
    #   G[w, y] = F[(w+s) % ny, (y-h) % ny],  s=(ny+1)//2, h=ny//2
    s = (ny + 1) // 2
    h = ny // 2
    iw = (np.arange(ny) + s) % ny
    iy = (np.arange(ny) - h) % ny
    fy_s = fy if norm else fy * np.sqrt(ny)          # norm=False -> unnormalized
    g = fy_s[np.ix_(iw, iy)]

    op_f2 = np.kron(fx, fy)                          # ortho fft2 over (nx, ny)
    op_xf = np.kron(np.eye(nx), g)                   # shifted DFT along ny
    op_ixf = np.kron(np.conj(fx), g @ np.conj(fy))   # shifted-DFT ∘ ortho ifft2

    pad = nf_pad - nf

    def emb(op):
        if pad:
            op = np.pad(op, ((0, pad), (0, pad)))    # zero rows/cols for lane pad
        return _real_embed(op)

    return emb(op_f2), emb(op_xf), emb(op_ixf)


# ---------------------------------------------------------------------------
# Sizing heuristics
# ---------------------------------------------------------------------------
def _pick_batch_block(n, nt, target_rows=512):
    """Fold as many batch elements per grid step as fit the MXU row budget.
    The grid is a serial loop on one TensorCore, so more grid steps only add
    ~0.35 us/step overhead and shrink the matmul M dimension -- do NOT force
    multiple grid steps."""
    best = 1
    for cand in range(1, n + 1):
        if n % cand == 0 and cand * nt <= max(target_rows, nt):
            best = cand
    return best


def _vmem_budget(c2, block_rows, weight_buffers):
    """(budget_bytes, cap_bytes) for the kernel's VMEM footprint."""
    weight_bytes = 3 * c2 * c2 * 2 * weight_buffers   # bf16 Kronecker weights
    data_block = block_rows * c2 * 4                  # one f32 data block
    io_bytes = (3 + 2) * data_block * 2               # double-buffered in/out
    scratch = 8 * data_block + (4 << 20)              # in-kernel temporaries + margin
    budget = weight_bytes + io_bytes + scratch
    try:
        cap = int(pltpu.get_tpu_info().vmem_capacity_bytes)   # 128 MiB v5e/v6e, 64 MiB v7x
    except Exception:
        cap = 64 << 20                                # conservative fallback (v7x)
    return budget, (cap * 7) // 8                     # leave runtime headroom


# ---------------------------------------------------------------------------
# pallas_call wrapper (packed layout)
# ---------------------------------------------------------------------------
def _call_kernel(xp, k0p, mp, w_f2, w_xf, w_ixf, *, B, single_buffer_weights):
    n, nt, c2 = xp.shape
    grid = (n // B,)

    data_spec = pl.BlockSpec((B, nt, c2), lambda b: (b, 0, 0))
    if single_buffer_weights:
        # Grid-invariant weights: keep ONE VMEM copy instead of the default
        # double-buffered 2x footprint (critical margin on v7x's 64 MiB VMEM).
        mat_spec = pl.BlockSpec((c2, c2), lambda b: (0, 0),
                                pipeline_mode=pl.Buffered(1))
        w_bufs = 1
    else:
        mat_spec = pl.BlockSpec((c2, c2), lambda b: (0, 0))
        w_bufs = 2

    budget, cap = _vmem_budget(c2, B * nt, w_bufs)
    vmem_limit = int(min(max(budget, 32 << 20), cap))

    out_sds = (jax.ShapeDtypeStruct((n, nt, c2), jnp.float32),) * 2

    return pl.pallas_call(
        _xf_kernel,
        out_shape=out_sds,
        grid_spec=pltpu.PrefetchScalarGridSpec(
            num_scalar_prefetch=0,
            grid=grid,
            in_specs=[data_spec] * 3 + [mat_spec] * 3,
            out_specs=[data_spec, data_spec],
        ),
        compiler_params=pltpu.CompilerParams(
            # "parallel" is harmless; dual-TC splitting on v7x only pays once
            # per-core M is MXU-sized, so we fold the batch instead.
            dimension_semantics=("parallel",),
            vmem_limit_bytes=vmem_limit,
        ),
    )(xp, k0p, mp, w_f2, w_xf, w_ixf)


# ---------------------------------------------------------------------------
# Public wrapper (PyTorch layout)
# ---------------------------------------------------------------------------
def transform_data_in_xf_space_ta(x, k0, mask, *, divide_by_n=False, norm=True,
                                  batch_block=None):
    """x, k0, mask: [n, 2, nx, ny, nt] float32 (PyTorch layout).
    Returns (x_f_diff, x_f_avg), each [n, 2, nx, ny, nt]."""
    assert not divide_by_n  # TODO(synk): divide_by_n=True path not implemented
    n, two, nx, ny, nt = x.shape
    assert two == 2
    nf = nx * ny
    nf_pad = max(128, -(-nf // 128) * 128)            # keep lanes 128-aligned
    c2 = 2 * nf_pad

    # VMEM feasibility (consistent with bf16 + single-buffered weights).
    B = _pick_batch_block(n, nt) if batch_block is None else batch_block
    assert n % B == 0
    budget, cap = _vmem_budget(c2, B * nt, weight_buffers=1)
    assert budget <= cap, (
        "dense Kronecker DFT weights do not fit VMEM at this nx*ny "
        "(TODO(synk): separable two-stage ny/nx transform needed)")

    # TODO(synk): bandwidth-critical callers should feed / consume the packed
    # [n, nt, 2*nf_pad] layout directly (pack/unpack below are full HBM
    # read+write passes done by XLA outside the kernel).
    def pack(a):
        a = jnp.transpose(a, (0, 4, 1, 2, 3)).reshape(n, nt, 2, nf)
        if nf_pad != nf:
            a = jnp.pad(a, ((0, 0), (0, 0), (0, 0), (0, nf_pad - nf)))
        return a.reshape(n, nt, c2)

    xp, k0p, mp = pack(x), pack(k0), pack(mask)
    w_f2, w_xf, w_ixf = _build_matrices(nx, ny, nf_pad, norm=norm)

    try:
        xfd, xfa = _call_kernel(xp, k0p, mp, w_f2, w_xf, w_ixf,
                                B=B, single_buffer_weights=True)
    except AssertionError:
        raise
    except Exception:
        # Fallback for jax versions without BlockSpec(pipeline_mode=Buffered(1)).
        xfd, xfa = _call_kernel(xp, k0p, mp, w_f2, w_xf, w_ixf,
                                B=B, single_buffer_weights=False)

    def unpack(a):
        a = a.reshape(n, nt, 2, nf_pad)[..., :nf].reshape(n, nt, 2, nx, ny)
        return jnp.transpose(a, (0, 2, 3, 4, 1))

    return unpack(xfd), unpack(xfa)


# ---------------------------------------------------------------------------
# Pure-JAX reference (mirror of the PyTorch forward) for a sanity check
# ---------------------------------------------------------------------------
def _reference(x, k0, mask):
    xp = jnp.transpose(x, (0, 4, 2, 3, 1))
    kp = jnp.transpose(k0, (0, 4, 2, 3, 1))
    mp = jnp.transpose(mask, (0, 4, 2, 3, 1))
    xc = xp[..., 0] + 1j * xp[..., 1]
    k0c = kp[..., 0] + 1j * kp[..., 1]
    mc = mp[..., 0] + 1j * mp[..., 1]
    kxc = jnp.fft.fft2(xc, axes=(-2, -1), norm='ortho')
    k = jnp.stack([kxc.real, kxc.imag], -1)
    k_avg = jnp.sum(k, 1) / jnp.maximum(jnp.sum(mp, 1), 1.0)
    k_avg = jnp.broadcast_to(k_avg[:, None], k.shape)
    k_avg_c = k_avg[..., 0] + 1j * k_avg[..., 1]
    x_diff = jnp.fft.ifft2(kxc - k_avg_c, axes=(-2, -1), norm='ortho')
    k_avg_dc = (1 - mc) * k_avg_c + mc * k0c
    x_avg = jnp.fft.ifft2(k_avg_dc, axes=(-2, -1), norm='ortho')

    def to_xf(z):                                   # z: [n, nt, nx, ny] complex
        zp = jnp.transpose(z, (0, 2, 3, 1))         # [n, nx, ny, nt]
        zf = jnp.fft.fftshift(
            jnp.fft.fft(jnp.fft.ifftshift(zp, axes=-2), axis=-2, norm='ortho'),
            axes=-2)
        zr = jnp.stack([zf.real, zf.imag], -1)      # [n, nx, ny, nt, 2]
        return jnp.transpose(zr, (0, 4, 1, 2, 3))   # [n, 2, nx, ny, nt]

    return to_xf(x_diff), to_xf(x_avg)


if __name__ == "__main__":
    key = jax.random.PRNGKey(0)
    n, nx, ny, nt = 2, 16, 16, 8
    kx_, kk_, km_ = jax.random.split(key, 3)

    x = jax.random.normal(kx_, (n, 2, nx, ny, nt), dtype=jnp.float32)
    m1 = (jax.random.uniform(km_, (n, 1, nx, ny, nt)) < 0.5).astype(jnp.float32)
    mask = jnp.tile(m1, (1, 2, 1, 1, 1))            # same mask on real/imag channels
    k0 = jax.random.normal(kk_, (n, 2, nx, ny, nt), dtype=jnp.float32) * mask

    xfd, xfa = transform_data_in_xf_space_ta(x, k0, mask)
    xfd = jax.block_until_ready(xfd)
    xfa = jax.block_until_ready(xfa)

    rfd, rfa = _reference(x, k0, mask)
    np.testing.assert_allclose(np.asarray(xfd), np.asarray(rfd), atol=5e-2, rtol=5e-2)
    np.testing.assert_allclose(np.asarray(xfa), np.asarray(rfa), atol=5e-2, rtol=5e-2)

    print("KERNEL_OK")
</pallas_src>

<mosaic_0001>
module attributes {stable_mosaic.version = 11 : i64} {
  func.func @_xf_kernel(%arg0: i32, %arg1: memref<2x8x512xf32, #tpu.memory_space<vmem>>, %arg2: memref<2x8x512xf32, #tpu.memory_space<vmem>>, %arg3: memref<2x8x512xf32, #tpu.memory_space<vmem>>, %arg4: memref<512x512xbf16, #tpu.memory_space<vmem>>, %arg5: memref<512x512xbf16, #tpu.memory_space<vmem>>, %arg6: memref<512x512xbf16, #tpu.memory_space<vmem>>, %arg7: memref<2x8x512xf32, #tpu.memory_space<vmem>>, %arg8: memref<2x8x512xf32, #tpu.memory_space<vmem>>) attributes {dimension_semantics = [#tpu.dimension_semantics<parallel>], iteration_bounds = array<i64: 1>, scalar_prefetch = 0 : i64, scratch_operands = 0 : i64, tpu.core_type = #tpu.core_type<tc>, window_params = [{transform_indices = @transform_0, window_bounds = array<i64: 2, 8, 512>}, {transform_indices = @transform_1, window_bounds = array<i64: 2, 8, 512>}, {transform_indices = @transform_2, window_bounds = array<i64: 2, 8, 512>}, {pipeline_mode = #tpu.pipeline_mode<synchronous>, transform_indices = @transform_3, window_bounds = array<i64: 512, 512>}, {pipeline_mode = #tpu.pipeline_mode<synchronous>, transform_indices = @transform_4, window_bounds = array<i64: 512, 512>}, {pipeline_mode = #tpu.pipeline_mode<synchronous>, transform_indices = @transform_5, window_bounds = array<i64: 512, 512>}, {transform_indices = @transform_6, window_bounds = array<i64: 2, 8, 512>}, {transform_indices = @transform_7, window_bounds = array<i64: 2, 8, 512>}]} {
    %c0 = arith.constant 0 : index
    %c0_0 = arith.constant 0 : index
    %c0_1 = arith.constant 0 : index
    %0 = vector.load %arg1[%c0, %c0_0, %c0_1] : memref<2x8x512xf32, #tpu.memory_space<vmem>>, vector<2x8x512xf32>
    %c0_2 = arith.constant 0 : index
    %c0_3 = arith.constant 0 : index
    %c0_4 = arith.constant 0 : index
    %1 = vector.load %arg3[%c0_2, %c0_3, %c0_4] : memref<2x8x512xf32, #tpu.memory_space<vmem>>, vector<2x8x512xf32>
    %c0_5 = arith.constant 0 : index
    %c0_6 = arith.constant 0 : index
    %c0_7 = arith.constant 0 : index
    %2 = vector.load %arg2[%c0_5, %c0_6, %c0_7] : memref<2x8x512xf32, #tpu.memory_space<vmem>>, vector<2x8x512xf32>
    %cst = arith.constant dense<0.000000e+00> : vector<2x512xf32>
    %3 = vector.multi_reduction <add>, %0, %cst [1] : vector<2x8x512xf32> to vector<2x512xf32>
    %cst_8 = arith.constant dense<0.000000e+00> : vector<2x512xf32>
    %4 = vector.multi_reduction <add>, %1, %cst_8 [1] : vector<2x8x512xf32> to vector<2x512xf32>
    %5 = arith.truncf %3 : vector<2x512xf32> to vector<2x512xbf16>
    %c0_9 = arith.constant 0 : index
    %c0_10 = arith.constant 0 : index
    %6 = vector.load %arg4[%c0_9, %c0_10] : memref<512x512xbf16, #tpu.memory_space<vmem>>, vector<512x512xbf16>
    %cst_11 = arith.constant dense<0.000000e+00> : vector<2x512xf32>
    %7 = tpu.matmul %5, %6, %cst_11 {dimension_numbers = #tpu.dot_dimension_numbers<[1], [0], [0], [1], [0, 0, 1, 1], [], []>} : vector<2x512xbf16>, vector<512x512xbf16>, vector<2x512xf32> -> vector<2x512xf32>
    %cst_12 = arith.constant 1.000000e+00 : f32
    %8 = vector.broadcast %cst_12 : f32 to vector<2x512xf32>
    %9 = arith.maximumf %4, %8 : vector<2x512xf32>
    %10 = tpu.reciprocal %9 {approx = true} : vector<2x512xf32> -> vector<2x512xf32>
    %11 = arith.mulf %7, %10 : vector<2x512xf32>
    %12 = vector.shape_cast %0 : vector<2x8x512xf32> to vector<16x512xf32>
    %13 = arith.truncf %12 : vector<16x512xf32> to vector<16x512xbf16>
    %c0_13 = arith.constant 0 : index
    %c0_14 = arith.constant 0 : index
    %14 = vector.load %arg5[%c0_13, %c0_14] : memref<512x512xbf16, #tpu.memory_space<vmem>>, vector<512x512xbf16>
    %cst_15 = arith.constant dense<0.000000e+00> : vector<16x512xf32>
    %15 = tpu.matmul %13, %14, %cst_15 {dimension_numbers = #tpu.dot_dimension_numbers<[1], [0], [0], [1], [0, 0, 1, 1], [], []>} : vector<16x512xbf16>, vector<512x512xbf16>, vector<16x512xf32> -> vector<16x512xf32>
    %16 = vector.shape_cast %15 : vector<16x512xf32> to vector<2x8x512xf32>
    %17 = vector.shape_cast %11 : vector<2x512xf32> to vector<2x1x512xf32>
    %18 = vector.broadcast %17 : vector<2x1x512xf32> to vector<2x8x512xf32>
    %19 = arith.subf %2, %18 : vector<2x8x512xf32>
    %20 = vector.extract_strided_slice %19 {offsets = [0, 0, 0], sizes = [2, 8, 256], strides = [1, 1, 1]} : vector<2x8x512xf32> to vector<2x8x256xf32>
    %21 = vector.extract_strided_slice %19 {offsets = [0, 0, 256], sizes = [2, 8, 256], strides = [1, 1, 1]} : vector<2x8x512xf32> to vector<2x8x256xf32>
    %22 = vector.extract_strided_slice %1 {offsets = [0, 0, 0], sizes = [2, 8, 256], strides = [1, 1, 1]} : vector<2x8x512xf32> to vector<2x8x256xf32>
    %23 = vector.extract_strided_slice %1 {offsets = [0, 0, 256], sizes = [2, 8, 256], strides = [1, 1, 1]} : vector<2x8x512xf32> to vector<2x8x256xf32>
    %24 = arith.mulf %22, %20 : vector<2x8x256xf32>
    %25 = arith.mulf %23, %21 : vector<2x8x256xf32>
    %26 = arith.subf %24, %25 : vector<2x8x256xf32>
    %27 = arith.mulf %22, %21 : vector<2x8x256xf32>
    %28 = arith.mulf %23, %20 : vector<2x8x256xf32>
    %29 = arith.addf %27, %28 : vector<2x8x256xf32>
    %30 = tpu.concatenate %26, %29 in 2 : vector<2x8x256xf32>, vector<2x8x256xf32> -> vector<2x8x512xf32>
    %31 = vector.broadcast %17 : vector<2x1x512xf32> to vector<2x8x512xf32>
    %32 = arith.addf %31, %30 : vector<2x8x512xf32>
    %33 = vector.shape_cast %32 : vector<2x8x512xf32> to vector<16x512xf32>
    %34 = tpu.concatenate %33, %11 in 0 : vector<16x512xf32>, vector<2x512xf32> -> vector<18x512xf32>
    %35 = arith.truncf %34 : vector<18x512xf32> to vector<18x512xbf16>
    %c0_16 = arith.constant 0 : index
    %c0_17 = arith.constant 0 : index
    %36 = vector.load %arg6[%c0_16, %c0_17] : memref<512x512xbf16, #tpu.memory_space<vmem>>, vector<512x512xbf16>
    %cst_18 = arith.constant dense<0.000000e+00> : vector<18x512xf32>
    %37 = tpu.matmul %35, %36, %cst_18 {dimension_numbers = #tpu.dot_dimension_numbers<[1], [0], [0], [1], [0, 0, 1, 1], [], []>} : vector<18x512xbf16>, vector<512x512xbf16>, vector<18x512xf32> -> vector<18x512xf32>
    %38 = vector.extract_strided_slice %37 {offsets = [0, 0], sizes = [16, 512], strides = [1, 1]} : vector<18x512xf32> to vector<16x512xf32>
    %39 = vector.shape_cast %38 : vector<16x512xf32> to vector<2x8x512xf32>
    %c0_19 = arith.constant 0 : index
    %c0_20 = arith.constant 0 : index
    %c0_21 = arith.constant 0 : index
    %40 = vector.load %arg8[%c0_19, %c0_20, %c0_21] : memref<2x8x512xf32, #tpu.memory_space<vmem>>, vector<2x8x512xf32>
    tpu.vector_store %arg8[%c0_19, %c0_20, %c0_21], %39 {strides = array<i32>} : memref<2x8x512xf32, #tpu.memory_space<vmem>>, vector<2x8x512xf32>,
    %41 = vector.extract_strided_slice %37 {offsets = [16, 0], sizes = [2, 512], strides = [1, 1]} : vector<18x512xf32> to vector<2x512xf32>
    %42 = vector.shape_cast %41 : vector<2x512xf32> to vector<2x1x512xf32>
    %43 = vector.broadcast %42 : vector<2x1x512xf32> to vector<2x8x512xf32>
    %44 = arith.subf %16, %43 : vector<2x8x512xf32>
    %c0_22 = arith.constant 0 : index
    %c0_23 = arith.constant 0 : index
    %c0_24 = arith.constant 0 : index
    %45 = vector.load %arg7[%c0_22, %c0_23, %c0_24] : memref<2x8x512xf32, #tpu.memory_space<vmem>>, vector<2x8x512xf32>
    tpu.vector_store %arg7[%c0_22, %c0_23, %c0_24], %44 {strides = array<i32>} : memref<2x8x512xf32, #tpu.memory_space<vmem>>, vector<2x8x512xf32>,
    return
  }
  func.func @transform_0(%arg0: i32) -> (i32, i32, i32) {
    %c0_i32 = arith.constant 0 : i32
    %c0_i32_0 = arith.constant 0 : i32
    %c0_i32_1 = arith.constant 0 : i32
    return %arg0, %c0_i32, %c0_i32_0 : i32, i32, i32
  }
  func.func @transform_1(%arg0: i32) -> (i32, i32, i32) {
    %c0_i32 = arith.constant 0 : i32
    %c0_i32_0 = arith.constant 0 : i32
    %c0_i32_1 = arith.constant 0 : i32
    return %arg0, %c0_i32, %c0_i32_0 : i32, i32, i32
  }
  func.func @transform_2(%arg0: i32) -> (i32, i32, i32) {
    %c0_i32 = arith.constant 0 : i32
    %c0_i32_0 = arith.constant 0 : i32
    %c0_i32_1 = arith.constant 0 : i32
    return %arg0, %c0_i32, %c0_i32_0 : i32, i32, i32
  }
  func.func @transform_3(%arg0: i32) -> (i32, i32) {
    %c0_i32 = arith.constant 0 : i32
    %c0_i32_0 = arith.constant 0 : i32
    %c0_i32_1 = arith.constant 0 : i32
    return %c0_i32, %c0_i32_0 : i32, i32
  }
  func.func @transform_4(%arg0: i32) -> (i32, i32) {
    %c0_i32 = arith.constant 0 : i32
    %c0_i32_0 = arith.constant 0 : i32
    %c0_i32_1 = arith.constant 0 : i32
    return %c0_i32, %c0_i32_0 : i32, i32
  }
  func.func @transform_5(%arg0: i32) -> (i32, i32) {
    %c0_i32 = arith.constant 0 : i32
    %c0_i32_0 = arith.constant 0 : i32
    %c0_i32_1 = arith.constant 0 : i32
    return %c0_i32, %c0_i32_0 : i32, i32
  }
  func.func @transform_6(%arg0: i32) -> (i32, i32, i32) {
    %c0_i32 = arith.constant 0 : i32
    %c0_i32_0 = arith.constant 0 : i32
    %c0_i32_1 = arith.constant 0 : i32
    return %arg0, %c0_i32, %c0_i32_0 : i32, i32, i32
  }
  func.func @transform_7(%arg0: i32) -> (i32, i32, i32) {
    %c0_i32 = arith.constant 0 : i32
    %c0_i32_0 = arith.constant 0 : i32
    %c0_i32_1 = arith.constant 0 : i32
    return %arg0, %c0_i32, %c0_i32_0 : i32, i32, i32
  }
}

module attributes {stable_mosaic.version = 11 : i64} {
  func.func @_xf_kernel(%arg0: i32, %arg1: memref<2x8x512xf32, #tpu.memory_space<vmem>>, %arg2: memref<2x8x512xf32, #tpu.memory_space<vmem>>, %arg3: memref<2x8x512xf32, #tpu.memory_space<vmem>>, %arg4: memref<512x512xbf16, #tpu.memory_space<vmem>>, %arg5: memref<512x512xbf16, #tpu.memory_space<vmem>>, %arg6: memref<512x512xbf16, #tpu.memory_space<vmem>>, %arg7: memref<2x8x512xf32, #tpu.memory_space<vmem>>, %arg8: memref<2x8x512xf32, #tpu.memory_space<vmem>>) attributes {dimension_semantics = [#tpu.dimension_semantics<parallel>], iteration_bounds = array<i64: 1>, scalar_prefetch = 0 : i64, scratch_operands = 0 : i64, tpu.core_type = #tpu.core_type<tc>, window_params = [{transform_indices = @transform_0, window_bounds = array<i64: 2, 8, 512>}, {transform_indices = @transform_1, window_bounds = array<i64: 2, 8, 512>}, {transform_indices = @transform_2, window_bounds = array<i64: 2, 8, 512>}, {pipeline_mode = #tpu.pipeline_mode<synchronous>, transform_indices = @transform_3, window_bounds = array<i64: 512, 512>}, {pipeline_mode = #tpu.pipeline_mode<synchronous>, transform_indices = @transform_4, window_bounds = array<i64: 512, 512>}, {pipeline_mode = #tpu.pipeline_mode<synchronous>, transform_indices = @transform_5, window_bounds = array<i64: 512, 512>}, {transform_indices = @transform_6, window_bounds = array<i64: 2, 8, 512>}, {transform_indices = @transform_7, window_bounds = array<i64: 2, 8, 512>}]} {
    %c0 = arith.constant 0 : index
    %c0_0 = arith.constant 0 : index
    %c0_1 = arith.constant 0 : index
    %0 = vector.load %arg1[%c0, %c0_0, %c0_1] : memref<2x8x512xf32, #tpu.memory_space<vmem>>, vector<2x8x512xf32>
    %c0_2 = arith.constant 0 : index
    %c0_3 = arith.constant 0 : index
    %c0_4 = arith.constant 0 : index
    %1 = vector.load %arg3[%c0_2, %c0_3, %c0_4] : memref<2x8x512xf32, #tpu.memory_space<vmem>>, vector<2x8x512xf32>
    %c0_5 = arith.constant 0 : index
    %c0_6 = arith.constant 0 : index
    %c0_7 = arith.constant 0 : index
    %2 = vector.load %arg2[%c0_5, %c0_6, %c0_7] : memref<2x8x512xf32, #tpu.memory_space<vmem>>, vector<2x8x512xf32>
    %cst = arith.constant dense<0.000000e+00> : vector<2x512xf32>
    %3 = vector.multi_reduction <add>, %0, %cst [1] : vector<2x8x512xf32> to vector<2x512xf32>
    %cst_8 = arith.constant dense<0.000000e+00> : vector<2x512xf32>
    %4 = vector.multi_reduction <add>, %1, %cst_8 [1] : vector<2x8x512xf32> to vector<2x512xf32>
    %5 = arith.truncf %3 : vector<2x512xf32> to vector<2x512xbf16>
    %c0_9 = arith.constant 0 : index
    %c0_10 = arith.constant 0 : index
    %6 = vector.load %arg4[%c0_9, %c0_10] : memref<512x512xbf16, #tpu.memory_space<vmem>>, vector<512x512xbf16>
    %cst_11 = arith.constant dense<0.000000e+00> : vector<2x512xf32>
    %7 = tpu.matmul %5, %6, %cst_11 {dimension_numbers = #tpu.dot_dimension_numbers<[1], [0], [0], [1], [0, 0, 1, 1], [], []>} : vector<2x512xbf16>, vector<512x512xbf16>, vector<2x512xf32> -> vector<2x512xf32>
    %cst_12 = arith.constant 1.000000e+00 : f32
    %8 = vector.broadcast %cst_12 : f32 to vector<2x512xf32>
    %9 = arith.maximumf %4, %8 : vector<2x512xf32>
    %10 = tpu.reciprocal %9 {approx = true} : vector<2x512xf32> -> vector<2x512xf32>
    %11 = arith.mulf %7, %10 : vector<2x512xf32>
    %12 = vector.shape_cast %0 : vector<2x8x512xf32> to vector<16x512xf32>
    %13 = arith.truncf %12 : vector<16x512xf32> to vector<16x512xbf16>
    %c0_13 = arith.constant 0 : index
    %c0_14 = arith.constant 0 : index
    %14 = vector.load %arg5[%c0_13, %c0_14] : memref<512x512xbf16, #tpu.memory_space<vmem>>, vector<512x512xbf16>
    %cst_15 = arith.constant dense<0.000000e+00> : vector<16x512xf32>
    %15 = tpu.matmul %13, %14, %cst_15 {dimension_numbers = #tpu.dot_dimension_numbers<[1], [0], [0], [1], [0, 0, 1, 1], [], []>} : vector<16x512xbf16>, vector<512x512xbf16>, vector<16x512xf32> -> vector<16x512xf32>
    %16 = vector.shape_cast %15 : vector<16x512xf32> to vector<2x8x512xf32>
    %17 = vector.shape_cast %11 : vector<2x512xf32> to vector<2x1x512xf32>
    %18 = vector.broadcast %17 : vector<2x1x512xf32> to vector<2x8x512xf32>
    %19 = arith.subf %2, %18 : vector<2x8x512xf32>
    %20 = vector.extract_strided_slice %19 {offsets = [0, 0, 0], sizes = [2, 8, 256], strides = [1, 1, 1]} : vector<2x8x512xf32> to vector<2x8x256xf32>
    %21 = vector.extract_strided_slice %19 {offsets = [0, 0, 256], sizes = [2, 8, 256], strides = [1, 1, 1]} : vector<2x8x512xf32> to vector<2x8x256xf32>
    %22 = vector.extract_strided_slice %1 {offsets = [0, 0, 0], sizes = [2, 8, 256], strides = [1, 1, 1]} : vector<2x8x512xf32> to vector<2x8x256xf32>
    %23 = vector.extract_strided_slice %1 {offsets = [0, 0, 256], sizes = [2, 8, 256], strides = [1, 1, 1]} : vector<2x8x512xf32> to vector<2x8x256xf32>
    %24 = arith.mulf %22, %20 : vector<2x8x256xf32>
    %25 = arith.mulf %23, %21 : vector<2x8x256xf32>
    %26 = arith.subf %24, %25 : vector<2x8x256xf32>
    %27 = arith.mulf %22, %21 : vector<2x8x256xf32>
    %28 = arith.mulf %23, %20 : vector<2x8x256xf32>
    %29 = arith.addf %27, %28 : vector<2x8x256xf32>
    %30 = tpu.concatenate %26, %29 in 2 : vector<2x8x256xf32>, vector<2x8x256xf32> -> vector<2x8x512xf32>
    %31 = vector.broadcast %17 : vector<2x1x512xf32> to vector<2x8x512xf32>
    %32 = arith.addf %31, %30 : vector<2x8x512xf32>
    %33 = vector.shape_cast %32 : vector<2x8x512xf32> to vector<16x512xf32>
    %34 = tpu.concatenate %33, %11 in 0 : vector<16x512xf32>, vector<2x512xf32> -> vector<18x512xf32>
    %35 = arith.truncf %34 : vector<18x512xf32> to vector<18x512xbf16>
    %c0_16 = arith.constant 0 : index
    %c0_17 = arith.constant 0 : index
    %36 = vector.load %arg6[%c0_16, %c0_17] : memref<512x512xbf16, #tpu.memory_space<vmem>>, vector<512x512xbf16>
    %cst_18 = arith.constant dense<0.000000e+00> : vector<18x512xf32>
    %37 = tpu.matmul %35, %36, %cst_18 {dimension_numbers = #tpu.dot_dimension_numbers<[1], [0], [0], [1], [0, 0, 1, 1], [], []>} : vector<18x512xbf16>, vector<512x512xbf16>, vector<18x512xf32> -> vector<18x512xf32>
    %38 = vector.extract_strided_slice %37 {offsets = [0, 0], sizes = [16, 512], strides = [1, 1]} : vector<18x512xf32> to vector<16x512xf32>
    %39 = vector.shape_cast %38 : vector<16x512xf32> to vector<2x8x512xf32>
    %c0_19 = arith.constant 0 : index
    %c0_20 = arith.constant 0 : index
    %c0_21 = arith.constant 0 : index
    %40 = vector.load %arg8[%c0_19, %c0_20, %c0_21] : memref<2x8x512xf32, #tpu.memory_space<vmem>>, vector<2x8x512xf32>
    tpu.vector_store %arg8[%c0_19, %c0_20, %c0_21], %39 {strides = array<i32>} : memref<2x8x512xf32, #tpu.memory_space<vmem>>, vector<2x8x512xf32>,
    %41 = vector.extract_strided_slice %37 {offsets = [16, 0], sizes = [2, 512], strides = [1, 1]} : vector<18x512xf32> to vector<2x512xf32>
    %42 = vector.shape_cast %41 : vector<2x512xf32> to vector<2x1x512xf32>
    %43 = vector.broadcast %42 : vector<2x1x512xf32> to vector<2x8x512xf32>
    %44 = arith.subf %16, %43 : vector<2x8x512xf32>
    %c0_22 = arith.constant 0 : index
    %c0_23 = arith.constant 0 : index
    %c0_24 = arith.constant 0 : index
    %45 = vector.load %arg7[%c0_22, %c0_23, %c0_24] : memref<2x8x512xf32, #tpu.memory_space<vmem>>, vector<2x8x512xf32>
    tpu.vector_store %arg7[%c0_22, %c0_23, %c0_24], %44 {strides = array<i32>} : memref<2x8x512xf32, #tpu.memory_space<vmem>>, vector<2x8x512xf32>,
    return
  }
  func.func @transform_0(%arg0: i32) -> (i32, i32, i32) {
    %c0_i32 = arith.constant 0 : i32
    %c0_i32_0 = arith.constant 0 : i32
    %c0_i32_1 = arith.constant 0 : i32
    return %arg0, %c0_i32, %c0_i32_0 : i32, i32, i32
  }
  func.func @transform_1(%arg0: i32) -> (i32, i32, i32) {
    %c0_i32 = arith.constant 0 : i32
    %c0_i32_0 = arith.constant 0 : i32
    %c0_i32_1 = arith.constant 0 : i32
    return %arg0, %c0_i32, %c0_i32_0 : i32, i32, i32
  }
  func.func @transform_2(%arg0: i32) -> (i32, i32, i32) {
    %c0_i32 = arith.constant 0 : i32
    %c0_i32_0 = arith.constant 0 : i32
    %c0_i32_1 = arith.constant 0 : i32
    return %arg0, %c0_i32, %c0_i32_0 : i32, i32, i32
  }
  func.func @transform_3(%arg0: i32) -> (i32, i32) {
    %c0_i32 = arith.constant 0 : i32
    %c0_i32_0 = arith.constant 0 : i32
    %c0_i32_1 = arith.constant 0 : i32
    return %c0_i32, %c0_i32_0 : i32, i32
  }
  func.func @transform_4(%arg0: i32) -> (i32, i32) {
    %c0_i32 = arith.constant 0 : i32
    %c0_i32_0 = arith.constant 0 : i32
    %c0_i32_1 = arith.constant 0 : i32
    return %c0_i32, %c0_i32_0 : i32, i32
  }
  func.func @transform_5(%arg0: i32) -> (i32, i32) {
    %c0_i32 = arith.constant 0 : i32
    %c0_i32_0 = arith.constant 0 : i32
    %c0_i32_1 = arith.constant 0 : i32
    return %c0_i32, %c0_i32_0 : i32, i32
  }
  func.func @transform_6(%arg0: i32) -> (i32, i32, i32) {
    %c0_i32 = arith.constant 0 : i32
    %c0_i32_0 = arith.constant 0 : i32
    %c0_i32_1 = arith.constant 0 : i32
    return %arg0, %c0_i32, %c0_i32_0 : i32, i32, i32
  }
  func.func @transform_7(%arg0: i32) -> (i32, i32, i32) {
    %c0_i32 = arith.constant 0 : i32
    %c0_i32_0 = arith.constant 0 : i32
    %c0_i32_1 = arith.constant 0 : i32
    return %arg0, %c0_i32, %c0_i32_0 : i32, i32, i32
  }
}

</mosaic_0001>

<llo_original>
// kernel: tpu_custom_call.1
$region0: #{tpu_custom_call.1}
  #allocation0 [shape = 'u32[]', space=smem, size = 0x4, offset = 0x4, fixed_abs, tag = 'smem constant byte address 0x4 - core index']
  #allocation1 [shape = 'u32[144,128]{1,0:T(1,128)}', space=vmem, size = 0x12000, scoped, tag = 'internal scratch']
  %s0 = inlined_call_operand.hbm [shape: f32[2,8,512], index: 0, kind: input, shape index: {}]
  %s1 = inlined_call_operand.hbm [shape: f32[2,8,512], index: 1, kind: input, shape index: {}]
  %s2 = inlined_call_operand.hbm [shape: f32[2,8,512], index: 2, kind: input, shape index: {}]
  %s3 = inlined_call_operand.hbm [shape: bf16[512,512], index: 3, kind: input, shape index: {}]
  %s4 = inlined_call_operand.hbm [shape: bf16[512,512], index: 4, kind: input, shape index: {}]
  %s5 = inlined_call_operand.hbm [shape: bf16[512,512], index: 5, kind: input, shape index: {}]
  %s6 = inlined_call_operand.hbm [shape: f32[2,8,512], index: 6, kind: output, shape index: {0}]
  %s7 = inlined_call_operand.hbm [shape: f32[2,8,512], index: 7, kind: output, shape index: {1}]
  %8 = xla_tuple %s6, %s7
  %s9 = sld [smem:[#allocation0]]
  $region66: #{tpu_custom_call.1} parent=0
    _
  %s11 = ssub.s32 1, %s9
  %s12 = scalar_select 0, %s11, %s9
  $region1: #{tpu_custom_call.1} parent=0
    #allocation2 [shape = 'u8[32768]{0}', space=vmem, size = 0x8000, scoped, tag = 'input window, operand 0, single buffered']
    #allocation3 [shape = 's32[1]{0}', space=sflag, size = 0x4, scoped, tag = 'scoped memory for tpu_custom_call.1']
    #allocation4 [shape = 's32[1]{0}', space=sflag, size = 0x4, scoped, tag = 'scoped memory for tpu_custom_call.1']
    #allocation5 [shape = 'u8[32768]{0}', space=vmem, size = 0x8000, scoped, tag = 'input window, operand 1, single buffered']
    #allocation6 [shape = 's32[1]{0}', space=sflag, size = 0x4, scoped, tag = 'scoped memory for tpu_custom_call.1']
    #allocation7 [shape = 'u8[32768]{0}', space=vmem, size = 0x8000, scoped, tag = 'input window, operand 2, single buffered']
    #allocation8 [shape = 'u8[524288]{0}', space=vmem, size = 0x80000, scoped, tag = 'input window, operand 3, single buffered']
    #allocation9 [shape = 's32[1]{0}', space=sflag, size = 0x4, scoped, tag = 'scoped memory for tpu_custom_call.1']
    #allocation10 [shape = 'u8[524288]{0}', space=vmem, size = 0x80000, scoped, tag = 'input window, operand 4, single buffered']
    #allocation11 [shape = 'u8[524288]{0}', space=vmem, size = 0x80000, scoped, tag = 'input window, operand 5, single buffered']
    #allocation12 [shape = 's32[1]{0}', space=sflag, size = 0x4, scoped, tag = 'scoped memory for tpu_custom_call.1']
    #allocation13 [shape = 'u8[32768]{0}', space=vmem, size = 0x8000, scoped, tag = 'output window, operand 0, single buffered']
    #allocation14 [shape = 'u8[32768]{0}', space=vmem, size = 0x8000, scoped, tag = 'output window, operand 1, single buffered']
    #allocation15 [shape = 's32[1]{0}', space=sflag, size = 0x4, scoped, tag = 'scoped memory for tpu_custom_call.1']
    %13 = vsyncpa [#allocation3], 0
    %14 = vsyncpa [#allocation6], 0
    %15 = vsyncpa [#allocation9], 0
    %16 = vsyncpa [#allocation12], 0
    %17 = vsyncpa [#allocation4], 0
    %18 = vsyncpa [#allocation15], 0
    // Predicated region
    $region2: #{tpu_custom_call.1} parent=1 // pred_check
      _
    $region3: #{tpu_custom_call.1} parent=1 // pred_check_branch
      %20 = sbr.rel (0) target = $region5
    $region4: #{tpu_custom_call.1} parent=1 // pred_region
      %s22 = ssub.s32 1024, 1024
      %23 = vsyncadd [#allocation3], %s22
      %s24 = sshll.u32 [#allocation2], 4
      %s25 = int_to_ptr.vmem [resolvable:$true] %s24
      %30 = dma.hbm_to_vmem [thread:$0]  %s0, 1024, %s25, [#allocation3], 512, 512, 32
    $region5: #{tpu_custom_call.1} parent=1 // pred_fallthru
      _
    // Predicated region
    $region6: #{tpu_custom_call.1} parent=1 // pred_check
      _
    $region7: #{tpu_custom_call.1} parent=1 // pred_check_branch
      %32 = sbr.rel (0) target = $region9
    $region8: #{tpu_custom_call.1} parent=1 // pred_region
      %s34 = ssub.s32 1024, 1024
      %35 = vsyncadd [#allocation6], %s34
      %s36 = sshll.u32 [#allocation5], 4
      %s37 = int_to_ptr.vmem [resolvable:$true] %s36
      %42 = dma.hbm_to_vmem [thread:$0]  %s1, 1024, %s37, [#allocation6], 512, 512, 32
    $region9: #{tpu_custom_call.1} parent=1 // pred_fallthru
      _
    // Predicated region
    $region10: #{tpu_custom_call.1} parent=1 // pred_check
      _
    $region11: #{tpu_custom_call.1} parent=1 // pred_check_branch
      %44 = sbr.rel (0) target = $region13
    $region12: #{tpu_custom_call.1} parent=1 // pred_region
      %s46 = ssub.s32 1024, 1024
      %47 = vsyncadd [#allocation6], %s46
      %s48 = sshll.u32 [#allocation7], 4
      %s49 = int_to_ptr.vmem [resolvable:$true] %s48
      %54 = dma.hbm_to_vmem [thread:$0]  %s2, 1024, %s49, [#allocation6], 512, 512, 32
    $region13: #{tpu_custom_call.1} parent=1 // pred_fallthru
      _
    // Predicated region
    $region14: #{tpu_custom_call.1} parent=1 // pred_check
      _
    $region15: #{tpu_custom_call.1} parent=1 // pred_check_branch
      %56 = sbr.rel (0) target = $region17
    $region16: #{tpu_custom_call.1} parent=1 // pred_region
      %s58 = ssub.s32 16384, 16384
      %59 = vsyncadd [#allocation9], %s58
      %s60 = sshll.u32 [#allocation8], 4
      %s61 = int_to_ptr.vmem [resolvable:$true] %s60
      %66 = dma.hbm_to_vmem [thread:$0]  %s3, 16384, %s61, [#allocation9], 256, 256, 16
    $region17: #{tpu_custom_call.1} parent=1 // pred_fallthru
      _
    // Predicated region
    $region18: #{tpu_custom_call.1} parent=1 // pred_check
      _
    $region19: #{tpu_custom_call.1} parent=1 // pred_check_branch
      %68 = sbr.rel (0) target = $region21
    $region20: #{tpu_custom_call.1} parent=1 // pred_region
      %s70 = ssub.s32 16384, 16384
      %71 = vsyncadd [#allocation9], %s70
      %s72 = sshll.u32 [#allocation10], 4
      %s73 = int_to_ptr.vmem [resolvable:$true] %s72
      %78 = dma.hbm_to_vmem [thread:$0]  %s4, 16384, %s73, [#allocation9], 256, 256, 16
    $region21: #{tpu_custom_call.1} parent=1 // pred_fallthru
      _
    // Predicated region
    $region22: #{tpu_custom_call.1} parent=1 // pred_check
      _
    $region23: #{tpu_custom_call.1} parent=1 // pred_check_branch
      %80 = sbr.rel (0) target = $region25
    $region24: #{tpu_custom_call.1} parent=1 // pred_region
      %s82 = ssub.s32 16384, 16384
      %83 = vsyncadd [#allocation12], %s82
      %s84 = sshll.u32 [#allocation11], 4
      %s85 = int_to_ptr.vmem [resolvable:$true] %s84
      %90 = dma.hbm_to_vmem [thread:$0]  %s5, 16384, %s85, [#allocation12], 256, 256, 16
    $region25: #{tpu_custom_call.1} parent=1 // pred_fallthru
      _
    // Predicated region
    $region26: #{tpu_custom_call.1} parent=1 // pred_check
      _
    $region27: #{tpu_custom_call.1} parent=1 // pred_check_branch
      %92 = sbr.rel (0) target = $region29
    $region28: #{tpu_custom_call.1} parent=1 // pred_region
      %93 = dma.done [#allocation3], 1024
    $region29: #{tpu_custom_call.1} parent=1 // pred_fallthru
      _
    // Predicated region
    $region30: #{tpu_custom_call.1} parent=1 // pred_check
      _
    $region31: #{tpu_custom_call.1} parent=1 // pred_check_branch
      %95 = sbr.rel (0) target = $region33
    $region32: #{tpu_custom_call.1} parent=1 // pred_region
      %96 = dma.done [#allocation6], 1024
    $region33: #{tpu_custom_call.1} parent=1 // pred_fallthru
      _
    // Predicated region
    $region34: #{tpu_custom_call.1} parent=1 // pred_check
      _
    $region35: #{tpu_custom_call.1} parent=1 // pred_check_branch
      %98 = sbr.rel (0) target = $region37
    $region36: #{tpu_custom_call.1} parent=1 // pred_region
      %99 = dma.done [#allocation6], 1024
    $region37: #{tpu_custom_call.1} parent=1 // pred_fallthru
      _
    // Predicated region
    $region38: #{tpu_custom_call.1} parent=1 // pred_check
      _
    $region39: #{tpu_custom_call.1} parent=1 // pred_check_branch
      %101 = sbr.rel (0) target = $region41
    $region40: #{tpu_custom_call.1} parent=1 // pred_region
      %102 = dma.done [#allocation9], 16384
    $region41: #{tpu_custom_call.1} parent=1 // pred_fallthru
      _
    // Predicated region
    $region42: #{tpu_custom_call.1} parent=1 // pred_check
      _
    $region43: #{tpu_custom_call.1} parent=1 // pred_check_branch
      %104 = sbr.rel (0) target = $region45
    $region44: #{tpu_custom_call.1} parent=1 // pred_region
      %105 = dma.done [#allocation9], 16384
    $region45: #{tpu_custom_call.1} parent=1 // pred_fallthru
      _
    // Predicated region
    $region46: #{tpu_custom_call.1} parent=1 // pred_check
      _
    $region47: #{tpu_custom_call.1} parent=1 // pred_check_branch
      %107 = sbr.rel (0) target = $region49
    $region48: #{tpu_custom_call.1} parent=1 // pred_region
      %108 = dma.done [#allocation12], 16384
    $region49: #{tpu_custom_call.1} parent=1 // pred_fallthru
      _
    %v109 = vld [vmem:[#allocation2] sm:$0xff]
    %v110 = vld [vmem:[#allocation2 + $0x8] sm:$0xff]
    %v111 = vld [vmem:[#allocation2 + $0x10] sm:$0xff]
    %v112 = vld [vmem:[#allocation2 + $0x18] sm:$0xff]
    %v113 = vld [vmem:[#allocation2 + $0x20] sm:$0xff]
    %v114 = vld [vmem:[#allocation2 + $0x28] sm:$0xff]
    %v115 = vld [vmem:[#allocation2 + $0x30] sm:$0xff]
    %v116 = vld [vmem:[#allocation2 + $0x38] sm:$0xff]
    %v117 = vld [vmem:[#allocation7] sm:$0xff]
    %v118 = vld [vmem:[#allocation7 + $0x8] sm:$0xff]
    %v119 = vld [vmem:[#allocation7 + $0x10] sm:$0xff]
    %v120 = vld [vmem:[#allocation7 + $0x18] sm:$0xff]
    %v121 = vld [vmem:[#allocation7 + $0x20] sm:$0xff]
    %v122 = vld [vmem:[#allocation7 + $0x28] sm:$0xff]
    %v123 = vld [vmem:[#allocation7 + $0x30] sm:$0xff]
    %v124 = vld [vmem:[#allocation7 + $0x38] sm:$0xff]
    %v125 = vld [vmem:[#allocation5] sm:$0xff]
    %v126 = vld [vmem:[#allocation5 + $0x8] sm:$0xff]
    %v127 = vld [vmem:[#allocation5 + $0x10] sm:$0xff]
    %v128 = vld [vmem:[#allocation5 + $0x18] sm:$0xff]
    %v129 = vld [vmem:[#allocation5 + $0x20] sm:$0xff]
    %v130 = vld [vmem:[#allocation5 + $0x28] sm:$0xff]
    %v131 = vld [vmem:[#allocation5 + $0x30] sm:$0xff]
    %v132 = vld [vmem:[#allocation5 + $0x38] sm:$0xff]
    %v133 = vrot.slane %v109, 4
    %v134 = vadd.f32 %v109, %v133
    %v135 = vrot.slane %v134, 2
    %v136 = vadd.f32 %v134, %v135
    %v137 = vrot.slane %v136, 1
    %v138 = vadd.f32 %v136, %v137
    %v139 = vrot.slane %v110, 4
    %v140 = vadd.f32 %v110, %v139
    %v141 = vrot.slane %v140, 2
    %v142 = vadd.f32 %v140, %v141
    %v143 = vrot.slane %v142, 1
    %v144 = vadd.f32 %v142, %v143
    %v145 = vrot.slane %v111, 4
    %v146 = vadd.f32 %v111, %v145
    %v147 = vrot.slane %v146, 2
    %v148 = vadd.f32 %v146, %v147
    %v149 = vrot.slane %v148, 1
    %v150 = vadd.f32 %v148, %v149
    %v151 = vrot.slane %v112, 4
    %v152 = vadd.f32 %v112, %v151
    %v153 = vrot.slane %v152, 2
    %v154 = vadd.f32 %v152, %v153
    %v155 = vrot.slane %v154, 1
    %v156 = vadd.f32 %v154, %v155
    %v157 = vrot.slane %v113, 4
    %v158 = vadd.f32 %v113, %v157
    %v159 = vrot.slane %v158, 2
    %v160 = vadd.f32 %v158, %v159
    %v161 = vrot.slane %v160, 1
    %v162 = vadd.f32 %v160, %v161
    %v163 = vrot.slane %v114, 4
    %v164 = vadd.f32 %v114, %v163
    %v165 = vrot.slane %v164, 2
    %v166 = vadd.f32 %v164, %v165
    %v167 = vrot.slane %v166, 1
    %v168 = vadd.f32 %v166, %v167
    %v169 = vrot.slane %v115, 4
    %v170 = vadd.f32 %v115, %v169
    %v171 = vrot.slane %v170, 2
    %v172 = vadd.f32 %v170, %v171
    %v173 = vrot.slane %v172, 1
    %v174 = vadd.f32 %v172, %v173
    %v175 = vrot.slane %v116, 4
    %v176 = vadd.f32 %v116, %v175
    %v177 = vrot.slane %v176, 2
    %v178 = vadd.f32 %v176, %v177
    %v179 = vrot.slane %v178, 1
    %v180 = vadd.f32 %v178, %v179
    %v181 = vrot.slane %v117, 4
    %v182 = vadd.f32 %v117, %v181
    %v183 = vrot.slane %v182, 2
    %v184 = vadd.f32 %v182, %v183
    %v185 = vrot.slane %v184, 1
    %v186 = vadd.f32 %v184, %v185
    %v187 = vrot.slane %v118, 4
    %v188 = vadd.f32 %v118, %v187
    %v189 = vrot.slane %v188, 2
    %v190 = vadd.f32 %v188, %v189
    %v191 = vrot.slane %v190, 1
    %v192 = vadd.f32 %v190, %v191
    %v193 = vrot.slane %v119, 4
    %v194 = vadd.f32 %v119, %v193
    %v195 = vrot.slane %v194, 2
    %v196 = vadd.f32 %v194, %v195
    %v197 = vrot.slane %v196, 1
    %v198 = vadd.f32 %v196, %v197
    %v199 = vrot.slane %v120, 4
    %v200 = vadd.f32 %v120, %v199
    %v201 = vrot.slane %v200, 2
    %v202 = vadd.f32 %v200, %v201
    %v203 = vrot.slane %v202, 1
    %v204 = vadd.f32 %v202, %v203
    %v205 = vrot.slane %v121, 4
    %v206 = vadd.f32 %v121, %v205
    %v207 = vrot.slane %v206, 2
    %v208 = vadd.f32 %v206, %v207
    %v209 = vrot.slane %v208, 1
    %v210 = vadd.f32 %v208, %v209
    %v211 = vrot.slane %v122, 4
    %v212 = vadd.f32 %v122, %v211
    %v213 = vrot.slane %v212, 2
    %v214 = vadd.f32 %v212, %v213
    %v215 = vrot.slane %v214, 1
    %v216 = vadd.f32 %v214, %v215
    %v217 = vrot.slane %v123, 4
    %v218 = vadd.f32 %v123, %v217
    %v219 = vrot.slane %v218, 2
    %v220 = vadd.f32 %v218, %v219
    %v221 = vrot.slane %v220, 1
    %v222 = vadd.f32 %v220, %v221
    %v223 = vrot.slane %v124, 4
    %v224 = vadd.f32 %v124, %v223
    %v225 = vrot.slane %v224, 2
    %v226 = vadd.f32 %v224, %v225
    %v227 = vrot.slane %v226, 1
    %v228 = vadd.f32 %v226, %v227
    %v229 = vpack.c.bf16 %v138, %v138
    %v230 = vpack.c.bf16 %v144, %v144
    %v231 = vpack.c.bf16 %v150, %v150
    %v232 = vpack.c.bf16 %v156, %v156
    %v233 = vpack.c.bf16 %v162, %v162
    %v234 = vpack.c.bf16 %v168, %v168
    %v235 = vpack.c.bf16 %v174, %v174
    %v236 = vpack.c.bf16 %v180, %v180
    %v237 = vld [vmem:[#allocation8] sm:$0xff]
    %v238 = vld [vmem:[#allocation8 + $0x8] sm:$0xff]
    %v239 = vld [vmem:[#allocation8 + $0x10] sm:$0xff]
    %v240 = vld [vmem:[#allocation8 + $0x18] sm:$0xff]
    %v241 = vld [vmem:[#allocation8 + $0x20] sm:$0xff]
    %v242 = vld [vmem:[#allocation8 + $0x28] sm:$0xff]
    %v243 = vld [vmem:[#allocation8 + $0x30] sm:$0xff]
    %v244 = vld [vmem:[#allocation8 + $0x38] sm:$0xff]
    %v245 = vld [vmem:[#allocation8 + $0x40] sm:$0xff]
    %v246 = vld [vmem:[#allocation8 + $0x48] sm:$0xff]
    %v247 = vld [vmem:[#allocation8 + $0x50] sm:$0xff]
    %v248 = vld [vmem:[#allocation8 + $0x58] sm:$0xff]
    %v249 = vld [vmem:[#allocation8 + $0x60] sm:$0xff]
    %v250 = vld [vmem:[#allocation8 + $0x68] sm:$0xff]
    %v251 = vld [vmem:[#allocation8 + $0x70] sm:$0xff]
    %v252 = vld [vmem:[#allocation8 + $0x78] sm:$0xff]
    %v253 = vld [vmem:[#allocation8 + $0x80] sm:$0xff]
    %v254 = vld [vmem:[#allocation8 + $0x88] sm:$0xff]
    %v255 = vld [vmem:[#allocation8 + $0x90] sm:$0xff]
    %v256 = vld [vmem:[#allocation8 + $0x98] sm:$0xff]
    %v257 = vld [vmem:[#allocation8 + $0xa0] sm:$0xff]
    %v258 = vld [vmem:[#allocation8 + $0xa8] sm:$0xff]
    %v259 = vld [vmem:[#allocation8 + $0xb0] sm:$0xff]
    %v260 = vld [vmem:[#allocation8 + $0xb8] sm:$0xff]
    %v261 = vld [vmem:[#allocation8 + $0xc0] sm:$0xff]
    %v262 = vld [vmem:[#allocation8 + $0xc8] sm:$0xff]
    %v263 = vld [vmem:[#allocation8 + $0xd0] sm:$0xff]
    %v264 = vld [vmem:[#allocation8 + $0xd8] sm:$0xff]
    %v265 = vld [vmem:[#allocation8 + $0xe0] sm:$0xff]
    %v266 = vld [vmem:[#allocation8 + $0xe8] sm:$0xff]
    %v267 = vld [vmem:[#allocation8 + $0xf0] sm:$0xff]
    %v268 = vld [vmem:[#allocation8 + $0xf8] sm:$0xff]
    %v269 = vld [vmem:[#allocation8 + $0x100] sm:$0xff]
    %v270 = vld [vmem:[#allocation8 + $0x108] sm:$0xff]
    %v271 = vld [vmem:[#allocation8 + $0x110] sm:$0xff]
    %v272 = vld [vmem:[#allocation8 + $0x118] sm:$0xff]
    %v273 = vld [vmem:[#allocation8 + $0x120] sm:$0xff]
    %v274 = vld [vmem:[#allocation8 + $0x128] sm:$0xff]
    %v275 = vld [vmem:[#allocation8 + $0x130] sm:$0xff]
    %v276 = vld [vmem:[#allocation8 + $0x138] sm:$0xff]
    %v277 = vld [vmem:[#allocation8 + $0x140] sm:$0xff]
    %v278 = vld [vmem:[#allocation8 + $0x148] sm:$0xff]
    %v279 = vld [vmem:[#allocation8 + $0x150] sm:$0xff]
    %v280 = vld [vmem:[#allocation8 + $0x158] sm:$0xff]
    %v281 = vld [vmem:[#allocation8 + $0x160] sm:$0xff]
    %v282 = vld [vmem:[#allocation8 + $0x168] sm:$0xff]
    %v283 = vld [vmem:[#allocation8 + $0x170] sm:$0xff]
    %v284 = vld [vmem:[#allocation8 + $0x178] sm:$0xff]
    %v285 = vld [vmem:[#allocation8 + $0x180] sm:$0xff]
    %v286 = vld [vmem:[#allocation8 + $0x188] sm:$0xff]
    %v287 = vld [vmem:[#allocation8 + $0x190] sm:$0xff]
    %v288 = vld [vmem:[#allocation8 + $0x198] sm:$0xff]
    %v289 = vld [vmem:[#allocation8 + $0x1a0] sm:$0xff]
    %v290 = vld [vmem:[#allocation8 + $0x1a8] sm:$0xff]
    %v291 = vld [vmem:[#allocation8 + $0x1b0] sm:$0xff]
    %v292 = vld [vmem:[#allocation8 + $0x1b8] sm:$0xff]
    %v293 = vld [vmem:[#allocation8 + $0x1c0] sm:$0xff]
    %v294 = vld [vmem:[#allocation8 + $0x1c8] sm:$0xff]
    %v295 = vld [vmem:[#allocation8 + $0x1d0] sm:$0xff]
    %v296 = vld [vmem:[#allocation8 + $0x1d8] sm:$0xff]
    %v297 = vld [vmem:[#allocation8 + $0x1e0] sm:$0xff]
    %v298 = vld [vmem:[#allocation8 + $0x1e8] sm:$0xff]
    %v299 = vld [vmem:[#allocation8 + $0x1f0] sm:$0xff]
    %v300 = vld [vmem:[#allocation8 + $0x1f8] sm:$0xff]
    %v301 = vld [vmem:[#allocation8 + $0x200] sm:$0xff]
    %v302 = vld [vmem:[#allocation8 + $0x208] sm:$0xff]
    %v303 = vld [vmem:[#allocation8 + $0x210] sm:$0xff]
    %v304 = vld [vmem:[#allocation8 + $0x218] sm:$0xff]
    %v305 = vld [vmem:[#allocation8 + $0x220] sm:$0xff]
    %v306 = vld [vmem:[#allocation8 + $0x228] sm:$0xff]
    %v307 = vld [vmem:[#allocation8 + $0x230] sm:$0xff]
    %v308 = vld [vmem:[#allocation8 + $0x238] sm:$0xff]
    %v309 = vld [vmem:[#allocation8 + $0x240] sm:$0xff]
    %v310 = vld [vmem:[#allocation8 + $0x248] sm:$0xff]
    %v311 = vld [vmem:[#allocation8 + $0x250] sm:$0xff]
    %v312 = vld [vmem:[#allocation8 + $0x258] sm:$0xff]
    %v313 = vld [vmem:[#allocation8 + $0x260] sm:$0xff]
    %v314 = vld [vmem:[#allocation8 + $0x268] sm:$0xff]
    %v315 = vld [vmem:[#allocation8 + $0x270] sm:$0xff]
    %v316 = vld [vmem:[#allocation8 + $0x278] sm:$0xff]
    %v317 = vld [vmem:[#allocation8 + $0x280] sm:$0xff]
    %v318 = vld [vmem:[#allocation8 + $0x288] sm:$0xff]
    %v319 = vld [vmem:[#allocation8 + $0x290] sm:$0xff]
    %v320 = vld [vmem:[#allocation8 + $0x298] sm:$0xff]
    %v321 = vld [vmem:[#allocation8 + $0x2a0] sm:$0xff]
    %v322 = vld [vmem:[#allocation8 + $0x2a8] sm:$0xff]
    %v323 = vld [vmem:[#allocation8 + $0x2b0] sm:$0xff]
    %v324 = vld [vmem:[#allocation8 + $0x2b8] sm:$0xff]
    %v325 = vld [vmem:[#allocation8 + $0x2c0] sm:$0xff]
    %v326 = vld [vmem:[#allocation8 + $0x2c8] sm:$0xff]
    %v327 = vld [vmem:[#allocation8 + $0x2d0] sm:$0xff]
    %v328 = vld [vmem:[#allocation8 + $0x2d8] sm:$0xff]
    %v329 = vld [vmem:[#allocation8 + $0x2e0] sm:$0xff]
    %v330 = vld [vmem:[#allocation8 + $0x2e8] sm:$0xff]
    %v331 = vld [vmem:[#allocation8 + $0x2f0] sm:$0xff]
    %v332 = vld [vmem:[#allocation8 + $0x2f8] sm:$0xff]
    %v333 = vld [vmem:[#allocation8 + $0x300] sm:$0xff]
    %v334 = vld [vmem:[#allocation8 + $0x308] sm:$0xff]
    %v335 = vld [vmem:[#allocation8 + $0x310] sm:$0xff]
    %v336 = vld [vmem:[#allocation8 + $0x318] sm:$0xff]
    %v337 = vld [vmem:[#allocation8 + $0x320] sm:$0xff]
    %v338 = vld [vmem:[#allocation8 + $0x328] sm:$0xff]
    %v339 = vld [vmem:[#allocation8 + $0x330] sm:$0xff]
    %v340 = vld [vmem:[#allocation8 + $0x338] sm:$0xff]
    %v341 = vld [vmem:[#allocation8 + $0x340] sm:$0xff]
    %v342 = vld [vmem:[#allocation8 + $0x348] sm:$0xff]
    %v343 = vld [vmem:[#allocation8 + $0x350] sm:$0xff]
    %v344 = vld [vmem:[#allocation8 + $0x358] sm:$0xff]
    %v345 = vld [vmem:[#allocation8 + $0x360] sm:$0xff]
    %v346 = vld [vmem:[#allocation8 + $0x368] sm:$0xff]
    %v347 = vld [vmem:[#allocation8 + $0x370] sm:$0xff]
    %v348 = vld [vmem:[#allocation8 + $0x378] sm:$0xff]
    %v349 = vld [vmem:[#allocation8 + $0x380] sm:$0xff]
    %v350 = vld [vmem:[#allocation8 + $0x388] sm:$0xff]
    %v351 = vld [vmem:[#allocation8 + $0x390] sm:$0xff]
    %v352 = vld [vmem:[#allocation8 + $0x398] sm:$0xff]
    %v353 = vld [vmem:[#allocation8 + $0x3a0] sm:$0xff]
    %v354 = vld [vmem:[#allocation8 + $0x3a8] sm:$0xff]
    %v355 = vld [vmem:[#allocation8 + $0x3b0] sm:$0xff]
    %v356 = vld [vmem:[#allocation8 + $0x3b8] sm:$0xff]
    %v357 = vld [vmem:[#allocation8 + $0x3c0] sm:$0xff]
    %v358 = vld [vmem:[#allocation8 + $0x3c8] sm:$0xff]
    %v359 = vld [vmem:[#allocation8 + $0x3d0] sm:$0xff]
    %v360 = vld [vmem:[#allocation8 + $0x3d8] sm:$0xff]
    %v361 = vld [vmem:[#allocation8 + $0x3e0] sm:$0xff]
    %v362 = vld [vmem:[#allocation8 + $0x3e8] sm:$0xff]
    %v363 = vld [vmem:[#allocation8 + $0x3f0] sm:$0xff]
    %v364 = vld [vmem:[#allocation8 + $0x3f8] sm:$0xff]
    %v373 = vunpack.c.l.b16 %v229
    %v374 = vunpack.c.l.b16 %v230
    %v375 = vunpack.c.l.b16 %v231
    %v376 = vunpack.c.l.b16 %v232
    %v377 = vunpack.c.l.b16 %v233
    %v378 = vunpack.c.l.b16 %v234
    %v379 = vunpack.c.l.b16 %v235
    %v380 = vunpack.c.l.b16 %v236
    %vm381 = vcmask 1041409
    %v382 = vsel %vm381, %v377, %v373
    %v383 = vsel %vm381, %v378, %v374
    %v384 = vsel %vm381, %v379, %v375
    %v385 = vsel %vm381, %v380, %v376
    %v386 = vpack.c.b16 %v382, %v382
    %v387 = vpack.c.b16 %v383, %v383
    %v388 = vpack.c.b16 %v384, %v384
    %v389 = vpack.c.b16 %v385, %v385
    %v522 = vunpack.c.l.b16 %v237
    %v523 = vunpack.c.h.b16 %v237
    %v524 = vunpack.c.l.b16 %v238
    %v525 = vunpack.c.h.b16 %v238
    %v526 = vunpack.c.l.b16 %v239
    %v527 = vunpack.c.h.b16 %v239
    %v528 = vunpack.c.l.b16 %v240
    %v529 = vunpack.c.h.b16 %v240
    %v530 = vunpack.c.l.b16 %v241
    %v531 = vunpack.c.h.b16 %v241
    %v532 = vunpack.c.l.b16 %v242
    %v533 = vunpack.c.h.b16 %v242
    %v534 = vunpack.c.l.b16 %v243
    %v535 = vunpack.c.h.b16 %v243
    %v536 = vunpack.c.l.b16 %v244
    %v537 = vunpack.c.h.b16 %v244
    %v538 = vunpack.c.l.b16 %v245
    %v539 = vunpack.c.h.b16 %v245
    %v540 = vunpack.c.l.b16 %v246
    %v541 = vunpack.c.h.b16 %v246
    %v542 = vunpack.c.l.b16 %v247
    %v543 = vunpack.c.h.b16 %v247
    %v544 = vunpack.c.l.b16 %v248
    %v545 = vunpack.c.h.b16 %v248
    %v546 = vunpack.c.l.b16 %v249
    %v547 = vunpack.c.h.b16 %v249
    %v548 = vunpack.c.l.b16 %v250
    %v549 = vunpack.c.h.b16 %v250
    %v550 = vunpack.c.l.b16 %v251
    %v551 = vunpack.c.h.b16 %v251
    %v552 = vunpack.c.l.b16 %v252
    %v553 = vunpack.c.h.b16 %v252
    %v554 = vunpack.c.l.b16 %v253
    %v555 = vunpack.c.h.b16 %v253
    %v556 = vunpack.c.l.b16 %v254
    %v557 = vunpack.c.h.b16 %v254
    %v558 = vunpack.c.l.b16 %v255
    %v559 = vunpack.c.h.b16 %v255
    %v560 = vunpack.c.l.b16 %v256
    %v561 = vunpack.c.h.b16 %v256
    %v562 = vunpack.c.l.b16 %v257
    %v563 = vunpack.c.h.b16 %v257
    %v564 = vunpack.c.l.b16 %v258
    %v565 = vunpack.c.h.b16 %v258
    %v566 = vunpack.c.l.b16 %v259
    %v567 = vunpack.c.h.b16 %v259
    %v568 = vunpack.c.l.b16 %v260
    %v569 = vunpack.c.h.b16 %v260
    %v570 = vunpack.c.l.b16 %v261
    %v571 = vunpack.c.h.b16 %v261
    %v572 = vunpack.c.l.b16 %v262
    %v573 = vunpack.c.h.b16 %v262
    %v574 = vunpack.c.l.b16 %v263
    %v575 = vunpack.c.h.b16 %v263
    %v576 = vunpack.c.l.b16 %v264
    %v577 = vunpack.c.h.b16 %v264
    %v578 = vunpack.c.l.b16 %v265
    %v579 = vunpack.c.h.b16 %v265
    %v580 = vunpack.c.l.b16 %v266
    %v581 = vunpack.c.h.b16 %v266
    %v582 = vunpack.c.l.b16 %v267
    %v583 = vunpack.c.h.b16 %v267
    %v584 = vunpack.c.l.b16 %v268
    %v585 = vunpack.c.h.b16 %v268
    %v586 = vunpack.c.l.b16 %v269
    %v587 = vunpack.c.h.b16 %v269
    %v588 = vunpack.c.l.b16 %v270
    %v589 = vunpack.c.h.b16 %v270
    %v590 = vunpack.c.l.b16 %v271
    %v591 = vunpack.c.h.b16 %v271
    %v592 = vunpack.c.l.b16 %v272
    %v593 = vunpack.c.h.b16 %v272
    %v594 = vunpack.c.l.b16 %v273
    %v595 = vunpack.c.h.b16 %v273
    %v596 = vunpack.c.l.b16 %v274
    %v597 = vunpack.c.h.b16 %v274
    %v598 = vunpack.c.l.b16 %v275
    %v599 = vunpack.c.h.b16 %v275
    %v600 = vunpack.c.l.b16 %v276
    %v601 = vunpack.c.h.b16 %v276
    %v602 = vunpack.c.l.b16 %v277
    %v603 = vunpack.c.h.b16 %v277
    %v604 = vunpack.c.l.b16 %v278
    %v605 = vunpack.c.h.b16 %v278
    %v606 = vunpack.c.l.b16 %v279
    %v607 = vunpack.c.h.b16 %v279
    %v608 = vunpack.c.l.b16 %v280
    %v609 = vunpack.c.h.b16 %v280
    %v610 = vunpack.c.l.b16 %v281
    %v611 = vunpack.c.h.b16 %v281
    %v612 = vunpack.c.l.b16 %v282
    %v613 = vunpack.c.h.b16 %v282
    %v614 = vunpack.c.l.b16 %v283
    %v615 = vunpack.c.h.b16 %v283
    %v616 = vunpack.c.l.b16 %v284
    %v617 = vunpack.c.h.b16 %v284
    %v618 = vunpack.c.l.b16 %v285
    %v619 = vunpack.c.h.b16 %v285
    %v620 = vunpack.c.l.b16 %v286
    %v621 = vunpack.c.h.b16 %v286
    %v622 = vunpack.c.l.b16 %v287
    %v623 = vunpack.c.h.b16 %v287
    %v624 = vunpack.c.l.b16 %v288
    %v625 = vunpack.c.h.b16 %v288
    %v626 = vunpack.c.l.b16 %v289
    %v627 = vunpack.c.h.b16 %v289
    %v628 = vunpack.c.l.b16 %v290
    %v629 = vunpack.c.h.b16 %v290
    %v630 = vunpack.c.l.b16 %v291
    %v631 = vunpack.c.h.b16 %v291
    %v632 = vunpack.c.l.b16 %v292
    %v633 = vunpack.c.h.b16 %v292
    %v634 = vunpack.c.l.b16 %v293
    %v635 = vunpack.c.h.b16 %v293
    %v636 = vunpack.c.l.b16 %v294
    %v637 = vunpack.c.h.b16 %v294
    %v638 = vunpack.c.l.b16 %v295
    %v639 = vunpack.c.h.b16 %v295
    %v640 = vunpack.c.l.b16 %v296
    %v641 = vunpack.c.h.b16 %v296
    %v642 = vunpack.c.l.b16 %v297
    %v643 = vunpack.c.h.b16 %v297
    %v644 = vunpack.c.l.b16 %v298
    %v645 = vunpack.c.h.b16 %v298
    %v646 = vunpack.c.l.b16 %v299
    %v647 = vunpack.c.h.b16 %v299
    %v648 = vunpack.c.l.b16 %v300
    %v649 = vunpack.c.h.b16 %v300
    %v650 = vunpack.c.l.b16 %v301
    %v651 = vunpack.c.h.b16 %v301
    %v652 = vunpack.c.l.b16 %v302
    %v653 = vunpack.c.h.b16 %v302
    %v654 = vunpack.c.l.b16 %v303
    %v655 = vunpack.c.h.b16 %v303
    %v656 = vunpack.c.l.b16 %v304
    %v657 = vunpack.c.h.b16 %v304
    %v658 = vunpack.c.l.b16 %v305
    %v659 = vunpack.c.h.b16 %v305
    %v660 = vunpack.c.l.b16 %v306
    %v661 = vunpack.c.h.b16 %v306
    %v662 = vunpack.c.l.b16 %v307
    %v663 = vunpack.c.h.b16 %v307
    %v664 = vunpack.c.l.b16 %v308
    %v665 = vunpack.c.h.b16 %v308
    %v666 = vunpack.c.l.b16 %v309
    %v667 = vunpack.c.h.b16 %v309
    %v668 = vunpack.c.l.b16 %v310
    %v669 = vunpack.c.h.b16 %v310
    %v670 = vunpack.c.l.b16 %v311
    %v671 = vunpack.c.h.b16 %v311
    %v672 = vunpack.c.l.b16 %v312
    %v673 = vunpack.c.h.b16 %v312
    %v674 = vunpack.c.l.b16 %v313
    %v675 = vunpack.c.h.b16 %v313
    %v676 = vunpack.c.l.b16 %v314
    %v677 = vunpack.c.h.b16 %v314
    %v678 = vunpack.c.l.b16 %v315
    %v679 = vunpack.c.h.b16 %v315
    %v680 = vunpack.c.l.b16 %v316
    %v681 = vunpack.c.h.b16 %v316
    %v682 = vunpack.c.l.b16 %v317
    %v683 = vunpack.c.h.b16 %v317
    %v684 = vunpack.c.l.b16 %v318
    %v685 = vunpack.c.h.b16 %v318
    %v686 = vunpack.c.l.b16 %v319
    %v687 = vunpack.c.h.b16 %v319
    %v688 = vunpack.c.l.b16 %v320
    %v689 = vunpack.c.h.b16 %v320
    %v690 = vunpack.c.l.b16 %v321
    %v691 = vunpack.c.h.b16 %v321
    %v692 = vunpack.c.l.b16 %v322
    %v693 = vunpack.c.h.b16 %v322
    %v694 = vunpack.c.l.b16 %v323
    %v695 = vunpack.c.h.b16 %v323
    %v696 = vunpack.c.l.b16 %v324
    %v697 = vunpack.c.h.b16 %v324
    %v698 = vunpack.c.l.b16 %v325
    %v699 = vunpack.c.h.b16 %v325
    %v700 = vunpack.c.l.b16 %v326
    %v701 = vunpack.c.h.b16 %v326
    %v702 = vunpack.c.l.b16 %v327
    %v703 = vunpack.c.h.b16 %v327
    %v704 = vunpack.c.l.b16 %v328
    %v705 = vunpack.c.h.b16 %v328
    %v706 = vunpack.c.l.b16 %v329
    %v707 = vunpack.c.h.b16 %v329
    %v708 = vunpack.c.l.b16 %v330
    %v709 = vunpack.c.h.b16 %v330
    %v710 = vunpack.c.l.b16 %v331
    %v711 = vunpack.c.h.b16 %v331
    %v712 = vunpack.c.l.b16 %v332
    %v713 = vunpack.c.h.b16 %v332
    %v714 = vunpack.c.l.b16 %v333
    %v715 = vunpack.c.h.b16 %v333
    %v716 = vunpack.c.l.b16 %v334
    %v717 = vunpack.c.h.b16 %v334
    %v718 = vunpack.c.l.b16 %v335
    %v719 = vunpack.c.h.b16 %v335
    %v720 = vunpack.c.l.b16 %v336
    %v721 = vunpack.c.h.b16 %v336
    %v722 = vunpack.c.l.b16 %v337
    %v723 = vunpack.c.h.b16 %v337
    %v724 = vunpack.c.l.b16 %v338
    %v725 = vunpack.c.h.b16 %v338
    %v726 = vunpack.c.l.b16 %v339
    %v727 = vunpack.c.h.b16 %v339
    %v728 = vunpack.c.l.b16 %v340
    %v729 = vunpack.c.h.b16 %v340
    %v730 = vunpack.c.l.b16 %v341
    %v731 = vunpack.c.h.b16 %v341
    %v732 = vunpack.c.l.b16 %v342
    %v733 = vunpack.c.h.b16 %v342
    %v734 = vunpack.c.l.b16 %v343
    %v735 = vunpack.c.h.b16 %v343
    %v736 = vunpack.c.l.b16 %v344
    %v737 = vunpack.c.h.b16 %v344
    %v738 = vunpack.c.l.b16 %v345
    %v739 = vunpack.c.h.b16 %v345
    %v740 = vunpack.c.l.b16 %v346
    %v741 = vunpack.c.h.b16 %v346
    %v742 = vunpack.c.l.b16 %v347
    %v743 = vunpack.c.h.b16 %v347
    %v744 = vunpack.c.l.b16 %v348
    %v745 = vunpack.c.h.b16 %v348
    %v746 = vunpack.c.l.b16 %v349
    %v747 = vunpack.c.h.b16 %v349
    %v748 = vunpack.c.l.b16 %v350
    %v749 = vunpack.c.h.b16 %v350
    %v750 = vunpack.c.l.b16 %v351
    %v751 = vunpack.c.h.b16 %v351
    %v752 = vunpack.c.l.b16 %v352
    %v753 = vunpack.c.h.b16 %v352
    %v754 = vunpack.c.l.b16 %v353
    %v755 = vunpack.c.h.b16 %v353
    %v756 = vunpack.c.l.b16 %v354
    %v757 = vunpack.c.h.b16 %v354
    %v758 = vunpack.c.l.b16 %v355
    %v759 = vunpack.c.h.b16 %v355
    %v760 = vunpack.c.l.b16 %v356
    %v761 = vunpack.c.h.b16 %v356
    %v762 = vunpack.c.l.b16 %v357
    %v763 = vunpack.c.h.b16 %v357
    %v764 = vunpack.c.l.b16 %v358
    %v765 = vunpack.c.h.b16 %v358
    %v766 = vunpack.c.l.b16 %v359
    %v767 = vunpack.c.h.b16 %v359
    %v768 = vunpack.c.l.b16 %v360
    %v769 = vunpack.c.h.b16 %v360
    %v770 = vunpack.c.l.b16 %v361
    %v771 = vunpack.c.h.b16 %v361
    %v772 = vunpack.c.l.b16 %v362
    %v773 = vunpack.c.h.b16 %v362
    %v774 = vunpack.c.l.b16 %v363
    %v775 = vunpack.c.h.b16 %v363
    %v776 = vunpack.c.l.b16 %v364
    %v777 = vunpack.c.h.b16 %v364
    %v778 = vpack.c.b16 %v526, %v522
    %v779 = vpack.c.b16 %v527, %v523
    %v780 = vpack.c.b16 %v528, %v524
    %v781 = vpack.c.b16 %v529, %v525
    %v782 = vpack.c.b16 %v534, %v530
    %v783 = vpack.c.b16 %v535, %v531
    %v784 = vpack.c.b16 %v536, %v532
    %v785 = vpack.c.b16 %v537, %v533
    %v786 = vpack.c.b16 %v542, %v538
    %v787 = vpack.c.b16 %v543, %v539
    %v788 = vpack.c.b16 %v544, %v540
    %v789 = vpack.c.b16 %v545, %v541
    %v790 = vpack.c.b16 %v550, %v546
    %v791 = vpack.c.b16 %v551, %v547
    %v792 = vpack.c.b16 %v552, %v548
    %v793 = vpack.c.b16 %v553, %v549
    %v794 = vpack.c.b16 %v558, %v554
    %v795 = vpack.c.b16 %v559, %v555
    %v796 = vpack.c.b16 %v560, %v556
    %v797 = vpack.c.b16 %v561, %v557
    %v798 = vpack.c.b16 %v566, %v562
    %v799 = vpack.c.b16 %v567, %v563
    %v800 = vpack.c.b16 %v568, %v564
    %v801 = vpack.c.b16 %v569, %v565
    %v802 = vpack.c.b16 %v574, %v570
    %v803 = vpack.c.b16 %v575, %v571
    %v804 = vpack.c.b16 %v576, %v572
    %v805 = vpack.c.b16 %v577, %v573
    %v806 = vpack.c.b16 %v582, %v578
    %v807 = vpack.c.b16 %v583, %v579
    %v808 = vpack.c.b16 %v584, %v580
    %v809 = vpack.c.b16 %v585, %v581
    %v810 = vpack.c.b16 %v590, %v586
    %v811 = vpack.c.b16 %v591, %v587
    %v812 = vpack.c.b16 %v592, %v588
    %v813 = vpack.c.b16 %v593, %v589
    %v814 = vpack.c.b16 %v598, %v594
    %v815 = vpack.c.b16 %v599, %v595
    %v816 = vpack.c.b16 %v600, %v596
    %v817 = vpack.c.b16 %v601, %v597
    %v818 = vpack.c.b16 %v606, %v602
    %v819 = vpack.c.b16 %v607, %v603
    %v820 = vpack.c.b16 %v608, %v604
    %v821 = vpack.c.b16 %v609, %v605
    %v822 = vpack.c.b16 %v614, %v610
    %v823 = vpack.c.b16 %v615, %v611
    %v824 = vpack.c.b16 %v616, %v612
    %v825 = vpack.c.b16 %v617, %v613
    %v826 = vpack.c.b16 %v622, %v618
    %v827 = vpack.c.b16 %v623, %v619
    %v828 = vpack.c.b16 %v624, %v620
    %v829 = vpack.c.b16 %v625, %v621
    %v830 = vpack.c.b16 %v630, %v626
    %v831 = vpack.c.b16 %v631, %v627
    %v832 = vpack.c.b16 %v632, %v628
    %v833 = vpack.c.b16 %v633, %v629
    %v834 = vpack.c.b16 %v638, %v634
    %v835 = vpack.c.b16 %v639, %v635
    %v836 = vpack.c.b16 %v640, %v636
    %v837 = vpack.c.b16 %v641, %v637
    %v838 = vpack.c.b16 %v646, %v642
    %v839 = vpack.c.b16 %v647, %v643
    %v840 = vpack.c.b16 %v648, %v644
    %v841 = vpack.c.b16 %v649, %v645
    %v842 = vpack.c.b16 %v654, %v650
    %v843 = vpack.c.b16 %v655, %v651
    %v844 = vpack.c.b16 %v656, %v652
    %v845 = vpack.c.b16 %v657, %v653
    %v846 = vpack.c.b16 %v662, %v658
    %v847 = vpack.c.b16 %v663, %v659
    %v848 = vpack.c.b16 %v664, %v660
    %v849 = vpack.c.b16 %v665, %v661
    %v850 = vpack.c.b16 %v670, %v666
    %v851 = vpack.c.b16 %v671, %v667
    %v852 = vpack.c.b16 %v672, %v668
    %v853 = vpack.c.b16 %v673, %v669
    %v854 = vpack.c.b16 %v678, %v674
    %v855 = vpack.c.b16 %v679, %v675
    %v856 = vpack.c.b16 %v680, %v676
    %v857 = vpack.c.b16 %v681, %v677
    %v858 = vpack.c.b16 %v686, %v682
    %v859 = vpack.c.b16 %v687, %v683
    %v860 = vpack.c.b16 %v688, %v684
    %v861 = vpack.c.b16 %v689, %v685
    %v862 = vpack.c.b16 %v694, %v690
    %v863 = vpack.c.b16 %v695, %v691
    %v864 = vpack.c.b16 %v696, %v692
    %v865 = vpack.c.b16 %v697, %v693
    %v866 = vpack.c.b16 %v702, %v698
    %v867 = vpack.c.b16 %v703, %v699
    %v868 = vpack.c.b16 %v704, %v700
    %v869 = vpack.c.b16 %v705, %v701
    %v870 = vpack.c.b16 %v710, %v706
    %v871 = vpack.c.b16 %v711, %v707
    %v872 = vpack.c.b16 %v712, %v708
    %v873 = vpack.c.b16 %v713, %v709
    %v874 = vpack.c.b16 %v718, %v714
    %v875 = vpack.c.b16 %v719, %v715
    %v876 = vpack.c.b16 %v720, %v716
    %v877 = vpack.c.b16 %v721, %v717
    %v878 = vpack.c.b16 %v726, %v722
    %v879 = vpack.c.b16 %v727, %v723
    %v880 = vpack.c.b16 %v728, %v724
    %v881 = vpack.c.b16 %v729, %v725
    %v882 = vpack.c.b16 %v734, %v730
    %v883 = vpack.c.b16 %v735, %v731
    %v884 = vpack.c.b16 %v736, %v732
    %v885 = vpack.c.b16 %v737, %v733
    %v886 = vpack.c.b16 %v742, %v738
    %v887 = vpack.c.b16 %v743, %v739
    %v888 = vpack.c.b16 %v744, %v740
    %v889 = vpack.c.b16 %v745, %v741
    %v890 = vpack.c.b16 %v750, %v746
    %v891 = vpack.c.b16 %v751, %v747
    %v892 = vpack.c.b16 %v752, %v748
    %v893 = vpack.c.b16 %v753, %v749
    %v894 = vpack.c.b16 %v758, %v754
    %v895 = vpack.c.b16 %v759, %v755
    %v896 = vpack.c.b16 %v760, %v756
    %v897 = vpack.c.b16 %v761, %v757
    %v898 = vpack.c.b16 %v766, %v762
    %v899 = vpack.c.b16 %v767, %v763
    %v900 = vpack.c.b16 %v768, %v764
    %v901 = vpack.c.b16 %v769, %v765
    %v902 = vpack.c.b16 %v774, %v770
    %v903 = vpack.c.b16 %v775, %v771
    %v904 = vpack.c.b16 %v776, %v772
    %v905 = vpack.c.b16 %v777, %v773
    %1034 = vmatprep.subr.bf16.mxu0 %v779
    %1035 = vmatpush1.bf16.msra.mxu0 %v778
    %1036 = vmatprep.subr.bf16.mxu0 %v783
    %1037 = vmatpush1.bf16.msra.mxu0 %v782
    %1038 = vmatprep.subr.bf16.mxu0 %v787
    %1039 = vmatpush1.bf16.msra.mxu0 %v786
    %1040 = vmatprep.subr.bf16.mxu0 %v791
    %1041 = vmatpush1.bf16.msra.mxu0 %v790
    %1042 = vmatprep.subr.bf16.mxu0 %v795
    %1043 = vmatpush1.bf16.msra.mxu0 %v794
    %1044 = vmatprep.subr.bf16.mxu0 %v799
    %1045 = vmatpush1.bf16.msra.mxu0 %v798
    %1046 = vmatprep.subr.bf16.mxu0 %v803
    %1047 = vmatpush1.bf16.msra.mxu0 %v802
    %1048 = vmatprep.subr.bf16.mxu0 %v807
    %1049 = vmatpush1.bf16.msra.mxu0 %v806
    %1050 = vmatprep.subr.bf16.mxu0 %v811
    %1051 = vmatpush1.bf16.msra.mxu0 %v810
    %1052 = vmatprep.subr.bf16.mxu0 %v815
    %1053 = vmatpush1.bf16.msra.mxu0 %v814
    %1054 = vmatprep.subr.bf16.mxu0 %v819
    %1055 = vmatpush1.bf16.msra.mxu0 %v818
    %1056 = vmatprep.subr.bf16.mxu0 %v823
    %1057 = vmatpush1.bf16.msra.mxu0 %v822
    %1058 = vmatprep.subr.bf16.mxu0 %v827
    %1059 = vmatpush1.bf16.msra.mxu0 %v826
    %1060 = vmatprep.subr.bf16.mxu0 %v831
    %1061 = vmatpush1.bf16.msra.mxu0 %v830
    %1062 = vmatprep.subr.bf16.mxu0 %v835
    %1063 = vmatpush1.bf16.msra.mxu0 %v834
    %1064 = vmatprep.subr.bf16.mxu0 %v839
    %1065 = vmatpush1.bf16.msra.mxu0 %v838
    %1066 = vmatprep.mubr.bf16.mxu0 %v387
    %1067 = vmatmul.mubr.bf16.gmra.mrb[0].mxu0 %v386
    %v1068 = vpop.f32.mrb[0].mxu0
    %v1069 = vadd.f32 0.0, %v1068
    %v1070 = vpop.f32.mrb[0].mxu0
    %v1071 = vadd.f32 0.0, %v1070
    %v1072 = vpop.f32.mrb[0].mxu0
    %v1073 = vpop.f32.mrb[0].mxu0
    %1074 = vdwg.mxu0
    %1075 = vmatprep.subr.bf16.mxu0 %v843
    %1076 = vmatpush1.bf16.msra.mxu0 %v842
    %1077 = vmatprep.subr.bf16.mxu0 %v847
    %1078 = vmatpush1.bf16.msra.mxu0 %v846
    %1079 = vmatprep.subr.bf16.mxu0 %v851
    %1080 = vmatpush1.bf16.msra.mxu0 %v850
    %1081 = vmatprep.subr.bf16.mxu0 %v855
    %1082 = vmatpush1.bf16.msra.mxu0 %v854
    %1083 = vmatprep.subr.bf16.mxu0 %v859
    %1084 = vmatpush1.bf16.msra.mxu0 %v858
    %1085 = vmatprep.subr.bf16.mxu0 %v863
    %1086 = vmatpush1.bf16.msra.mxu0 %v862
    %1087 = vmatprep.subr.bf16.mxu0 %v867
    %1088 = vmatpush1.bf16.msra.mxu0 %v866
    %1089 = vmatprep.subr.bf16.mxu0 %v871
    %1090 = vmatpush1.bf16.msra.mxu0 %v870
    %1091 = vmatprep.subr.bf16.mxu0 %v875
    %1092 = vmatpush1.bf16.msra.mxu0 %v874
    %1093 = vmatprep.subr.bf16.mxu0 %v879
    %1094 = vmatpush1.bf16.msra.mxu0 %v878
    %1095 = vmatprep.subr.bf16.mxu0 %v883
    %1096 = vmatpush1.bf16.msra.mxu0 %v882
    %1097 = vmatprep.subr.bf16.mxu0 %v887
    %1098 = vmatpush1.bf16.msra.mxu0 %v886
    %1099 = vmatprep.subr.bf16.mxu0 %v891
    %1100 = vmatpush1.bf16.msra.mxu0 %v890
    %1101 = vmatprep.subr.bf16.mxu0 %v895
    %1102 = vmatpush1.bf16.msra.mxu0 %v894
    %1103 = vmatprep.subr.bf16.mxu0 %v899
    %1104 = vmatpush1.bf16.msra.mxu0 %v898
    %1105 = vmatprep.subr.bf16.mxu0 %v903
    %1106 = vmatpush1.bf16.msra.mxu0 %v902
    %1107 = vmatprep.mubr.bf16.mxu0 %v389
    %1108 = vmatmul.mubr.bf16.gmra.mrb[0].mxu0 %v388
    %v1109 = vpop.f32.mrb[0].mxu0
    %v1110 = vadd.f32 %v1069, %v1109
    %v1111 = vpop.f32.mrb[0].mxu0
    %v1112 = vadd.f32 %v1071, %v1111
    %v1113 = vpop.f32.mrb[0].mxu0
    %v1114 = vpop.f32.mrb[0].mxu0
    %1115 = vdwg.mxu0
    %1116 = vmatprep.subr.bf16.mxu0 %v781
    %1117 = vmatpush1.bf16.msra.mxu0 %v780
    %1118 = vmatprep.subr.bf16.mxu0 %v785
    %1119 = vmatpush1.bf16.msra.mxu0 %v784
    %1120 = vmatprep.subr.bf16.mxu0 %v789
    %1121 = vmatpush1.bf16.msra.mxu0 %v788
    %1122 = vmatprep.subr.bf16.mxu0 %v793
    %1123 = vmatpush1.bf16.msra.mxu0 %v792
    %1124 = vmatprep.subr.bf16.mxu0 %v797
    %1125 = vmatpush1.bf16.msra.mxu0 %v796
    %1126 = vmatprep.subr.bf16.mxu0 %v801
    %1127 = vmatpush1.bf16.msra.mxu0 %v800
    %1128 = vmatprep.subr.bf16.mxu0 %v805
    %1129 = vmatpush1.bf16.msra.mxu0 %v804
    %1130 = vmatprep.subr.bf16.mxu0 %v809
    %1131 = vmatpush1.bf16.msra.mxu0 %v808
    %1132 = vmatprep.subr.bf16.mxu0 %v813
    %1133 = vmatpush1.bf16.msra.mxu0 %v812
    %1134 = vmatprep.subr.bf16.mxu0 %v817
    %1135 = vmatpush1.bf16.msra.mxu0 %v816
    %1136 = vmatprep.subr.bf16.mxu0 %v821
    %1137 = vmatpush1.bf16.msra.mxu0 %v820
    %1138 = vmatprep.subr.bf16.mxu0 %v825
    %1139 = vmatpush1.bf16.msra.mxu0 %v824
    %1140 = vmatprep.subr.bf16.mxu0 %v829
    %1141 = vmatpush1.bf16.msra.mxu0 %v828
    %1142 = vmatprep.subr.bf16.mxu0 %v833
    %1143 = vmatpush1.bf16.msra.mxu0 %v832
    %1144 = vmatprep.subr.bf16.mxu0 %v837
    %1145 = vmatpush1.bf16.msra.mxu0 %v836
    %1146 = vmatprep.subr.bf16.mxu0 %v841
    %1147 = vmatpush1.bf16.msra.mxu0 %v840
    %1148 = vmatprep.mubr.bf16.mxu0 %v387
    %1149 = vmatmul.mubr.bf16.gmra.mrb[0].mxu0 %v386
    %v1150 = vpop.f32.mrb[0].mxu0
    %v1151 = vadd.f32 0.0, %v1150
    %v1152 = vpop.f32.mrb[0].mxu0
    %v1153 = vadd.f32 0.0, %v1152
    %v1154 = vpop.f32.mrb[0].mxu0
    %v1155 = vpop.f32.mrb[0].mxu0
    %1156 = vdwg.mxu0
    %1157 = vmatprep.subr.bf16.mxu0 %v845
    %1158 = vmatpush1.bf16.msra.mxu0 %v844
    %1159 = vmatprep.subr.bf16.mxu0 %v849
    %1160 = vmatpush1.bf16.msra.mxu0 %v848
    %1161 = vmatprep.subr.bf16.mxu0 %v853
    %1162 = vmatpush1.bf16.msra.mxu0 %v852
    %1163 = vmatprep.subr.bf16.mxu0 %v857
    %1164 = vmatpush1.bf16.msra.mxu0 %v856
    %1165 = vmatprep.subr.bf16.mxu0 %v861
    %1166 = vmatpush1.bf16.msra.mxu0 %v860
    %1167 = vmatprep.subr.bf16.mxu0 %v865
    %1168 = vmatpush1.bf16.msra.mxu0 %v864
    %1169 = vmatprep.subr.bf16.mxu0 %v869
    %1170 = vmatpush1.bf16.msra.mxu0 %v868
    %1171 = vmatprep.subr.bf16.mxu0 %v873
    %1172 = vmatpush1.bf16.msra.mxu0 %v872
    %1173 = vmatprep.subr.bf16.mxu0 %v877
    %1174 = vmatpush1.bf16.msra.mxu0 %v876
    %1175 = vmatprep.subr.bf16.mxu0 %v881
    %1176 = vmatpush1.bf16.msra.mxu0 %v880
    %1177 = vmatprep.subr.bf16.mxu0 %v885
    %1178 = vmatpush1.bf16.msra.mxu0 %v884
    %1179 = vmatprep.subr.bf16.mxu0 %v889
    %1180 = vmatpush1.bf16.msra.mxu0 %v888
    %1181 = vmatprep.subr.bf16.mxu0 %v893
    %1182 = vmatpush1.bf16.msra.mxu0 %v892
    %1183 = vmatprep.subr.bf16.mxu0 %v897
    %1184 = vmatpush1.bf16.msra.mxu0 %v896
    %1185 = vmatprep.subr.bf16.mxu0 %v901
    %1186 = vmatpush1.bf16.msra.mxu0 %v900
    %1187 = vmatprep.subr.bf16.mxu0 %v905
    %1188 = vmatpush1.bf16.msra.mxu0 %v904
    %1189 = vmatprep.mubr.bf16.mxu0 %v389
    %1190 = vmatmul.mubr.bf16.gmra.mrb[0].mxu0 %v388
    %v1191 = vpop.f32.mrb[0].mxu0
    %v1192 = vadd.f32 %v1151, %v1191
    %v1193 = vpop.f32.mrb[0].mxu0
    %v1194 = vadd.f32 %v1153, %v1193
    %v1195 = vpop.f32.mrb[0].mxu0
    %v1196 = vpop.f32.mrb[0].mxu0
    %1197 = vdwg.mxu0
    %v1198 = vmax.f32 %v186, 1.0
    %v1199 = vmax.f32 %v192, 1.0
    %v1200 = vmax.f32 %v198, 1.0
    %v1201 = vmax.f32 %v204, 1.0
    %v1202 = vmax.f32 %v210, 1.0
    %v1203 = vmax.f32 %v216, 1.0
    %v1204 = vmax.f32 %v222, 1.0
    %v1205 = vmax.f32 %v228, 1.0
    %v1206 = vrcp.pop %v1198
    %v1207 = vrcp.pop %v1199
    %v1208 = vrcp.pop %v1200
    %v1209 = vrcp.pop %v1201
    %v1210 = vrcp.pop %v1202
    %v1211 = vrcp.pop %v1203
    %v1212 = vrcp.pop %v1204
    %v1213 = vrcp.pop %v1205
    %v1222 = vsel %vm381, %v1210, %v1206
    %v1223 = vsel %vm381, %v1211, %v1207
    %v1224 = vsel %vm381, %v1212, %v1208
    %v1225 = vsel %vm381, %v1213, %v1209
    %v1230 = vmul.f32 %v1110, %v1222
    %v1231 = vmul.f32 %v1112, %v1223
    %v1232 = vmul.f32 %v1192, %v1224
    %v1233 = vmul.f32 %v1194, %v1225
    %v1234 = vpack.c.bf16 %v113, %v109
    %v1235 = vpack.c.bf16 %v114, %v110
    %v1236 = vpack.c.bf16 %v115, %v111
    %v1237 = vpack.c.bf16 %v116, %v112
    %v1238 = vld [vmem:[#allocation10] sm:$0xff]
    %v1239 = vld [vmem:[#allocation10 + $0x8] sm:$0xff]
    %v1240 = vld [vmem:[#allocation10 + $0x10] sm:$0xff]
    %v1241 = vld [vmem:[#allocation10 + $0x18] sm:$0xff]
    %v1242 = vld [vmem:[#allocation10 + $0x20] sm:$0xff]
    %v1243 = vld [vmem:[#allocation10 + $0x28] sm:$0xff]
    %v1244 = vld [vmem:[#allocation10 + $0x30] sm:$0xff]
    %v1245 = vld [vmem:[#allocation10 + $0x38] sm:$0xff]
    %v1246 = vld [vmem:[#allocation10 + $0x40] sm:$0xff]
    %v1247 = vld [vmem:[#allocation10 + $0x48] sm:$0xff]
    %v1248 = vld [vmem:[#allocation10 + $0x50] sm:$0xff]
    %v1249 = vld [vmem:[#allocation10 + $0x58] sm:$0xff]
    %v1250 = vld [vmem:[#allocation10 + $0x60] sm:$0xff]
    %v1251 = vld [vmem:[#allocation10 + $0x68] sm:$0xff]
    %v1252 = vld [vmem:[#allocation10 + $0x70] sm:$0xff]
    %v1253 = vld [vmem:[#allocation10 + $0x78] sm:$0xff]
    %v1254 = vld [vmem:[#allocation10 + $0x80] sm:$0xff]
    %v1255 = vld [vmem:[#allocation10 + $0x88] sm:$0xff]
    %v1256 = vld [vmem:[#allocation10 + $0x90] sm:$0xff]
    %v1257 = vld [vmem:[#allocation10 + $0x98] sm:$0xff]
    %v1258 = vld [vmem:[#allocation10 + $0xa0] sm:$0xff]
    %v1259 = vld [vmem:[#allocation10 + $0xa8] sm:$0xff]
    %v1260 = vld [vmem:[#allocation10 + $0xb0] sm:$0xff]
    %v1261 = vld [vmem:[#allocation10 + $0xb8] sm:$0xff]
    %v1262 = vld [vmem:[#allocation10 + $0xc0] sm:$0xff]
    %v1263 = vld [vmem:[#allocation10 + $0xc8] sm:$0xff]
    %v1264 = vld [vmem:[#allocation10 + $0xd0] sm:$0xff]
    %v1265 = vld [vmem:[#allocation10 + $0xd8] sm:$0xff]
    %v1266 = vld [vmem:[#allocation10 + $0xe0] sm:$0xff]
    %v1267 = vld [vmem:[#allocation10 + $0xe8] sm:$0xff]
    %v1268 = vld [vmem:[#allocation10 + $0xf0] sm:$0xff]
    %v1269 = vld [vmem:[#allocation10 + $0xf8] sm:$0xff]
    %v1270 = vld [vmem:[#allocation10 + $0x100] sm:$0xff]
    %v1271 = vld [vmem:[#allocation10 + $0x108] sm:$0xff]
    %v1272 = vld [vmem:[#allocation10 + $0x110] sm:$0xff]
    %v1273 = vld [vmem:[#allocation10 + $0x118] sm:$0xff]
    %v1274 = vld [vmem:[#allocation10 + $0x120] sm:$0xff]
    %v1275 = vld [vmem:[#allocation10 + $0x128] sm:$0xff]
    %v1276 = vld [vmem:[#allocation10 + $0x130] sm:$0xff]
    %v1277 = vld [vmem:[#allocation10 + $0x138] sm:$0xff]
    %v1278 = vld [vmem:[#allocation10 + $0x140] sm:$0xff]
    %v1279 = vld [vmem:[#allocation10 + $0x148] sm:$0xff]
    %v1280 = vld [vmem:[#allocation10 + $0x150] sm:$0xff]
    %v1281 = vld [vmem:[#allocation10 + $0x158] sm:$0xff]
    %v1282 = vld [vmem:[#allocation10 + $0x160] sm:$0xff]
    %v1283 = vld [vmem:[#allocation10 + $0x168] sm:$0xff]
    %v1284 = vld [vmem:[#allocation10 + $0x170] sm:$0xff]
    %v1285 = vld [vmem:[#allocation10 + $0x178] sm:$0xff]
    %v1286 = vld [vmem:[#allocation10 + $0x180] sm:$0xff]
    %v1287 = vld [vmem:[#allocation10 + $0x188] sm:$0xff]
    %v1288 = vld [vmem:[#allocation10 + $0x190] sm:$0xff]
    %v1289 = vld [vmem:[#allocation10 + $0x198] sm:$0xff]
    %v1290 = vld [vmem:[#allocation10 + $0x1a0] sm:$0xff]
    %v1291 = vld [vmem:[#allocation10 + $0x1a8] sm:$0xff]
    %v1292 = vld [vmem:[#allocation10 + $0x1b0] sm:$0xff]
    %v1293 = vld [vmem:[#allocation10 + $0x1b8] sm:$0xff]
    %v1294 = vld [vmem:[#allocation10 + $0x1c0] sm:$0xff]
    %v1295 = vld [vmem:[#allocation10 + $0x1c8] sm:$0xff]
    %v1296 = vld [vmem:[#allocation10 + $0x1d0] sm:$0xff]
    %v1297 = vld [vmem:[#allocation10 + $0x1d8] sm:$0xff]
    %v1298 = vld [vmem:[#allocation10 + $0x1e0] sm:$0xff]
    %v1299 = vld [vmem:[#allocation10 + $0x1e8] sm:$0xff]
    %v1300 = vld [vmem:[#allocation10 + $0x1f0] sm:$0xff]
    %v1301 = vld [vmem:[#allocation10 + $0x1f8] sm:$0xff]
    %v1302 = vld [vmem:[#allocation10 + $0x200] sm:$0xff]
    %v1303 = vld [vmem:[#allocation10 + $0x208] sm:$0xff]
    %v1304 = vld [vmem:[#allocation10 + $0x210] sm:$0xff]
    %v1305 = vld [vmem:[#allocation10 + $0x218] sm:$0xff]
    %v1306 = vld [vmem:[#allocation10 + $0x220] sm:$0xff]
    %v1307 = vld [vmem:[#allocation10 + $0x228] sm:$0xff]
    %v1308 = vld [vmem:[#allocation10 + $0x230] sm:$0xff]
    %v1309 = vld [vmem:[#allocation10 + $0x238] sm:$0xff]
    %v1310 = vld [vmem:[#allocation10 + $0x240] sm:$0xff]
    %v1311 = vld [vmem:[#allocation10 + $0x248] sm:$0xff]
    %v1312 = vld [vmem:[#allocation10 + $0x250] sm:$0xff]
    %v1313 = vld [vmem:[#allocation10 + $0x258] sm:$0xff]
    %v1314 = vld [vmem:[#allocation10 + $0x260] sm:$0xff]
    %v1315 = vld [vmem:[#allocation10 + $0x268] sm:$0xff]
    %v1316 = vld [vmem:[#allocation10 + $0x270] sm:$0xff]
    %v1317 = vld [vmem:[#allocation10 + $0x278] sm:$0xff]
    %v1318 = vld [vmem:[#allocation10 + $0x280] sm:$0xff]
    %v1319 = vld [vmem:[#allocation10 + $0x288] sm:$0xff]
    %v1320 = vld [vmem:[#allocation10 + $0x290] sm:$0xff]
    %v1321 = vld [vmem:[#allocation10 + $0x298] sm:$0xff]
    %v1322 = vld [vmem:[#allocation10 + $0x2a0] sm:$0xff]
    %v1323 = vld [vmem:[#allocation10 + $0x2a8] sm:$0xff]
    %v1324 = vld [vmem:[#allocation10 + $0x2b0] sm:$0xff]
    %v1325 = vld [vmem:[#allocation10 + $0x2b8] sm:$0xff]
    %v1326 = vld [vmem:[#allocation10 + $0x2c0] sm:$0xff]
    %v1327 = vld [vmem:[#allocation10 + $0x2c8] sm:$0xff]
    %v1328 = vld [vmem:[#allocation10 + $0x2d0] sm:$0xff]
    %v1329 = vld [vmem:[#allocation10 + $0x2d8] sm:$0xff]
    %v1330 = vld [vmem:[#allocation10 + $0x2e0] sm:$0xff]
    %v1331 = vld [vmem:[#allocation10 + $0x2e8] sm:$0xff]
    %v1332 = vld [vmem:[#allocation10 + $0x2f0] sm:$0xff]
    %v1333 = vld [vmem:[#allocation10 + $0x2f8] sm:$0xff]
    %v1334 = vld [vmem:[#allocation10 + $0x300] sm:$0xff]
    %v1335 = vld [vmem:[#allocation10 + $0x308] sm:$0xff]
    %v1336 = vld [vmem:[#allocation10 + $0x310] sm:$0xff]
    %v1337 = vld [vmem:[#allocation10 + $0x318] sm:$0xff]
    %v1338 = vld [vmem:[#allocation10 + $0x320] sm:$0xff]
    %v1339 = vld [vmem:[#allocation10 + $0x328] sm:$0xff]
    %v1340 = vld [vmem:[#allocation10 + $0x330] sm:$0xff]
    %v1341 = vld [vmem:[#allocation10 + $0x338] sm:$0xff]
    %v1342 = vld [vmem:[#allocation10 + $0x340] sm:$0xff]
    %v1343 = vld [vmem:[#allocation10 + $0x348] sm:$0xff]
    %v1344 = vld [vmem:[#allocation10 + $0x350] sm:$0xff]
    %v1345 = vld [vmem:[#allocation10 + $0x358] sm:$0xff]
    %v1346 = vld [vmem:[#allocation10 + $0x360] sm:$0xff]
    %v1347 = vld [vmem:[#allocation10 + $0x368] sm:$0xff]
    %v1348 = vld [vmem:[#allocation10 + $0x370] sm:$0xff]
    %v1349 = vld [vmem:[#allocation10 + $0x378] sm:$0xff]
    %v1350 = vld [vmem:[#allocation10 + $0x380] sm:$0xff]
    %v1351 = vld [vmem:[#allocation10 + $0x388] sm:$0xff]
    %v1352 = vld [vmem:[#allocation10 + $0x390] sm:$0xff]
    %v1353 = vld [vmem:[#allocation10 + $0x398] sm:$0xff]
    %v1354 = vld [vmem:[#allocation10 + $0x3a0] sm:$0xff]
    %v1355 = vld [vmem:[#allocation10 + $0x3a8] sm:$0xff]
    %v1356 = vld [vmem:[#allocation10 + $0x3b0] sm:$0xff]
    %v1357 = vld [vmem:[#allocation10 + $0x3b8] sm:$0xff]
    %v1358 = vld [vmem:[#allocation10 + $0x3c0] sm:$0xff]
    %v1359 = vld [vmem:[#allocation10 + $0x3c8] sm:$0xff]
    %v1360 = vld [vmem:[#allocation10 + $0x3d0] sm:$0xff]
    %v1361 = vld [vmem:[#allocation10 + $0x3d8] sm:$0xff]
    %v1362 = vld [vmem:[#allocation10 + $0x3e0] sm:$0xff]
    %v1363 = vld [vmem:[#allocation10 + $0x3e8] sm:$0xff]
    %v1364 = vld [vmem:[#allocation10 + $0x3f0] sm:$0xff]
    %v1365 = vld [vmem:[#allocation10 + $0x3f8] sm:$0xff]
    %v1494 = vunpack.c.l.b16 %v1238
    %v1495 = vunpack.c.h.b16 %v1238
    %v1496 = vunpack.c.l.b16 %v1239
    %v1497 = vunpack.c.h.b16 %v1239
    %v1498 = vunpack.c.l.b16 %v1240
    %v1499 = vunpack.c.h.b16 %v1240
    %v1500 = vunpack.c.l.b16 %v1241
    %v1501 = vunpack.c.h.b16 %v1241
    %v1502 = vunpack.c.l.b16 %v1242
    %v1503 = vunpack.c.h.b16 %v1242
    %v1504 = vunpack.c.l.b16 %v1243
    %v1505 = vunpack.c.h.b16 %v1243
    %v1506 = vunpack.c.l.b16 %v1244
    %v1507 = vunpack.c.h.b16 %v1244
    %v1508 = vunpack.c.l.b16 %v1245
    %v1509 = vunpack.c.h.b16 %v1245
    %v1510 = vunpack.c.l.b16 %v1246
    %v1511 = vunpack.c.h.b16 %v1246
    %v1512 = vunpack.c.l.b16 %v1247
    %v1513 = vunpack.c.h.b16 %v1247
    %v1514 = vunpack.c.l.b16 %v1248
    %v1515 = vunpack.c.h.b16 %v1248
    %v1516 = vunpack.c.l.b16 %v1249
    %v1517 = vunpack.c.h.b16 %v1249
    %v1518 = vunpack.c.l.b16 %v1250
    %v1519 = vunpack.c.h.b16 %v1250
    %v1520 = vunpack.c.l.b16 %v1251
    %v1521 = vunpack.c.h.b16 %v1251
    %v1522 = vunpack.c.l.b16 %v1252
    %v1523 = vunpack.c.h.b16 %v1252
    %v1524 = vunpack.c.l.b16 %v1253
    %v1525 = vunpack.c.h.b16 %v1253
    %v1526 = vunpack.c.l.b16 %v1254
    %v1527 = vunpack.c.h.b16 %v1254
    %v1528 = vunpack.c.l.b16 %v1255
    %v1529 = vunpack.c.h.b16 %v1255
    %v1530 = vunpack.c.l.b16 %v1256
    %v1531 = vunpack.c.h.b16 %v1256
    %v1532 = vunpack.c.l.b16 %v1257
    %v1533 = vunpack.c.h.b16 %v1257
    %v1534 = vunpack.c.l.b16 %v1258
    %v1535 = vunpack.c.h.b16 %v1258
    %v1536 = vunpack.c.l.b16 %v1259
    %v1537 = vunpack.c.h.b16 %v1259
    %v1538 = vunpack.c.l.b16 %v1260
    %v1539 = vunpack.c.h.b16 %v1260
    %v1540 = vunpack.c.l.b16 %v1261
    %v1541 = vunpack.c.h.b16 %v1261
    %v1542 = vunpack.c.l.b16 %v1262
    %v1543 = vunpack.c.h.b16 %v1262
    %v1544 = vunpack.c.l.b16 %v1263
    %v1545 = vunpack.c.h.b16 %v1263
    %v1546 = vunpack.c.l.b16 %v1264
    %v1547 = vunpack.c.h.b16 %v1264
    %v1548 = vunpack.c.l.b16 %v1265
    %v1549 = vunpack.c.h.b16 %v1265
    %v1550 = vunpack.c.l.b16 %v1266
    %v1551 = vunpack.c.h.b16 %v1266
    %v1552 = vunpack.c.l.b16 %v1267
    %v1553 = vunpack.c.h.b16 %v1267
    %v1554 = vunpack.c.l.b16 %v1268
    %v1555 = vunpack.c.h.b16 %v1268
    %v1556 = vunpack.c.l.b16 %v1269
    %v1557 = vunpack.c.h.b16 %v1269
    %v1558 = vunpack.c.l.b16 %v1270
    %v1559 = vunpack.c.h.b16 %v1270
    %v1560 = vunpack.c.l.b16 %v1271
    %v1561 = vunpack.c.h.b16 %v1271
    %v1562 = vunpack.c.l.b16 %v1272
    %v1563 = vunpack.c.h.b16 %v1272
    %v1564 = vunpack.c.l.b16 %v1273
    %v1565 = vunpack.c.h.b16 %v1273
    %v1566 = vunpack.c.l.b16 %v1274
    %v1567 = vunpack.c.h.b16 %v1274
    %v1568 = vunpack.c.l.b16 %v1275
    %v1569 = vunpack.c.h.b16 %v1275
    %v1570 = vunpack.c.l.b16 %v1276
    %v1571 = vunpack.c.h.b16 %v1276
    %v1572 = vunpack.c.l.b16 %v1277
    %v1573 = vunpack.c.h.b16 %v1277
    %v1574 = vunpack.c.l.b16 %v1278
    %v1575 = vunpack.c.h.b16 %v1278
    %v1576 = vunpack.c.l.b16 %v1279
    %v1577 = vunpack.c.h.b16 %v1279
    %v1578 = vunpack.c.l.b16 %v1280
    %v1579 = vunpack.c.h.b16 %v1280
    %v1580 = vunpack.c.l.b16 %v1281
    %v1581 = vunpack.c.h.b16 %v1281
    %v1582 = vunpack.c.l.b16 %v1282
    %v1583 = vunpack.c.h.b16 %v1282
    %v1584 = vunpack.c.l.b16 %v1283
    %v1585 = vunpack.c.h.b16 %v1283
    %v1586 = vunpack.c.l.b16 %v1284
    %v1587 = vunpack.c.h.b16 %v1284
    %v1588 = vunpack.c.l.b16 %v1285
    %v1589 = vunpack.c.h.b16 %v1285
    %v1590 = vunpack.c.l.b16 %v1286
    %v1591 = vunpack.c.h.b16 %v1286
    %v1592 = vunpack.c.l.b16 %v1287
    %v1593 = vunpack.c.h.b16 %v1287
    %v1594 = vunpack.c.l.b16 %v1288
    %v1595 = vunpack.c.h.b16 %v1288
    %v1596 = vunpack.c.l.b16 %v1289
    %v1597 = vunpack.c.h.b16 %v1289
    %v1598 = vunpack.c.l.b16 %v1290
    %v1599 = vunpack.c.h.b16 %v1290
    %v1600 = vunpack.c.l.b16 %v1291
    %v1601 = vunpack.c.h.b16 %v1291
    %v1602 = vunpack.c.l.b16 %v1292
    %v1603 = vunpack.c.h.b16 %v1292
    %v1604 = vunpack.c.l.b16 %v1293
    %v1605 = vunpack.c.h.b16 %v1293
    %v1606 = vunpack.c.l.b16 %v1294
    %v1607 = vunpack.c.h.b16 %v1294
    %v1608 = vunpack.c.l.b16 %v1295
    %v1609 = vunpack.c.h.b16 %v1295
    %v1610 = vunpack.c.l.b16 %v1296
    %v1611 = vunpack.c.h.b16 %v1296
    %v1612 = vunpack.c.l.b16 %v1297
    %v1613 = vunpack.c.h.b16 %v1297
    %v1614 = vunpack.c.l.b16 %v1298
    %v1615 = vunpack.c.h.b16 %v1298
    %v1616 = vunpack.c.l.b16 %v1299
    %v1617 = vunpack.c.h.b16 %v1299
    %v1618 = vunpack.c.l.b16 %v1300
    %v1619 = vunpack.c.h.b16 %v1300
    %v1620 = vunpack.c.l.b16 %v1301
    %v1621 = vunpack.c.h.b16 %v1301
    %v1622 = vunpack.c.l.b16 %v1302
    %v1623 = vunpack.c.h.b16 %v1302
    %v1624 = vunpack.c.l.b16 %v1303
    %v1625 = vunpack.c.h.b16 %v1303
    %v1626 = vunpack.c.l.b16 %v1304
    %v1627 = vunpack.c.h.b16 %v1304
    %v1628 = vunpack.c.l.b16 %v1305
    %v1629 = vunpack.c.h.b16 %v1305
    %v1630 = vunpack.c.l.b16 %v1306
    %v1631 = vunpack.c.h.b16 %v1306
    %v1632 = vunpack.c.l.b16 %v1307
    %v1633 = vunpack.c.h.b16 %v1307
    %v1634 = vunpack.c.l.b16 %v1308
    %v1635 = vunpack.c.h.b16 %v1308
    %v1636 = vunpack.c.l.b16 %v1309
    %v1637 = vunpack.c.h.b16 %v1309
    %v1638 = vunpack.c.l.b16 %v1310
    %v1639 = vunpack.c.h.b16 %v1310
    %v1640 = vunpack.c.l.b16 %v1311
    %v1641 = vunpack.c.h.b16 %v1311
    %v1642 = vunpack.c.l.b16 %v1312
    %v1643 = vunpack.c.h.b16 %v1312
    %v1644 = vunpack.c.l.b16 %v1313
    %v1645 = vunpack.c.h.b16 %v1313
    %v1646 = vunpack.c.l.b16 %v1314
    %v1647 = vunpack.c.h.b16 %v1314
    %v1648 = vunpack.c.l.b16 %v1315
    %v1649 = vunpack.c.h.b16 %v1315
    %v1650 = vunpack.c.l.b16 %v1316
    %v1651 = vunpack.c.h.b16 %v1316
    %v1652 = vunpack.c.l.b16 %v1317
    %v1653 = vunpack.c.h.b16 %v1317
    %v1654 = vunpack.c.l.b16 %v1318
    %v1655 = vunpack.c.h.b16 %v1318
    %v1656 = vunpack.c.l.b16 %v1319
    %v1657 = vunpack.c.h.b16 %v1319
    %v1658 = vunpack.c.l.b16 %v1320
    %v1659 = vunpack.c.h.b16 %v1320
    %v1660 = vunpack.c.l.b16 %v1321
    %v1661 = vunpack.c.h.b16 %v1321
    %v1662 = vunpack.c.l.b16 %v1322
    %v1663 = vunpack.c.h.b16 %v1322
    %v1664 = vunpack.c.l.b16 %v1323
    %v1665 = vunpack.c.h.b16 %v1323
    %v1666 = vunpack.c.l.b16 %v1324
    %v1667 = vunpack.c.h.b16 %v1324
    %v1668 = vunpack.c.l.b16 %v1325
    %v1669 = vunpack.c.h.b16 %v1325
    %v1670 = vunpack.c.l.b16 %v1326
    %v1671 = vunpack.c.h.b16 %v1326
    %v1672 = vunpack.c.l.b16 %v1327
    %v1673 = vunpack.c.h.b16 %v1327
    %v1674 = vunpack.c.l.b16 %v1328
    %v1675 = vunpack.c.h.b16 %v1328
    %v1676 = vunpack.c.l.b16 %v1329
    %v1677 = vunpack.c.h.b16 %v1329
    %v1678 = vunpack.c.l.b16 %v1330
    %v1679 = vunpack.c.h.b16 %v1330
    %v1680 = vunpack.c.l.b16 %v1331
    %v1681 = vunpack.c.h.b16 %v1331
    %v1682 = vunpack.c.l.b16 %v1332
    %v1683 = vunpack.c.h.b16 %v1332
    %v1684 = vunpack.c.l.b16 %v1333
    %v1685 = vunpack.c.h.b16 %v1333
    %v1686 = vunpack.c.l.b16 %v1334
    %v1687 = vunpack.c.h.b16 %v1334
    %v1688 = vunpack.c.l.b16 %v1335
    %v1689 = vunpack.c.h.b16 %v1335
    %v1690 = vunpack.c.l.b16 %v1336
    %v1691 = vunpack.c.h.b16 %v1336
    %v1692 = vunpack.c.l.b16 %v1337
    %v1693 = vunpack.c.h.b16 %v1337
    %v1694 = vunpack.c.l.b16 %v1338
    %v1695 = vunpack.c.h.b16 %v1338
    %v1696 = vunpack.c.l.b16 %v1339
    %v1697 = vunpack.c.h.b16 %v1339
    %v1698 = vunpack.c.l.b16 %v1340
    %v1699 = vunpack.c.h.b16 %v1340
    %v1700 = vunpack.c.l.b16 %v1341
    %v1701 = vunpack.c.h.b16 %v1341
    %v1702 = vunpack.c.l.b16 %v1342
    %v1703 = vunpack.c.h.b16 %v1342
    %v1704 = vunpack.c.l.b16 %v1343
    %v1705 = vunpack.c.h.b16 %v1343
    %v1706 = vunpack.c.l.b16 %v1344
    %v1707 = vunpack.c.h.b16 %v1344
    %v1708 = vunpack.c.l.b16 %v1345
    %v1709 = vunpack.c.h.b16 %v1345
    %v1710 = vunpack.c.l.b16 %v1346
    %v1711 = vunpack.c.h.b16 %v1346
    %v1712 = vunpack.c.l.b16 %v1347
    %v1713 = vunpack.c.h.b16 %v1347
    %v1714 = vunpack.c.l.b16 %v1348
    %v1715 = vunpack.c.h.b16 %v1348
    %v1716 = vunpack.c.l.b16 %v1349
    %v1717 = vunpack.c.h.b16 %v1349
    %v1718 = vunpack.c.l.b16 %v1350
    %v1719 = vunpack.c.h.b16 %v1350
    %v1720 = vunpack.c.l.b16 %v1351
    %v1721 = vunpack.c.h.b16 %v1351
    %v1722 = vunpack.c.l.b16 %v1352
    %v1723 = vunpack.c.h.b16 %v1352
    %v1724 = vunpack.c.l.b16 %v1353
    %v1725 = vunpack.c.h.b16 %v1353
    %v1726 = vunpack.c.l.b16 %v1354
    %v1727 = vunpack.c.h.b16 %v1354
    %v1728 = vunpack.c.l.b16 %v1355
    %v1729 = vunpack.c.h.b16 %v1355
    %v1730 = vunpack.c.l.b16 %v1356
    %v1731 = vunpack.c.h.b16 %v1356
    %v1732 = vunpack.c.l.b16 %v1357
    %v1733 = vunpack.c.h.b16 %v1357
    %v1734 = vunpack.c.l.b16 %v1358
    %v1735 = vunpack.c.h.b16 %v1358
    %v1736 = vunpack.c.l.b16 %v1359
    %v1737 = vunpack.c.h.b16 %v1359
    %v1738 = vunpack.c.l.b16 %v1360
    %v1739 = vunpack.c.h.b16 %v1360
    %v1740 = vunpack.c.l.b16 %v1361
    %v1741 = vunpack.c.h.b16 %v1361
    %v1742 = vunpack.c.l.b16 %v1362
    %v1743 = vunpack.c.h.b16 %v1362
    %v1744 = vunpack.c.l.b16 %v1363
    %v1745 = vunpack.c.h.b16 %v1363
    %v1746 = vunpack.c.l.b16 %v1364
    %v1747 = vunpack.c.h.b16 %v1364
    %v1748 = vunpack.c.l.b16 %v1365
    %v1749 = vunpack.c.h.b16 %v1365
    %v1750 = vpack.c.b16 %v1498, %v1494
    %v1751 = vpack.c.b16 %v1499, %v1495
    %v1752 = vpack.c.b16 %v1500, %v1496
    %v1753 = vpack.c.b16 %v1501, %v1497
    %v1754 = vpack.c.b16 %v1506, %v1502
    %v1755 = vpack.c.b16 %v1507, %v1503
    %v1756 = vpack.c.b16 %v1508, %v1504
    %v1757 = vpack.c.b16 %v1509, %v1505
    %v1758 = vpack.c.b16 %v1514, %v1510
    %v1759 = vpack.c.b16 %v1515, %v1511
    %v1760 = vpack.c.b16 %v1516, %v1512
    %v1761 = vpack.c.b16 %v1517, %v1513
    %v1762 = vpack.c.b16 %v1522, %v1518
    %v1763 = vpack.c.b16 %v1523, %v1519
    %v1764 = vpack.c.b16 %v1524, %v1520
    %v1765 = vpack.c.b16 %v1525, %v1521
    %v1766 = vpack.c.b16 %v1530, %v1526
    %v1767 = vpack.c.b16 %v1531, %v1527
    %v1768 = vpack.c.b16 %v1532, %v1528
    %v1769 = vpack.c.b16 %v1533, %v1529
    %v1770 = vpack.c.b16 %v1538, %v1534
    %v1771 = vpack.c.b16 %v1539, %v1535
    %v1772 = vpack.c.b16 %v1540, %v1536
    %v1773 = vpack.c.b16 %v1541, %v1537
    %v1774 = vpack.c.b16 %v1546, %v1542
    %v1775 = vpack.c.b16 %v1547, %v1543
    %v1776 = vpack.c.b16 %v1548, %v1544
    %v1777 = vpack.c.b16 %v1549, %v1545
    %v1778 = vpack.c.b16 %v1554, %v1550
    %v1779 = vpack.c.b16 %v1555, %v1551
    %v1780 = vpack.c.b16 %v1556, %v1552
    %v1781 = vpack.c.b16 %v1557, %v1553
    %v1782 = vpack.c.b16 %v1562, %v1558
    %v1783 = vpack.c.b16 %v1563, %v1559
    %v1784 = vpack.c.b16 %v1564, %v1560
    %v1785 = vpack.c.b16 %v1565, %v1561
    %v1786 = vpack.c.b16 %v1570, %v1566
    %v1787 = vpack.c.b16 %v1571, %v1567
    %v1788 = vpack.c.b16 %v1572, %v1568
    %v1789 = vpack.c.b16 %v1573, %v1569
    %v1790 = vpack.c.b16 %v1578, %v1574
    %v1791 = vpack.c.b16 %v1579, %v1575
    %v1792 = vpack.c.b16 %v1580, %v1576
    %v1793 = vpack.c.b16 %v1581, %v1577
    %v1794 = vpack.c.b16 %v1586, %v1582
    %v1795 = vpack.c.b16 %v1587, %v1583
    %v1796 = vpack.c.b16 %v1588, %v1584
    %v1797 = vpack.c.b16 %v1589, %v1585
    %v1798 = vpack.c.b16 %v1594, %v1590
    %v1799 = vpack.c.b16 %v1595, %v1591
    %v1800 = vpack.c.b16 %v1596, %v1592
    %v1801 = vpack.c.b16 %v1597, %v1593
    %v1802 = vpack.c.b16 %v1602, %v1598
    %v1803 = vpack.c.b16 %v1603, %v1599
    %v1804 = vpack.c.b16 %v1604, %v1600
    %v1805 = vpack.c.b16 %v1605, %v1601
    %v1806 = vpack.c.b16 %v1610, %v1606
    %v1807 = vpack.c.b16 %v1611, %v1607
    %v1808 = vpack.c.b16 %v1612, %v1608
    %v1809 = vpack.c.b16 %v1613, %v1609
    %v1810 = vpack.c.b16 %v1618, %v1614
    %v1811 = vpack.c.b16 %v1619, %v1615
    %v1812 = vpack.c.b16 %v1620, %v1616
    %v1813 = vpack.c.b16 %v1621, %v1617
    %v1814 = vpack.c.b16 %v1626, %v1622
    %v1815 = vpack.c.b16 %v1627, %v1623
    %v1816 = vpack.c.b16 %v1628, %v1624
    %v1817 = vpack.c.b16 %v1629, %v1625
    %v1818 = vpack.c.b16 %v1634, %v1630
    %v1819 = vpack.c.b16 %v1635, %v1631
    %v1820 = vpack.c.b16 %v1636, %v1632
    %v1821 = vpack.c.b16 %v1637, %v1633
    %v1822 = vpack.c.b16 %v1642, %v1638
    %v1823 = vpack.c.b16 %v1643, %v1639
    %v1824 = vpack.c.b16 %v1644, %v1640
    %v1825 = vpack.c.b16 %v1645, %v1641
    %v1826 = vpack.c.b16 %v1650, %v1646
    %v1827 = vpack.c.b16 %v1651, %v1647
    %v1828 = vpack.c.b16 %v1652, %v1648
    %v1829 = vpack.c.b16 %v1653, %v1649
    %v1830 = vpack.c.b16 %v1658, %v1654
    %v1831 = vpack.c.b16 %v1659, %v1655
    %v1832 = vpack.c.b16 %v1660, %v1656
    %v1833 = vpack.c.b16 %v1661, %v1657
    %v1834 = vpack.c.b16 %v1666, %v1662
    %v1835 = vpack.c.b16 %v1667, %v1663
    %v1836 = vpack.c.b16 %v1668, %v1664
    %v1837 = vpack.c.b16 %v1669, %v1665
    %v1838 = vpack.c.b16 %v1674, %v1670
    %v1839 = vpack.c.b16 %v1675, %v1671
    %v1840 = vpack.c.b16 %v1676, %v1672
    %v1841 = vpack.c.b16 %v1677, %v1673
    %v1842 = vpack.c.b16 %v1682, %v1678
    %v1843 = vpack.c.b16 %v1683, %v1679
    %v1844 = vpack.c.b16 %v1684, %v1680
    %v1845 = vpack.c.b16 %v1685, %v1681
    %v1846 = vpack.c.b16 %v1690, %v1686
    %v1847 = vpack.c.b16 %v1691, %v1687
    %v1848 = vpack.c.b16 %v1692, %v1688
    %v1849 = vpack.c.b16 %v1693, %v1689
    %v1850 = vpack.c.b16 %v1698, %v1694
    %v1851 = vpack.c.b16 %v1699, %v1695
    %v1852 = vpack.c.b16 %v1700, %v1696
    %v1853 = vpack.c.b16 %v1701, %v1697
    %v1854 = vpack.c.b16 %v1706, %v1702
    %v1855 = vpack.c.b16 %v1707, %v1703
    %v1856 = vpack.c.b16 %v1708, %v1704
    %v1857 = vpack.c.b16 %v1709, %v1705
    %v1858 = vpack.c.b16 %v1714, %v1710
    %v1859 = vpack.c.b16 %v1715, %v1711
    %v1860 = vpack.c.b16 %v1716, %v1712
    %v1861 = vpack.c.b16 %v1717, %v1713
    %v1862 = vpack.c.b16 %v1722, %v1718
    %v1863 = vpack.c.b16 %v1723, %v1719
    %v1864 = vpack.c.b16 %v1724, %v1720
    %v1865 = vpack.c.b16 %v1725, %v1721
    %v1866 = vpack.c.b16 %v1730, %v1726
    %v1867 = vpack.c.b16 %v1731, %v1727
    %v1868 = vpack.c.b16 %v1732, %v1728
    %v1869 = vpack.c.b16 %v1733, %v1729
    %v1870 = vpack.c.b16 %v1738, %v1734
    %v1871 = vpack.c.b16 %v1739, %v1735
    %v1872 = vpack.c.b16 %v1740, %v1736
    %v1873 = vpack.c.b16 %v1741, %v1737
    %v1874 = vpack.c.b16 %v1746, %v1742
    %v1875 = vpack.c.b16 %v1747, %v1743
    %v1876 = vpack.c.b16 %v1748, %v1744
    %v1877 = vpack.c.b16 %v1749, %v1745
    %2006 = vmatprep.subr.bf16.mxu0 %v1751
    %2007 = vmatpush1.bf16.msra.mxu0 %v1750
    %2008 = vmatprep.subr.bf16.mxu0 %v1755
    %2009 = vmatpush1.bf16.msra.mxu0 %v1754
    %2010 = vmatprep.subr.bf16.mxu0 %v1759
    %2011 = vmatpush1.bf16.msra.mxu0 %v1758
    %2012 = vmatprep.subr.bf16.mxu0 %v1763
    %2013 = vmatpush1.bf16.msra.mxu0 %v1762
    %2014 = vmatprep.subr.bf16.mxu0 %v1767
    %2015 = vmatpush1.bf16.msra.mxu0 %v1766
    %2016 = vmatprep.subr.bf16.mxu0 %v1771
    %2017 = vmatpush1.bf16.msra.mxu0 %v1770
    %2018 = vmatprep.subr.bf16.mxu0 %v1775
    %2019 = vmatpush1.bf16.msra.mxu0 %v1774
    %2020 = vmatprep.subr.bf16.mxu0 %v1779
    %2021 = vmatpush1.bf16.msra.mxu0 %v1778
    %2022 = vmatprep.subr.bf16.mxu0 %v1783
    %2023 = vmatpush1.bf16.msra.mxu0 %v1782
    %2024 = vmatprep.subr.bf16.mxu0 %v1787
    %2025 = vmatpush1.bf16.msra.mxu0 %v1786
    %2026 = vmatprep.subr.bf16.mxu0 %v1791
    %2027 = vmatpush1.bf16.msra.mxu0 %v1790
    %2028 = vmatprep.subr.bf16.mxu0 %v1795
    %2029 = vmatpush1.bf16.msra.mxu0 %v1794
    %2030 = vmatprep.subr.bf16.mxu0 %v1799
    %2031 = vmatpush1.bf16.msra.mxu0 %v1798
    %2032 = vmatprep.subr.bf16.mxu0 %v1803
    %2033 = vmatpush1.bf16.msra.mxu0 %v1802
    %2034 = vmatprep.subr.bf16.mxu0 %v1807
    %2035 = vmatpush1.bf16.msra.mxu0 %v1806
    %2036 = vmatprep.subr.bf16.mxu0 %v1811
    %2037 = vmatpush1.bf16.msra.mxu0 %v1810
    %2038 = vmatprep.mubr.bf16.mxu0 %v1235
    %2039 = vmatmul.mubr.bf16.gmra.mrb[0].mxu0 %v1234
    %v2040 = vpop.f32.mrb[0].mxu0
    %v2041 = vadd.f32 0.0, %v2040
    %v2042 = vpop.f32.mrb[0].mxu0
    %v2043 = vadd.f32 0.0, %v2042
    %v2044 = vpop.f32.mrb[0].mxu0
    %v2045 = vadd.f32 0.0, %v2044
    %v2046 = vpop.f32.mrb[0].mxu0
    %v2047 = vadd.f32 0.0, %v2046
    %2048 = vdwg.mxu0
    %2049 = vmatprep.subr.bf16.mxu0 %v1815
    %2050 = vmatpush1.bf16.msra.mxu0 %v1814
    %2051 = vmatprep.subr.bf16.mxu0 %v1819
    %2052 = vmatpush1.bf16.msra.mxu0 %v1818
    %2053 = vmatprep.subr.bf16.mxu0 %v1823
    %2054 = vmatpush1.bf16.msra.mxu0 %v1822
    %2055 = vmatprep.subr.bf16.mxu0 %v1827
    %2056 = vmatpush1.bf16.msra.mxu0 %v1826
    %2057 = vmatprep.subr.bf16.mxu0 %v1831
    %2058 = vmatpush1.bf16.msra.mxu0 %v1830
    %2059 = vmatprep.subr.bf16.mxu0 %v1835
    %2060 = vmatpush1.bf16.msra.mxu0 %v1834
    %2061 = vmatprep.subr.bf16.mxu0 %v1839
    %2062 = vmatpush1.bf16.msra.mxu0 %v1838
    %2063 = vmatprep.subr.bf16.mxu0 %v1843
    %2064 = vmatpush1.bf16.msra.mxu0 %v1842
    %2065 = vmatprep.subr.bf16.mxu0 %v1847
    %2066 = vmatpush1.bf16.msra.mxu0 %v1846
    %2067 = vmatprep.subr.bf16.mxu0 %v1851
    %2068 = vmatpush1.bf16.msra.mxu0 %v1850
    %2069 = vmatprep.subr.bf16.mxu0 %v1855
    %2070 = vmatpush1.bf16.msra.mxu0 %v1854
    %2071 = vmatprep.subr.bf16.mxu0 %v1859
    %2072 = vmatpush1.bf16.msra.mxu0 %v1858
    %2073 = vmatprep.subr.bf16.mxu0 %v1863
    %2074 = vmatpush1.bf16.msra.mxu0 %v1862
    %2075 = vmatprep.subr.bf16.mxu0 %v1867
    %2076 = vmatpush1.bf16.msra.mxu0 %v1866
    %2077 = vmatprep.subr.bf16.mxu0 %v1871
    %2078 = vmatpush1.bf16.msra.mxu0 %v1870
    %2079 = vmatprep.subr.bf16.mxu0 %v1875
    %2080 = vmatpush1.bf16.msra.mxu0 %v1874
    %2081 = vmatprep.mubr.bf16.mxu0 %v1237
    %2082 = vmatmul.mubr.bf16.gmra.mrb[0].mxu0 %v1236
    %v2083 = vpop.f32.mrb[0].mxu0
    %v2084 = vadd.f32 %v2041, %v2083
    %v2085 = vpop.f32.mrb[0].mxu0
    %v2086 = vadd.f32 %v2043, %v2085
    %v2087 = vpop.f32.mrb[0].mxu0
    %v2088 = vadd.f32 %v2045, %v2087
    %v2089 = vpop.f32.mrb[0].mxu0
    %v2090 = vadd.f32 %v2047, %v2089
    %2091 = vdwg.mxu0
    %2092 = vmatprep.subr.bf16.mxu0 %v1753
    %2093 = vmatpush1.bf16.msra.mxu0 %v1752
    %2094 = vmatprep.subr.bf16.mxu0 %v1757
    %2095 = vmatpush1.bf16.msra.mxu0 %v1756
    %2096 = vmatprep.subr.bf16.mxu0 %v1761
    %2097 = vmatpush1.bf16.msra.mxu0 %v1760
    %2098 = vmatprep.subr.bf16.mxu0 %v1765
    %2099 = vmatpush1.bf16.msra.mxu0 %v1764
    %2100 = vmatprep.subr.bf16.mxu0 %v1769
    %2101 = vmatpush1.bf16.msra.mxu0 %v1768
    %2102 = vmatprep.subr.bf16.mxu0 %v1773
    %2103 = vmatpush1.bf16.msra.mxu0 %v1772
    %2104 = vmatprep.subr.bf16.mxu0 %v1777
    %2105 = vmatpush1.bf16.msra.mxu0 %v1776
    %2106 = vmatprep.subr.bf16.mxu0 %v1781
    %2107 = vmatpush1.bf16.msra.mxu0 %v1780
    %2108 = vmatprep.subr.bf16.mxu0 %v1785
    %2109 = vmatpush1.bf16.msra.mxu0 %v1784
    %2110 = vmatprep.subr.bf16.mxu0 %v1789
    %2111 = vmatpush1.bf16.msra.mxu0 %v1788
    %2112 = vmatprep.subr.bf16.mxu0 %v1793
    %2113 = vmatpush1.bf16.msra.mxu0 %v1792
    %2114 = vmatprep.subr.bf16.mxu0 %v1797
    %2115 = vmatpush1.bf16.msra.mxu0 %v1796
    %2116 = vmatprep.subr.bf16.mxu0 %v1801
    %2117 = vmatpush1.bf16.msra.mxu0 %v1800
    %2118 = vmatprep.subr.bf16.mxu0 %v1805
    %2119 = vmatpush1.bf16.msra.mxu0 %v1804
    %2120 = vmatprep.subr.bf16.mxu0 %v1809
    %2121 = vmatpush1.bf16.msra.mxu0 %v1808
    %2122 = vmatprep.subr.bf16.mxu0 %v1813
    %2123 = vmatpush1.bf16.msra.mxu0 %v1812
    %2124 = vmatprep.mubr.bf16.mxu0 %v1235
    %2125 = vmatmul.mubr.bf16.gmra.mrb[0].mxu0 %v1234
    %v2126 = vpop.f32.mrb[0].mxu0
    %v2127 = vadd.f32 0.0, %v2126
    %v2128 = vpop.f32.mrb[0].mxu0
    %v2129 = vadd.f32 0.0, %v2128
    %v2130 = vpop.f32.mrb[0].mxu0
    %v2131 = vadd.f32 0.0, %v2130
    %v2132 = vpop.f32.mrb[0].mxu0
    %v2133 = vadd.f32 0.0, %v2132
    %2134 = vdwg.mxu0
    %2135 = vmatprep.subr.bf16.mxu0 %v1817
    %2136 = vmatpush1.bf16.msra.mxu0 %v1816
    %2137 = vmatprep.subr.bf16.mxu0 %v1821
    %2138 = vmatpush1.bf16.msra.mxu0 %v1820
    %2139 = vmatprep.subr.bf16.mxu0 %v1825
    %2140 = vmatpush1.bf16.msra.mxu0 %v1824
    %2141 = vmatprep.subr.bf16.mxu0 %v1829
    %2142 = vmatpush1.bf16.msra.mxu0 %v1828
    %2143 = vmatprep.subr.bf16.mxu0 %v1833
    %2144 = vmatpush1.bf16.msra.mxu0 %v1832
    %2145 = vmatprep.subr.bf16.mxu0 %v1837
    %2146 = vmatpush1.bf16.msra.mxu0 %v1836
    %2147 = vmatprep.subr.bf16.mxu0 %v1841
    %2148 = vmatpush1.bf16.msra.mxu0 %v1840
    %2149 = vmatprep.subr.bf16.mxu0 %v1845
    %2150 = vmatpush1.bf16.msra.mxu0 %v1844
    %2151 = vmatprep.subr.bf16.mxu0 %v1849
    %2152 = vmatpush1.bf16.msra.mxu0 %v1848
    %2153 = vmatprep.subr.bf16.mxu0 %v1853
    %2154 = vmatpush1.bf16.msra.mxu0 %v1852
    %2155 = vmatprep.subr.bf16.mxu0 %v1857
    %2156 = vmatpush1.bf16.msra.mxu0 %v1856
    %2157 = vmatprep.subr.bf16.mxu0 %v1861
    %2158 = vmatpush1.bf16.msra.mxu0 %v1860
    %2159 = vmatprep.subr.bf16.mxu0 %v1865
    %2160 = vmatpush1.bf16.msra.mxu0 %v1864
    %2161 = vmatprep.subr.bf16.mxu0 %v1869
    %2162 = vmatpush1.bf16.msra.mxu0 %v1868
    %2163 = vmatprep.subr.bf16.mxu0 %v1873
    %2164 = vmatpush1.bf16.msra.mxu0 %v1872
    %2165 = vmatprep.subr.bf16.mxu0 %v1877
    %2166 = vmatpush1.bf16.msra.mxu0 %v1876
    %2167 = vmatprep.mubr.bf16.mxu0 %v1237
    %2168 = vmatmul.mubr.bf16.gmra.mrb[0].mxu0 %v1236
    %v2169 = vpop.f32.mrb[0].mxu0
    %v2170 = vadd.f32 %v2127, %v2169
    %v2171 = vpop.f32.mrb[0].mxu0
    %v2172 = vadd.f32 %v2129, %v2171
    %v2173 = vpop.f32.mrb[0].mxu0
    %v2174 = vadd.f32 %v2131, %v2173
    %v2175 = vpop.f32.mrb[0].mxu0
    %v2176 = vadd.f32 %v2133, %v2175
    %2177 = vdwg.mxu0
    %v2182 = vcombine.low %v1230, %v1231
    %v2183 = vcombine.low %v1232, %v1233
    %v2185 = vunpack.c.l.s4 1966171168
    %v2186 = vunpack.c.0.s8 %v2185
    %v2187 = vlaneseq
    %v2188 = vshrl.u32 %v2187, 7
    %v2189 = vsub.s32 %v2186, %v2188
    %v2190 = vrot.slane %v2182, %v2189
    %v2192 = vunpack.c.l.s4 1966171168
    %v2193 = vunpack.c.0.s8 %v2192
    %v2194 = vlaneseq
    %v2195 = vshrl.u32 %v2194, 7
    %v2196 = vsub.s32 %v2193, %v2195
    %v2197 = vrot.slane %v2183, %v2196
    %v2198 = vcombine.low %v2190, %v2197
    %v2199 = vcombine.high %v2190, %v2197
    %v2201 = vunpack.c.l.s4 1966171168
    %v2202 = vunpack.c.0.s8 %v2201
    %v2203 = vlaneseq
    %v2204 = vshrl.u32 %v2203, 7
    %v2205 = vsub.s32 %v2202, %v2204
    %v2206 = vrot.slane %v2198, %v2205
    %v2208 = vunpack.c.l.s4 1966171168
    %v2209 = vunpack.c.0.s8 %v2208
    %v2210 = vlaneseq
    %v2211 = vshrl.u32 %v2210, 7
    %v2212 = vsub.s32 %v2209, %v2211
    %v2213 = vrot.slane %v2199, %v2212
    %v2214 = vlaneseq
    %v2215 = vshrl.u32 %v2214, 7
    %v2216 = vsub.s32 0, %v2215
    %v2217 = vrot.slane %v2206, %v2216
    %v2218 = vlaneseq
    %v2219 = vshrl.u32 %v2218, 7
    %v2220 = vsub.s32 1, %v2219
    %v2221 = vrot.slane %v2206, %v2220
    %v2222 = vlaneseq
    %v2223 = vshrl.u32 %v2222, 7
    %v2224 = vsub.s32 2, %v2223
    %v2225 = vrot.slane %v2206, %v2224
    %v2226 = vlaneseq
    %v2227 = vshrl.u32 %v2226, 7
    %v2228 = vsub.s32 3, %v2227
    %v2229 = vrot.slane %v2206, %v2228
    %v2230 = vlaneseq
    %v2231 = vshrl.u32 %v2230, 7
    %v2232 = vsub.s32 0, %v2231
    %v2233 = vrot.slane %v2213, %v2232
    %v2234 = vlaneseq
    %v2235 = vshrl.u32 %v2234, 7
    %v2236 = vsub.s32 1, %v2235
    %v2237 = vrot.slane %v2213, %v2236
    %v2238 = vlaneseq
    %v2239 = vshrl.u32 %v2238, 7
    %v2240 = vsub.s32 2, %v2239
    %v2241 = vrot.slane %v2213, %v2240
    %v2242 = vlaneseq
    %v2243 = vshrl.u32 %v2242, 7
    %v2244 = vsub.s32 3, %v2243
    %v2245 = vrot.slane %v2213, %v2244
    %v2254 = vsub.f32 %v125, %v2217
    %v2255 = vsub.f32 %v126, %v2221
    %v2256 = vsub.f32 %v127, %v2225
    %v2257 = vsub.f32 %v128, %v2229
    %v2258 = vsub.f32 %v129, %v2233
    %v2259 = vsub.f32 %v130, %v2237
    %v2260 = vsub.f32 %v131, %v2241
    %v2261 = vsub.f32 %v132, %v2245
    %v2262 = vmul.f32 %v117, %v2254
    %v2263 = vmul.f32 %v118, %v2255
    %v2264 = vmul.f32 %v121, %v2258
    %v2265 = vmul.f32 %v122, %v2259
    %v2266 = vmul.f32 %v119, %v2256
    %v2267 = vmul.f32 %v120, %v2257
    %v2268 = vmul.f32 %v123, %v2260
    %v2269 = vmul.f32 %v124, %v2261
    %v2270 = vsub.f32 %v2262, %v2266
    %v2271 = vsub.f32 %v2263, %v2267
    %v2272 = vsub.f32 %v2264, %v2268
    %v2273 = vsub.f32 %v2265, %v2269
    %v2274 = vmul.f32 %v117, %v2256
    %v2275 = vmul.f32 %v118, %v2257
    %v2276 = vmul.f32 %v121, %v2260
    %v2277 = vmul.f32 %v122, %v2261
    %v2278 = vmul.f32 %v119, %v2254
    %v2279 = vmul.f32 %v120, %v2255
    %v2280 = vmul.f32 %v123, %v2258
    %v2281 = vmul.f32 %v124, %v2259
    %v2282 = vadd.f32 %v2274, %v2278
    %v2283 = vadd.f32 %v2275, %v2279
    %v2284 = vadd.f32 %v2276, %v2280
    %v2285 = vadd.f32 %v2277, %v2281
    %v2286 = vadd.f32 %v2217, %v2270
    %v2287 = vadd.f32 %v2221, %v2271
    %v2288 = vadd.f32 %v2225, %v2282
    %v2289 = vadd.f32 %v2229, %v2283
    %v2290 = vadd.f32 %v2233, %v2272
    %v2291 = vadd.f32 %v2237, %v2273
    %v2292 = vadd.f32 %v2241, %v2284
    %v2293 = vadd.f32 %v2245, %v2285
    %v2294 = vpack.c.bf16 %v2290, %v2286
    %v2295 = vpack.c.bf16 %v2291, %v2287
    %v2296 = vpack.c.bf16 %v2292, %v2288
    %v2297 = vpack.c.bf16 %v2293, %v2289
    %v2298 = vpack.c.bf16 %v1230, %v1230
    %v2299 = vpack.c.bf16 %v1231, %v1231
    %v2300 = vpack.c.bf16 %v1232, %v1232
    %v2301 = vpack.c.bf16 %v1233, %v1233
    %v2302 = vld [vmem:[#allocation11] sm:$0xff]
    %v2303 = vld [vmem:[#allocation11 + $0x8] sm:$0xff]
    %v2304 = vld [vmem:[#allocation11 + $0x10] sm:$0xff]
    %v2305 = vld [vmem:[#allocation11 + $0x18] sm:$0xff]
    %v2306 = vld [vmem:[#allocation11 + $0x20] sm:$0xff]
    %v2307 = vld [vmem:[#allocation11 + $0x28] sm:$0xff]
    %v2308 = vld [vmem:[#allocation11 + $0x30] sm:$0xff]
    %v2309 = vld [vmem:[#allocation11 + $0x38] sm:$0xff]
    %v2310 = vld [vmem:[#allocation11 + $0x40] sm:$0xff]
    %v2311 = vld [vmem:[#allocation11 + $0x48] sm:$0xff]
    %v2312 = vld [vmem:[#allocation11 + $0x50] sm:$0xff]
    %v2313 = vld [vmem:[#allocation11 + $0x58] sm:$0xff]
    %v2314 = vld [vmem:[#allocation11 + $0x60] sm:$0xff]
    %v2315 = vld [vmem:[#allocation11 + $0x68] sm:$0xff]
    %v2316 = vld [vmem:[#allocation11 + $0x70] sm:$0xff]
    %v2317 = vld [vmem:[#allocation11 + $0x78] sm:$0xff]
    %v2318 = vld [vmem:[#allocation11 + $0x80] sm:$0xff]
    %v2319 = vld [vmem:[#allocation11 + $0x88] sm:$0xff]
    %v2320 = vld [vmem:[#allocation11 + $0x90] sm:$0xff]
    %v2321 = vld [vmem:[#allocation11 + $0x98] sm:$0xff]
    %v2322 = vld [vmem:[#allocation11 + $0xa0] sm:$0xff]
    %v2323 = vld [vmem:[#allocation11 + $0xa8] sm:$0xff]
    %v2324 = vld [vmem:[#allocation11 + $0xb0] sm:$0xff]
    %v2325 = vld [vmem:[#allocation11 + $0xb8] sm:$0xff]
    %v2326 = vld [vmem:[#allocation11 + $0xc0] sm:$0xff]
    %v2327 = vld [vmem:[#allocation11 + $0xc8] sm:$0xff]
    %v2328 = vld [vmem:[#allocation11 + $0xd0] sm:$0xff]
    %v2329 = vld [vmem:[#allocation11 + $0xd8] sm:$0xff]
    %v2330 = vld [vmem:[#allocation11 + $0xe0] sm:$0xff]
    %v2331 = vld [vmem:[#allocation11 + $0xe8] sm:$0xff]
    %v2332 = vld [vmem:[#allocation11 + $0xf0] sm:$0xff]
    %v2333 = vld [vmem:[#allocation11 + $0xf8] sm:$0xff]
    %v2334 = vld [vmem:[#allocation11 + $0x100] sm:$0xff]
    %v2335 = vld [vmem:[#allocation11 + $0x108] sm:$0xff]
    %v2336 = vld [vmem:[#allocation11 + $0x110] sm:$0xff]
    %v2337 = vld [vmem:[#allocation11 + $0x118] sm:$0xff]
    %v2338 = vld [vmem:[#allocation11 + $0x120] sm:$0xff]
    %v2339 = vld [vmem:[#allocation11 + $0x128] sm:$0xff]
    %v2340 = vld [vmem:[#allocation11 + $0x130] sm:$0xff]
    %v2341 = vld [vmem:[#allocation11 + $0x138] sm:$0xff]
    %v2342 = vld [vmem:[#allocation11 + $0x140] sm:$0xff]
    %v2343 = vld [vmem:[#allocation11 + $0x148] sm:$0xff]
    %v2344 = vld [vmem:[#allocation11 + $0x150] sm:$0xff]
    %v2345 = vld [vmem:[#allocation11 + $0x158] sm:$0xff]
    %v2346 = vld [vmem:[#allocation11 + $0x160] sm:$0xff]
    %v2347 = vld [vmem:[#allocation11 + $0x168] sm:$0xff]
    %v2348 = vld [vmem:[#allocation11 + $0x170] sm:$0xff]
    %v2349 = vld [vmem:[#allocation11 + $0x178] sm:$0xff]
    %v2350 = vld [vmem:[#allocation11 + $0x180] sm:$0xff]
    %v2351 = vld [vmem:[#allocation11 + $0x188] sm:$0xff]
    %v2352 = vld [vmem:[#allocation11 + $0x190] sm:$0xff]
    %v2353 = vld [vmem:[#allocation11 + $0x198] sm:$0xff]
    %v2354 = vld [vmem:[#allocation11 + $0x1a0] sm:$0xff]
    %v2355 = vld [vmem:[#allocation11 + $0x1a8] sm:$0xff]
    %v2356 = vld [vmem:[#allocation11 + $0x1b0] sm:$0xff]
    %v2357 = vld [vmem:[#allocation11 + $0x1b8] sm:$0xff]
    %v2358 = vld [vmem:[#allocation11 + $0x1c0] sm:$0xff]
    %v2359 = vld [vmem:[#allocation11 + $0x1c8] sm:$0xff]
    %v2360 = vld [vmem:[#allocation11 + $0x1d0] sm:$0xff]
    %v2361 = vld [vmem:[#allocation11 + $0x1d8] sm:$0xff]
    %v2362 = vld [vmem:[#allocation11 + $0x1e0] sm:$0xff]
    %v2363 = vld [vmem:[#allocation11 + $0x1e8] sm:$0xff]
    %v2364 = vld [vmem:[#allocation11 + $0x1f0] sm:$0xff]
    %v2365 = vld [vmem:[#allocation11 + $0x1f8] sm:$0xff]
    %v2366 = vld [vmem:[#allocation11 + $0x200] sm:$0xff]
    %v2367 = vld [vmem:[#allocation11 + $0x208] sm:$0xff]
    %v2368 = vld [vmem:[#allocation11 + $0x210] sm:$0xff]
    %v2369 = vld [vmem:[#allocation11 + $0x218] sm:$0xff]
    %v2370 = vld [vmem:[#allocation11 + $0x220] sm:$0xff]
    %v2371 = vld [vmem:[#allocation11 + $0x228] sm:$0xff]
    %v2372 = vld [vmem:[#allocation11 + $0x230] sm:$0xff]
    %v2373 = vld [vmem:[#allocation11 + $0x238] sm:$0xff]
    %v2374 = vld [vmem:[#allocation11 + $0x240] sm:$0xff]
    %v2375 = vld [vmem:[#allocation11 + $0x248] sm:$0xff]
    %v2376 = vld [vmem:[#allocation11 + $0x250] sm:$0xff]
    %v2377 = vld [vmem:[#allocation11 + $0x258] sm:$0xff]
    %v2378 = vld [vmem:[#allocation11 + $0x260] sm:$0xff]
    %v2379 = vld [vmem:[#allocation11 + $0x268] sm:$0xff]
    %v2380 = vld [vmem:[#allocation11 + $0x270] sm:$0xff]
    %v2381 = vld [vmem:[#allocation11 + $0x278] sm:$0xff]
    %v2382 = vld [vmem:[#allocation11 + $0x280] sm:$0xff]
    %v2383 = vld [vmem:[#allocation11 + $0x288] sm:$0xff]
    %v2384 = vld [vmem:[#allocation11 + $0x290] sm:$0xff]
    %v2385 = vld [vmem:[#allocation11 + $0x298] sm:$0xff]
    %v2386 = vld [vmem:[#allocation11 + $0x2a0] sm:$0xff]
    %v2387 = vld [vmem:[#allocation11 + $0x2a8] sm:$0xff]
    %v2388 = vld [vmem:[#allocation11 + $0x2b0] sm:$0xff]
    %v2389 = vld [vmem:[#allocation11 + $0x2b8] sm:$0xff]
    %v2390 = vld [vmem:[#allocation11 + $0x2c0] sm:$0xff]
    %v2391 = vld [vmem:[#allocation11 + $0x2c8] sm:$0xff]
    %v2392 = vld [vmem:[#allocation11 + $0x2d0] sm:$0xff]
    %v2393 = vld [vmem:[#allocation11 + $0x2d8] sm:$0xff]
    %v2394 = vld [vmem:[#allocation11 + $0x2e0] sm:$0xff]
    %v2395 = vld [vmem:[#allocation11 + $0x2e8] sm:$0xff]
    %v2396 = vld [vmem:[#allocation11 + $0x2f0] sm:$0xff]
    %v2397 = vld [vmem:[#allocation11 + $0x2f8] sm:$0xff]
    %v2398 = vld [vmem:[#allocation11 + $0x300] sm:$0xff]
    %v2399 = vld [vmem:[#allocation11 + $0x308] sm:$0xff]
    %v2400 = vld [vmem:[#allocation11 + $0x310] sm:$0xff]
    %v2401 = vld [vmem:[#allocation11 + $0x318] sm:$0xff]
    %v2402 = vld [vmem:[#allocation11 + $0x320] sm:$0xff]
    %v2403 = vld [vmem:[#allocation11 + $0x328] sm:$0xff]
    %v2404 = vld [vmem:[#allocation11 + $0x330] sm:$0xff]
    %v2405 = vld [vmem:[#allocation11 + $0x338] sm:$0xff]
    %v2406 = vld [vmem:[#allocation11 + $0x340] sm:$0xff]
    %v2407 = vld [vmem:[#allocation11 + $0x348] sm:$0xff]
    %v2408 = vld [vmem:[#allocation11 + $0x350] sm:$0xff]
    %v2409 = vld [vmem:[#allocation11 + $0x358] sm:$0xff]
    %v2410 = vld [vmem:[#allocation11 + $0x360] sm:$0xff]
    %v2411 = vld [vmem:[#allocation11 + $0x368] sm:$0xff]
    %v2412 = vld [vmem:[#allocation11 + $0x370] sm:$0xff]
    %v2413 = vld [vmem:[#allocation11 + $0x378] sm:$0xff]
    %v2414 = vld [vmem:[#allocation11 + $0x380] sm:$0xff]
    %v2415 = vld [vmem:[#allocation11 + $0x388] sm:$0xff]
    %v2416 = vld [vmem:[#allocation11 + $0x390] sm:$0xff]
    %v2417 = vld [vmem:[#allocation11 + $0x398] sm:$0xff]
    %v2418 = vld [vmem:[#allocation11 + $0x3a0] sm:$0xff]
    %v2419 = vld [vmem:[#allocation11 + $0x3a8] sm:$0xff]
    %v2420 = vld [vmem:[#allocation11 + $0x3b0] sm:$0xff]
    %v2421 = vld [vmem:[#allocation11 + $0x3b8] sm:$0xff]
    %v2422 = vld [vmem:[#allocation11 + $0x3c0] sm:$0xff]
    %v2423 = vld [vmem:[#allocation11 + $0x3c8] sm:$0xff]
    %v2424 = vld [vmem:[#allocation11 + $0x3d0] sm:$0xff]
    %v2425 = vld [vmem:[#allocation11 + $0x3d8] sm:$0xff]
    %v2426 = vld [vmem:[#allocation11 + $0x3e0] sm:$0xff]
    %v2427 = vld [vmem:[#allocation11 + $0x3e8] sm:$0xff]
    %v2428 = vld [vmem:[#allocation11 + $0x3f0] sm:$0xff]
    %v2429 = vld [vmem:[#allocation11 + $0x3f8] sm:$0xff]
    %v2558 = vunpack.c.l.b16 %v2302
    %v2559 = vunpack.c.h.b16 %v2302
    %v2560 = vunpack.c.l.b16 %v2303
    %v2561 = vunpack.c.h.b16 %v2303
    %v2562 = vunpack.c.l.b16 %v2304
    %v2563 = vunpack.c.h.b16 %v2304
    %v2564 = vunpack.c.l.b16 %v2305
    %v2565 = vunpack.c.h.b16 %v2305
    %v2566 = vunpack.c.l.b16 %v2306
    %v2567 = vunpack.c.h.b16 %v2306
    %v2568 = vunpack.c.l.b16 %v2307
    %v2569 = vunpack.c.h.b16 %v2307
    %v2570 = vunpack.c.l.b16 %v2308
    %v2571 = vunpack.c.h.b16 %v2308
    %v2572 = vunpack.c.l.b16 %v2309
    %v2573 = vunpack.c.h.b16 %v2309
    %v2574 = vunpack.c.l.b16 %v2310
    %v2575 = vunpack.c.h.b16 %v2310
    %v2576 = vunpack.c.l.b16 %v2311
    %v2577 = vunpack.c.h.b16 %v2311
    %v2578 = vunpack.c.l.b16 %v2312
    %v2579 = vunpack.c.h.b16 %v2312
    %v2580 = vunpack.c.l.b16 %v2313
    %v2581 = vunpack.c.h.b16 %v2313
    %v2582 = vunpack.c.l.b16 %v2314
    %v2583 = vunpack.c.h.b16 %v2314
    %v2584 = vunpack.c.l.b16 %v2315
    %v2585 = vunpack.c.h.b16 %v2315
    %v2586 = vunpack.c.l.b16 %v2316
    %v2587 = vunpack.c.h.b16 %v2316
    %v2588 = vunpack.c.l.b16 %v2317
    %v2589 = vunpack.c.h.b16 %v2317
    %v2590 = vunpack.c.l.b16 %v2318
    %v2591 = vunpack.c.h.b16 %v2318
    %v2592 = vunpack.c.l.b16 %v2319
    %v2593 = vunpack.c.h.b16 %v2319
    %v2594 = vunpack.c.l.b16 %v2320
    %v2595 = vunpack.c.h.b16 %v2320
    %v2596 = vunpack.c.l.b16 %v2321
    %v2597 = vunpack.c.h.b16 %v2321
    %v2598 = vunpack.c.l.b16 %v2322
    %v2599 = vunpack.c.h.b16 %v2322
    %v2600 = vunpack.c.l.b16 %v2323
    %v2601 = vunpack.c.h.b16 %v2323
    %v2602 = vunpack.c.l.b16 %v2324
    %v2603 = vunpack.c.h.b16 %v2324
    %v2604 = vunpack.c.l.b16 %v2325
    %v2605 = vunpack.c.h.b16 %v2325
    %v2606 = vunpack.c.l.b16 %v2326
    %v2607 = vunpack.c.h.b16 %v2326
    %v2608 = vunpack.c.l.b16 %v2327
    %v2609 = vunpack.c.h.b16 %v2327
    %v2610 = vunpack.c.l.b16 %v2328
    %v2611 = vunpack.c.h.b16 %v2328
    %v2612 = vunpack.c.l.b16 %v2329
    %v2613 = vunpack.c.h.b16 %v2329
    %v2614 = vunpack.c.l.b16 %v2330
    %v2615 = vunpack.c.h.b16 %v2330
    %v2616 = vunpack.c.l.b16 %v2331
    %v2617 = vunpack.c.h.b16 %v2331
    %v2618 = vunpack.c.l.b16 %v2332
    %v2619 = vunpack.c.h.b16 %v2332
    %v2620 = vunpack.c.l.b16 %v2333
    %v2621 = vunpack.c.h.b16 %v2333
    %v2622 = vunpack.c.l.b16 %v2334
    %v2623 = vunpack.c.h.b16 %v2334
    %v2624 = vunpack.c.l.b16 %v2335
    %v2625 = vunpack.c.h.b16 %v2335
    %v2626 = vunpack.c.l.b16 %v2336
    %v2627 = vunpack.c.h.b16 %v2336
    %v2628 = vunpack.c.l.b16 %v2337
    %v2629 = vunpack.c.h.b16 %v2337
    %v2630 = vunpack.c.l.b16 %v2338
    %v2631 = vunpack.c.h.b16 %v2338
    %v2632 = vunpack.c.l.b16 %v2339
    %v2633 = vunpack.c.h.b16 %v2339
    %v2634 = vunpack.c.l.b16 %v2340
    %v2635 = vunpack.c.h.b16 %v2340
    %v2636 = vunpack.c.l.b16 %v2341
    %v2637 = vunpack.c.h.b16 %v2341
    %v2638 = vunpack.c.l.b16 %v2342
    %v2639 = vunpack.c.h.b16 %v2342
    %v2640 = vunpack.c.l.b16 %v2343
    %v2641 = vunpack.c.h.b16 %v2343
    %v2642 = vunpack.c.l.b16 %v2344
    %v2643 = vunpack.c.h.b16 %v2344
    %v2644 = vunpack.c.l.b16 %v2345
    %v2645 = vunpack.c.h.b16 %v2345
    %v2646 = vunpack.c.l.b16 %v2346
    %v2647 = vunpack.c.h.b16 %v2346
    %v2648 = vunpack.c.l.b16 %v2347
    %v2649 = vunpack.c.h.b16 %v2347
    %v2650 = vunpack.c.l.b16 %v2348
    %v2651 = vunpack.c.h.b16 %v2348
    %v2652 = vunpack.c.l.b16 %v2349
    %v2653 = vunpack.c.h.b16 %v2349
    %v2654 = vunpack.c.l.b16 %v2350
    %v2655 = vunpack.c.h.b16 %v2350
    %v2656 = vunpack.c.l.b16 %v2351
    %v2657 = vunpack.c.h.b16 %v2351
    %v2658 = vunpack.c.l.b16 %v2352
    %v2659 = vunpack.c.h.b16 %v2352
    %v2660 = vunpack.c.l.b16 %v2353
    %v2661 = vunpack.c.h.b16 %v2353
    %v2662 = vunpack.c.l.b16 %v2354
    %v2663 = vunpack.c.h.b16 %v2354
    %v2664 = vunpack.c.l.b16 %v2355
    %v2665 = vunpack.c.h.b16 %v2355
    %v2666 = vunpack.c.l.b16 %v2356
    %v2667 = vunpack.c.h.b16 %v2356
    %v2668 = vunpack.c.l.b16 %v2357
    %v2669 = vunpack.c.h.b16 %v2357
    %v2670 = vunpack.c.l.b16 %v2358
    %v2671 = vunpack.c.h.b16 %v2358
    %v2672 = vunpack.c.l.b16 %v2359
    %v2673 = vunpack.c.h.b16 %v2359
    %v2674 = vunpack.c.l.b16 %v2360
    %v2675 = vunpack.c.h.b16 %v2360
    %v2676 = vunpack.c.l.b16 %v2361
    %v2677 = vunpack.c.h.b16 %v2361
    %v2678 = vunpack.c.l.b16 %v2362
    %v2679 = vunpack.c.h.b16 %v2362
    %v2680 = vunpack.c.l.b16 %v2363
    %v2681 = vunpack.c.h.b16 %v2363
    %v2682 = vunpack.c.l.b16 %v2364
    %v2683 = vunpack.c.h.b16 %v2364
    %v2684 = vunpack.c.l.b16 %v2365
    %v2685 = vunpack.c.h.b16 %v2365
    %v2686 = vunpack.c.l.b16 %v2366
    %v2687 = vunpack.c.h.b16 %v2366
    %v2688 = vunpack.c.l.b16 %v2367
    %v2689 = vunpack.c.h.b16 %v2367
    %v2690 = vunpack.c.l.b16 %v2368
    %v2691 = vunpack.c.h.b16 %v2368
    %v2692 = vunpack.c.l.b16 %v2369
    %v2693 = vunpack.c.h.b16 %v2369
    %v2694 = vunpack.c.l.b16 %v2370
    %v2695 = vunpack.c.h.b16 %v2370
    %v2696 = vunpack.c.l.b16 %v2371
    %v2697 = vunpack.c.h.b16 %v2371
    %v2698 = vunpack.c.l.b16 %v2372
    %v2699 = vunpack.c.h.b16 %v2372
    %v2700 = vunpack.c.l.b16 %v2373
    %v2701 = vunpack.c.h.b16 %v2373
    %v2702 = vunpack.c.l.b16 %v2374
    %v2703 = vunpack.c.h.b16 %v2374
    %v2704 = vunpack.c.l.b16 %v2375
    %v2705 = vunpack.c.h.b16 %v2375
    %v2706 = vunpack.c.l.b16 %v2376
    %v2707 = vunpack.c.h.b16 %v2376
    %v2708 = vunpack.c.l.b16 %v2377
    %v2709 = vunpack.c.h.b16 %v2377
    %v2710 = vunpack.c.l.b16 %v2378
    %v2711 = vunpack.c.h.b16 %v2378
    %v2712 = vunpack.c.l.b16 %v2379
    %v2713 = vunpack.c.h.b16 %v2379
    %v2714 = vunpack.c.l.b16 %v2380
    %v2715 = vunpack.c.h.b16 %v2380
    %v2716 = vunpack.c.l.b16 %v2381
    %v2717 = vunpack.c.h.b16 %v2381
    %v2718 = vunpack.c.l.b16 %v2382
    %v2719 = vunpack.c.h.b16 %v2382
    %v2720 = vunpack.c.l.b16 %v2383
    %v2721 = vunpack.c.h.b16 %v2383
    %v2722 = vunpack.c.l.b16 %v2384
    %v2723 = vunpack.c.h.b16 %v2384
    %v2724 = vunpack.c.l.b16 %v2385
    %v2725 = vunpack.c.h.b16 %v2385
    %v2726 = vunpack.c.l.b16 %v2386
    %v2727 = vunpack.c.h.b16 %v2386
    %v2728 = vunpack.c.l.b16 %v2387
    %v2729 = vunpack.c.h.b16 %v2387
    %v2730 = vunpack.c.l.b16 %v2388
    %v2731 = vunpack.c.h.b16 %v2388
    %v2732 = vunpack.c.l.b16 %v2389
    %v2733 = vunpack.c.h.b16 %v2389
    %v2734 = vunpack.c.l.b16 %v2390
    %v2735 = vunpack.c.h.b16 %v2390
    %v2736 = vunpack.c.l.b16 %v2391
    %v2737 = vunpack.c.h.b16 %v2391
    %v2738 = vunpack.c.l.b16 %v2392
    %v2739 = vunpack.c.h.b16 %v2392
    %v2740 = vunpack.c.l.b16 %v2393
    %v2741 = vunpack.c.h.b16 %v2393
    %v2742 = vunpack.c.l.b16 %v2394
    %v2743 = vunpack.c.h.b16 %v2394
    %v2744 = vunpack.c.l.b16 %v2395
    %v2745 = vunpack.c.h.b16 %v2395
    %v2746 = vunpack.c.l.b16 %v2396
    %v2747 = vunpack.c.h.b16 %v2396
    %v2748 = vunpack.c.l.b16 %v2397
    %v2749 = vunpack.c.h.b16 %v2397
    %v2750 = vunpack.c.l.b16 %v2398
    %v2751 = vunpack.c.h.b16 %v2398
    %v2752 = vunpack.c.l.b16 %v2399
    %v2753 = vunpack.c.h.b16 %v2399
    %v2754 = vunpack.c.l.b16 %v2400
    %v2755 = vunpack.c.h.b16 %v2400
    %v2756 = vunpack.c.l.b16 %v2401
    %v2757 = vunpack.c.h.b16 %v2401
    %v2758 = vunpack.c.l.b16 %v2402
    %v2759 = vunpack.c.h.b16 %v2402
    %v2760 = vunpack.c.l.b16 %v2403
    %v2761 = vunpack.c.h.b16 %v2403
    %v2762 = vunpack.c.l.b16 %v2404
    %v2763 = vunpack.c.h.b16 %v2404
    %v2764 = vunpack.c.l.b16 %v2405
    %v2765 = vunpack.c.h.b16 %v2405
    %v2766 = vunpack.c.l.b16 %v2406
    %v2767 = vunpack.c.h.b16 %v2406
    %v2768 = vunpack.c.l.b16 %v2407
    %v2769 = vunpack.c.h.b16 %v2407
    %v2770 = vunpack.c.l.b16 %v2408
    %v2771 = vunpack.c.h.b16 %v2408
    %v2772 = vunpack.c.l.b16 %v2409
    %v2773 = vunpack.c.h.b16 %v2409
    %v2774 = vunpack.c.l.b16 %v2410
    %v2775 = vunpack.c.h.b16 %v2410
    %v2776 = vunpack.c.l.b16 %v2411
    %v2777 = vunpack.c.h.b16 %v2411
    %v2778 = vunpack.c.l.b16 %v2412
    %v2779 = vunpack.c.h.b16 %v2412
    %v2780 = vunpack.c.l.b16 %v2413
    %v2781 = vunpack.c.h.b16 %v2413
    %v2782 = vunpack.c.l.b16 %v2414
    %v2783 = vunpack.c.h.b16 %v2414
    %v2784 = vunpack.c.l.b16 %v2415
    %v2785 = vunpack.c.h.b16 %v2415
    %v2786 = vunpack.c.l.b16 %v2416
    %v2787 = vunpack.c.h.b16 %v2416
    %v2788 = vunpack.c.l.b16 %v2417
    %v2789 = vunpack.c.h.b16 %v2417
    %v2790 = vunpack.c.l.b16 %v2418
    %v2791 = vunpack.c.h.b16 %v2418
    %v2792 = vunpack.c.l.b16 %v2419
    %v2793 = vunpack.c.h.b16 %v2419
    %v2794 = vunpack.c.l.b16 %v2420
    %v2795 = vunpack.c.h.b16 %v2420
    %v2796 = vunpack.c.l.b16 %v2421
    %v2797 = vunpack.c.h.b16 %v2421
    %v2798 = vunpack.c.l.b16 %v2422
    %v2799 = vunpack.c.h.b16 %v2422
    %v2800 = vunpack.c.l.b16 %v2423
    %v2801 = vunpack.c.h.b16 %v2423
    %v2802 = vunpack.c.l.b16 %v2424
    %v2803 = vunpack.c.h.b16 %v2424
    %v2804 = vunpack.c.l.b16 %v2425
    %v2805 = vunpack.c.h.b16 %v2425
    %v2806 = vunpack.c.l.b16 %v2426
    %v2807 = vunpack.c.h.b16 %v2426
    %v2808 = vunpack.c.l.b16 %v2427
    %v2809 = vunpack.c.h.b16 %v2427
    %v2810 = vunpack.c.l.b16 %v2428
    %v2811 = vunpack.c.h.b16 %v2428
    %v2812 = vunpack.c.l.b16 %v2429
    %v2813 = vunpack.c.h.b16 %v2429
    %v2814 = vpack.c.b16 %v2562, %v2558
    %v2815 = vpack.c.b16 %v2563, %v2559
    %v2816 = vpack.c.b16 %v2564, %v2560
    %v2817 = vpack.c.b16 %v2565, %v2561
    %v2818 = vpack.c.b16 %v2570, %v2566
    %v2819 = vpack.c.b16 %v2571, %v2567
    %v2820 = vpack.c.b16 %v2572, %v2568
    %v2821 = vpack.c.b16 %v2573, %v2569
    %v2822 = vpack.c.b16 %v2578, %v2574
    %v2823 = vpack.c.b16 %v2579, %v2575
    %v2824 = vpack.c.b16 %v2580, %v2576
    %v2825 = vpack.c.b16 %v2581, %v2577
    %v2826 = vpack.c.b16 %v2586, %v2582
    %v2827 = vpack.c.b16 %v2587, %v2583
    %v2828 = vpack.c.b16 %v2588, %v2584
    %v2829 = vpack.c.b16 %v2589, %v2585
    %v2830 = vpack.c.b16 %v2594, %v2590
    %v2831 = vpack.c.b16 %v2595, %v2591
    %v2832 = vpack.c.b16 %v2596, %v2592
    %v2833 = vpack.c.b16 %v2597, %v2593
    %v2834 = vpack.c.b16 %v2602, %v2598
    %v2835 = vpack.c.b16 %v2603, %v2599
    %v2836 = vpack.c.b16 %v2604, %v2600
    %v2837 = vpack.c.b16 %v2605, %v2601
    %v2838 = vpack.c.b16 %v2610, %v2606
    %v2839 = vpack.c.b16 %v2611, %v2607
    %v2840 = vpack.c.b16 %v2612, %v2608
    %v2841 = vpack.c.b16 %v2613, %v2609
    %v2842 = vpack.c.b16 %v2618, %v2614
    %v2843 = vpack.c.b16 %v2619, %v2615
    %v2844 = vpack.c.b16 %v2620, %v2616
    %v2845 = vpack.c.b16 %v2621, %v2617
    %v2846 = vpack.c.b16 %v2626, %v2622
    %v2847 = vpack.c.b16 %v2627, %v2623
    %v2848 = vpack.c.b16 %v2628, %v2624
    %v2849 = vpack.c.b16 %v2629, %v2625
    %v2850 = vpack.c.b16 %v2634, %v2630
    %v2851 = vpack.c.b16 %v2635, %v2631
    %v2852 = vpack.c.b16 %v2636, %v2632
    %v2853 = vpack.c.b16 %v2637, %v2633
    %v2854 = vpack.c.b16 %v2642, %v2638
    %v2855 = vpack.c.b16 %v2643, %v2639
    %v2856 = vpack.c.b16 %v2644, %v2640
    %v2857 = vpack.c.b16 %v2645, %v2641
    %v2858 = vpack.c.b16 %v2650, %v2646
    %v2859 = vpack.c.b16 %v2651, %v2647
    %v2860 = vpack.c.b16 %v2652, %v2648
    %v2861 = vpack.c.b16 %v2653, %v2649
    %v2862 = vpack.c.b16 %v2658, %v2654
    %v2863 = vpack.c.b16 %v2659, %v2655
    %v2864 = vpack.c.b16 %v2660, %v2656
    %v2865 = vpack.c.b16 %v2661, %v2657
    %v2866 = vpack.c.b16 %v2666, %v2662
    %v2867 = vpack.c.b16 %v2667, %v2663
    %v2868 = vpack.c.b16 %v2668, %v2664
    %v2869 = vpack.c.b16 %v2669, %v2665
    %v2870 = vpack.c.b16 %v2674, %v2670
    %v2871 = vpack.c.b16 %v2675, %v2671
    %v2872 = vpack.c.b16 %v2676, %v2672
    %v2873 = vpack.c.b16 %v2677, %v2673
    %v2874 = vpack.c.b16 %v2682, %v2678
    %v2875 = vpack.c.b16 %v2683, %v2679
    %v2876 = vpack.c.b16 %v2684, %v2680
    %v2877 = vpack.c.b16 %v2685, %v2681
    %v2878 = vpack.c.b16 %v2690, %v2686
    %v2879 = vpack.c.b16 %v2691, %v2687
    %v2880 = vpack.c.b16 %v2692, %v2688
    %v2881 = vpack.c.b16 %v2693, %v2689
    %v2882 = vpack.c.b16 %v2698, %v2694
    %v2883 = vpack.c.b16 %v2699, %v2695
    %v2884 = vpack.c.b16 %v2700, %v2696
    %v2885 = vpack.c.b16 %v2701, %v2697
    %v2886 = vpack.c.b16 %v2706, %v2702
    %v2887 = vpack.c.b16 %v2707, %v2703
    %v2888 = vpack.c.b16 %v2708, %v2704
    %v2889 = vpack.c.b16 %v2709, %v2705
    %v2890 = vpack.c.b16 %v2714, %v2710
    %v2891 = vpack.c.b16 %v2715, %v2711
    %v2892 = vpack.c.b16 %v2716, %v2712
    %v2893 = vpack.c.b16 %v2717, %v2713
    %v2894 = vpack.c.b16 %v2722, %v2718
    %v2895 = vpack.c.b16 %v2723, %v2719
    %v2896 = vpack.c.b16 %v2724, %v2720
    %v2897 = vpack.c.b16 %v2725, %v2721
    %v2898 = vpack.c.b16 %v2730, %v2726
    %v2899 = vpack.c.b16 %v2731, %v2727
    %v2900 = vpack.c.b16 %v2732, %v2728
    %v2901 = vpack.c.b16 %v2733, %v2729
    %v2902 = vpack.c.b16 %v2738, %v2734
    %v2903 = vpack.c.b16 %v2739, %v2735
    %v2904 = vpack.c.b16 %v2740, %v2736
    %v2905 = vpack.c.b16 %v2741, %v2737
    %v2906 = vpack.c.b16 %v2746, %v2742
    %v2907 = vpack.c.b16 %v2747, %v2743
    %v2908 = vpack.c.b16 %v2748, %v2744
    %v2909 = vpack.c.b16 %v2749, %v2745
    %v2910 = vpack.c.b16 %v2754, %v2750
    %v2911 = vpack.c.b16 %v2755, %v2751
    %v2912 = vpack.c.b16 %v2756, %v2752
    %v2913 = vpack.c.b16 %v2757, %v2753
    %v2914 = vpack.c.b16 %v2762, %v2758
    %v2915 = vpack.c.b16 %v2763, %v2759
    %v2916 = vpack.c.b16 %v2764, %v2760
    %v2917 = vpack.c.b16 %v2765, %v2761
    %v2918 = vpack.c.b16 %v2770, %v2766
    %v2919 = vpack.c.b16 %v2771, %v2767
    %v2920 = vpack.c.b16 %v2772, %v2768
    %v2921 = vpack.c.b16 %v2773, %v2769
    %v2922 = vpack.c.b16 %v2778, %v2774
    %v2923 = vpack.c.b16 %v2779, %v2775
    %v2924 = vpack.c.b16 %v2780, %v2776
    %v2925 = vpack.c.b16 %v2781, %v2777
    %v2926 = vpack.c.b16 %v2786, %v2782
    %v2927 = vpack.c.b16 %v2787, %v2783
    %v2928 = vpack.c.b16 %v2788, %v2784
    %v2929 = vpack.c.b16 %v2789, %v2785
    %v2930 = vpack.c.b16 %v2794, %v2790
    %v2931 = vpack.c.b16 %v2795, %v2791
    %v2932 = vpack.c.b16 %v2796, %v2792
    %v2933 = vpack.c.b16 %v2797, %v2793
    %v2934 = vpack.c.b16 %v2802, %v2798
    %v2935 = vpack.c.b16 %v2803, %v2799
    %v2936 = vpack.c.b16 %v2804, %v2800
    %v2937 = vpack.c.b16 %v2805, %v2801
    %v2938 = vpack.c.b16 %v2810, %v2806
    %v2939 = vpack.c.b16 %v2811, %v2807
    %v2940 = vpack.c.b16 %v2812, %v2808
    %v2941 = vpack.c.b16 %v2813, %v2809
    %3070 = vmatprep.subr.bf16.mxu0 %v2815
    %3071 = vmatpush1.bf16.msra.mxu0 %v2814
    %3072 = vmatprep.subr.bf16.mxu0 %v2819
    %3073 = vmatpush1.bf16.msra.mxu0 %v2818
    %3074 = vmatprep.subr.bf16.mxu0 %v2823
    %3075 = vmatpush1.bf16.msra.mxu0 %v2822
    %3076 = vmatprep.subr.bf16.mxu0 %v2827
    %3077 = vmatpush1.bf16.msra.mxu0 %v2826
    %3078 = vmatprep.subr.bf16.mxu0 %v2831
    %3079 = vmatpush1.bf16.msra.mxu0 %v2830
    %3080 = vmatprep.subr.bf16.mxu0 %v2835
    %3081 = vmatpush1.bf16.msra.mxu0 %v2834
    %3082 = vmatprep.subr.bf16.mxu0 %v2839
    %3083 = vmatpush1.bf16.msra.mxu0 %v2838
    %3084 = vmatprep.subr.bf16.mxu0 %v2843
    %3085 = vmatpush1.bf16.msra.mxu0 %v2842
    %3086 = vmatprep.subr.bf16.mxu0 %v2847
    %3087 = vmatpush1.bf16.msra.mxu0 %v2846
    %3088 = vmatprep.subr.bf16.mxu0 %v2851
    %3089 = vmatpush1.bf16.msra.mxu0 %v2850
    %3090 = vmatprep.subr.bf16.mxu0 %v2855
    %3091 = vmatpush1.bf16.msra.mxu0 %v2854
    %3092 = vmatprep.subr.bf16.mxu0 %v2859
    %3093 = vmatpush1.bf16.msra.mxu0 %v2858
    %3094 = vmatprep.subr.bf16.mxu0 %v2863
    %3095 = vmatpush1.bf16.msra.mxu0 %v2862
    %3096 = vmatprep.subr.bf16.mxu0 %v2867
    %3097 = vmatpush1.bf16.msra.mxu0 %v2866
    %3098 = vmatprep.subr.bf16.mxu0 %v2871
    %3099 = vmatpush1.bf16.msra.mxu0 %v2870
    %3100 = vmatprep.subr.bf16.mxu0 %v2875
    %3101 = vmatpush1.bf16.msra.mxu0 %v2874
    %3102 = vmatprep.mubr.bf16.mxu0 %v2295
    %3103 = vmatmul.mubr.bf16.gmra.mrb[0].mxu0 %v2294
    %v3104 = vpop.f32.mrb[0].mxu0
    %v3105 = vadd.f32 0.0, %v3104
    %v3106 = vpop.f32.mrb[0].mxu0
    %v3107 = vadd.f32 0.0, %v3106
    %v3108 = vpop.f32.mrb[0].mxu0
    %v3109 = vadd.f32 0.0, %v3108
    %v3110 = vpop.f32.mrb[0].mxu0
    %v3111 = vadd.f32 0.0, %v3110
    %3112 = vmatprep.mubr.bf16.mxu0 %v2299
    %3113 = vmatmul.mubr.bf16.gmra.mrb[0].mxu0 %v2298
    %v3114 = vpop.f32.mrb[0].mxu0
    %v3115 = vadd.f32 0.0, %v3114
    %v3116 = vpop.f32.mrb[0].mxu0
    %v3117 = vadd.f32 0.0, %v3116
    %v3118 = vpop.f32.mrb[0].mxu0
    %v3119 = vpop.f32.mrb[0].mxu0
    %3120 = vdwg.mxu0
    %3121 = vmatprep.subr.bf16.mxu0 %v2879
    %3122 = vmatpush1.bf16.msra.mxu0 %v2878
    %3123 = vmatprep.subr.bf16.mxu0 %v2883
    %3124 = vmatpush1.bf16.msra.mxu0 %v2882
    %3125 = vmatprep.subr.bf16.mxu0 %v2887
    %3126 = vmatpush1.bf16.msra.mxu0 %v2886
    %3127 = vmatprep.subr.bf16.mxu0 %v2891
    %3128 = vmatpush1.bf16.msra.mxu0 %v2890
    %3129 = vmatprep.subr.bf16.mxu0 %v2895
    %3130 = vmatpush1.bf16.msra.mxu0 %v2894
    %3131 = vmatprep.subr.bf16.mxu0 %v2899
    %3132 = vmatpush1.bf16.msra.mxu0 %v2898
    %3133 = vmatprep.subr.bf16.mxu0 %v2903
    %3134 = vmatpush1.bf16.msra.mxu0 %v2902
    %3135 = vmatprep.subr.bf16.mxu0 %v2907
    %3136 = vmatpush1.bf16.msra.mxu0 %v2906
    %3137 = vmatprep.subr.bf16.mxu0 %v2911
    %3138 = vmatpush1.bf16.msra.mxu0 %v2910
    %3139 = vmatprep.subr.bf16.mxu0 %v2915
    %3140 = vmatpush1.bf16.msra.mxu0 %v2914
    %3141 = vmatprep.subr.bf16.mxu0 %v2919
    %3142 = vmatpush1.bf16.msra.mxu0 %v2918
    %3143 = vmatprep.subr.bf16.mxu0 %v2923
    %3144 = vmatpush1.bf16.msra.mxu0 %v2922
    %3145 = vmatprep.subr.bf16.mxu0 %v2927
    %3146 = vmatpush1.bf16.msra.mxu0 %v2926
    %3147 = vmatprep.subr.bf16.mxu0 %v2931
    %3148 = vmatpush1.bf16.msra.mxu0 %v2930
    %3149 = vmatprep.subr.bf16.mxu0 %v2935
    %3150 = vmatpush1.bf16.msra.mxu0 %v2934
    %3151 = vmatprep.subr.bf16.mxu0 %v2939
    %3152 = vmatpush1.bf16.msra.mxu0 %v2938
    %3153 = vmatprep.mubr.bf16.mxu0 %v2297
    %3154 = vmatmul.mubr.bf16.gmra.mrb[0].mxu0 %v2296
    %v3155 = vpop.f32.mrb[0].mxu0
    %v3156 = vadd.f32 %v3105, %v3155
    %v3157 = vpop.f32.mrb[0].mxu0
    %v3158 = vadd.f32 %v3107, %v3157
    %v3159 = vpop.f32.mrb[0].mxu0
    %v3160 = vadd.f32 %v3109, %v3159
    %v3161 = vpop.f32.mrb[0].mxu0
    %v3162 = vadd.f32 %v3111, %v3161
    %3163 = vmatprep.mubr.bf16.mxu0 %v2301
    %3164 = vmatmul.mubr.bf16.gmra.mrb[0].mxu0 %v2300
    %v3165 = vpop.f32.mrb[0].mxu0
    %v3166 = vadd.f32 %v3115, %v3165
    %v3167 = vpop.f32.mrb[0].mxu0
    %v3168 = vadd.f32 %v3117, %v3167
    %v3169 = vpop.f32.mrb[0].mxu0
    %v3170 = vpop.f32.mrb[0].mxu0
    %3171 = vdwg.mxu0
    %3172 = vmatprep.subr.bf16.mxu0 %v2817
    %3173 = vmatpush1.bf16.msra.mxu0 %v2816
    %3174 = vmatprep.subr.bf16.mxu0 %v2821
    %3175 = vmatpush1.bf16.msra.mxu0 %v2820
    %3176 = vmatprep.subr.bf16.mxu0 %v2825
    %3177 = vmatpush1.bf16.msra.mxu0 %v2824
    %3178 = vmatprep.subr.bf16.mxu0 %v2829
    %3179 = vmatpush1.bf16.msra.mxu0 %v2828
    %3180 = vmatprep.subr.bf16.mxu0 %v2833
    %3181 = vmatpush1.bf16.msra.mxu0 %v2832
    %3182 = vmatprep.subr.bf16.mxu0 %v2837
    %3183 = vmatpush1.bf16.msra.mxu0 %v2836
    %3184 = vmatprep.subr.bf16.mxu0 %v2841
    %3185 = vmatpush1.bf16.msra.mxu0 %v2840
    %3186 = vmatprep.subr.bf16.mxu0 %v2845
    %3187 = vmatpush1.bf16.msra.mxu0 %v2844
    %3188 = vmatprep.subr.bf16.mxu0 %v2849
    %3189 = vmatpush1.bf16.msra.mxu0 %v2848
    %3190 = vmatprep.subr.bf16.mxu0 %v2853
    %3191 = vmatpush1.bf16.msra.mxu0 %v2852
    %3192 = vmatprep.subr.bf16.mxu0 %v2857
    %3193 = vmatpush1.bf16.msra.mxu0 %v2856
    %3194 = vmatprep.subr.bf16.mxu0 %v2861
    %3195 = vmatpush1.bf16.msra.mxu0 %v2860
    %3196 = vmatprep.subr.bf16.mxu0 %v2865
    %3197 = vmatpush1.bf16.msra.mxu0 %v2864
    %3198 = vmatprep.subr.bf16.mxu0 %v2869
    %3199 = vmatpush1.bf16.msra.mxu0 %v2868
    %3200 = vmatprep.subr.bf16.mxu0 %v2873
    %3201 = vmatpush1.bf16.msra.mxu0 %v2872
    %3202 = vmatprep.subr.bf16.mxu0 %v2877
    %3203 = vmatpush1.bf16.msra.mxu0 %v2876
    %3204 = vmatprep.mubr.bf16.mxu0 %v2295
    %3205 = vmatmul.mubr.bf16.gmra.mrb[0].mxu0 %v2294
    %v3206 = vpop.f32.mrb[0].mxu0
    %v3207 = vadd.f32 0.0, %v3206
    %v3208 = vpop.f32.mrb[0].mxu0
    %v3209 = vadd.f32 0.0, %v3208
    %v3210 = vpop.f32.mrb[0].mxu0
    %v3211 = vadd.f32 0.0, %v3210
    %v3212 = vpop.f32.mrb[0].mxu0
    %v3213 = vadd.f32 0.0, %v3212
    %3214 = vmatprep.mubr.bf16.mxu0 %v2299
    %3215 = vmatmul.mubr.bf16.gmra.mrb[0].mxu0 %v2298
    %v3216 = vpop.f32.mrb[0].mxu0
    %v3217 = vadd.f32 0.0, %v3216
    %v3218 = vpop.f32.mrb[0].mxu0
    %v3219 = vadd.f32 0.0, %v3218
    %v3220 = vpop.f32.mrb[0].mxu0
    %v3221 = vpop.f32.mrb[0].mxu0
    %3222 = vdwg.mxu0
    %3223 = vmatprep.subr.bf16.mxu0 %v2881
    %3224 = vmatpush1.bf16.msra.mxu0 %v2880
    %3225 = vmatprep.subr.bf16.mxu0 %v2885
    %3226 = vmatpush1.bf16.msra.mxu0 %v2884
    %3227 = vmatprep.subr.bf16.mxu0 %v2889
    %3228 = vmatpush1.bf16.msra.mxu0 %v2888
    %3229 = vmatprep.subr.bf16.mxu0 %v2893
    %3230 = vmatpush1.bf16.msra.mxu0 %v2892
    %3231 = vmatprep.subr.bf16.mxu0 %v2897
    %3232 = vmatpush1.bf16.msra.mxu0 %v2896
    %3233 = vmatprep.subr.bf16.mxu0 %v2901
    %3234 = vmatpush1.bf16.msra.mxu0 %v2900
    %3235 = vmatprep.subr.bf16.mxu0 %v2905
    %3236 = vmatpush1.bf16.msra.mxu0 %v2904
    %3237 = vmatprep.subr.bf16.mxu0 %v2909
    %3238 = vmatpush1.bf16.msra.mxu0 %v2908
    %3239 = vmatprep.subr.bf16.mxu0 %v2913
    %3240 = vmatpush1.bf16.msra.mxu0 %v2912
    %3241 = vmatprep.subr.bf16.mxu0 %v2917
    %3242 = vmatpush1.bf16.msra.mxu0 %v2916
    %3243 = vmatprep.subr.bf16.mxu0 %v2921
    %3244 = vmatpush1.bf16.msra.mxu0 %v2920
    %3245 = vmatprep.subr.bf16.mxu0 %v2925
    %3246 = vmatpush1.bf16.msra.mxu0 %v2924
    %3247 = vmatprep.subr.bf16.mxu0 %v2929
    %3248 = vmatpush1.bf16.msra.mxu0 %v2928
    %3249 = vmatprep.subr.bf16.mxu0 %v2933
    %3250 = vmatpush1.bf16.msra.mxu0 %v2932
    %3251 = vmatprep.subr.bf16.mxu0 %v2937
    %3252 = vmatpush1.bf16.msra.mxu0 %v2936
    %3253 = vmatprep.subr.bf16.mxu0 %v2941
    %3254 = vmatpush1.bf16.msra.mxu0 %v2940
    %3255 = vmatprep.mubr.bf16.mxu0 %v2297
    %3256 = vmatmul.mubr.bf16.gmra.mrb[0].mxu0 %v2296
    %v3257 = vpop.f32.mrb[0].mxu0
    %v3258 = vadd.f32 %v3207, %v3257
    %v3259 = vpop.f32.mrb[0].mxu0
    %v3260 = vadd.f32 %v3209, %v3259
    %v3261 = vpop.f32.mrb[0].mxu0
    %v3262 = vadd.f32 %v3211, %v3261
    %v3263 = vpop.f32.mrb[0].mxu0
    %v3264 = vadd.f32 %v3213, %v3263
    %3265 = vmatprep.mubr.bf16.mxu0 %v2301
    %3266 = vmatmul.mubr.bf16.gmra.mrb[0].mxu0 %v2300
    %v3267 = vpop.f32.mrb[0].mxu0
    %v3268 = vadd.f32 %v3217, %v3267
    %v3269 = vpop.f32.mrb[0].mxu0
    %v3270 = vadd.f32 %v3219, %v3269
    %v3271 = vpop.f32.mrb[0].mxu0
    %v3272 = vpop.f32.mrb[0].mxu0
    %3273 = vdwg.mxu0
    %3274 = vst [vmem:[#allocation14] sm:$0xff] %v3156
    %3275 = vst [vmem:[#allocation14 + $0x8] sm:$0xff] %v3158
    %3276 = vst [vmem:[#allocation14 + $0x10] sm:$0xff] %v3258
    %3277 = vst [vmem:[#allocation14 + $0x18] sm:$0xff] %v3260
    %3278 = vst [vmem:[#allocation14 + $0x20] sm:$0xff] %v3160
    %3279 = vst [vmem:[#allocation14 + $0x28] sm:$0xff] %v3162
    %3280 = vst [vmem:[#allocation14 + $0x30] sm:$0xff] %v3262
    %3281 = vst [vmem:[#allocation14 + $0x38] sm:$0xff] %v3264
    %v3286 = vcombine.low %v3166, %v3168
    %v3287 = vcombine.low %v3268, %v3270
    %v3289 = vunpack.c.l.s4 1966171168
    %v3290 = vunpack.c.0.s8 %v3289
    %v3291 = vlaneseq
    %v3292 = vshrl.u32 %v3291, 7
    %v3293 = vsub.s32 %v3290, %v3292
    %v3294 = vrot.slane %v3286, %v3293
    %v3296 = vunpack.c.l.s4 1966171168
    %v3297 = vunpack.c.0.s8 %v3296
    %v3298 = vlaneseq
    %v3299 = vshrl.u32 %v3298, 7
    %v3300 = vsub.s32 %v3297, %v3299
    %v3301 = vrot.slane %v3287, %v3300
    %v3302 = vcombine.low %v3294, %v3301
    %v3303 = vcombine.high %v3294, %v3301
    %v3305 = vunpack.c.l.s4 1966171168
    %v3306 = vunpack.c.0.s8 %v3305
    %v3307 = vlaneseq
    %v3308 = vshrl.u32 %v3307, 7
    %v3309 = vsub.s32 %v3306, %v3308
    %v3310 = vrot.slane %v3302, %v3309
    %v3312 = vunpack.c.l.s4 1966171168
    %v3313 = vunpack.c.0.s8 %v3312
    %v3314 = vlaneseq
    %v3315 = vshrl.u32 %v3314, 7
    %v3316 = vsub.s32 %v3313, %v3315
    %v3317 = vrot.slane %v3303, %v3316
    %v3318 = vlaneseq
    %v3319 = vshrl.u32 %v3318, 7
    %v3320 = vsub.s32 0, %v3319
    %v3321 = vrot.slane %v3310, %v3320
    %v3322 = vlaneseq
    %v3323 = vshrl.u32 %v3322, 7
    %v3324 = vsub.s32 1, %v3323
    %v3325 = vrot.slane %v3310, %v3324
    %v3326 = vlaneseq
    %v3327 = vshrl.u32 %v3326, 7
    %v3328 = vsub.s32 2, %v3327
    %v3329 = vrot.slane %v3310, %v3328
    %v3330 = vlaneseq
    %v3331 = vshrl.u32 %v3330, 7
    %v3332 = vsub.s32 3, %v3331
    %v3333 = vrot.slane %v3310, %v3332
    %v3334 = vlaneseq
    %v3335 = vshrl.u32 %v3334, 7
    %v3336 = vsub.s32 0, %v3335
    %v3337 = vrot.slane %v3317, %v3336
    %v3338 = vlaneseq
    %v3339 = vshrl.u32 %v3338, 7
    %v3340 = vsub.s32 1, %v3339
    %v3341 = vrot.slane %v3317, %v3340
    %v3342 = vlaneseq
    %v3343 = vshrl.u32 %v3342, 7
    %v3344 = vsub.s32 2, %v3343
    %v3345 = vrot.slane %v3317, %v3344
    %v3346 = vlaneseq
    %v3347 = vshrl.u32 %v3346, 7
    %v3348 = vsub.s32 3, %v3347
    %v3349 = vrot.slane %v3317, %v3348
    %v3358 = vsub.f32 %v2084, %v3321
    %v3359 = vsub.f32 %v2086, %v3325
    %v3360 = vsub.f32 %v2170, %v3329
    %v3361 = vsub.f32 %v2172, %v3333
    %v3362 = vsub.f32 %v2088, %v3337
    %v3363 = vsub.f32 %v2090, %v3341
    %v3364 = vsub.f32 %v2174, %v3345
    %v3365 = vsub.f32 %v2176, %v3349
    %3366 = vst [vmem:[#allocation13] sm:$0xff] %v3358
    %3367 = vst [vmem:[#allocation13 + $0x8] sm:$0xff] %v3359
    %3368 = vst [vmem:[#allocation13 + $0x10] sm:$0xff] %v3360
    %3369 = vst [vmem:[#allocation13 + $0x18] sm:$0xff] %v3361
    %3370 = vst [vmem:[#allocation13 + $0x20] sm:$0xff] %v3362
    %3371 = vst [vmem:[#allocation13 + $0x28] sm:$0xff] %v3363
    %3372 = vst [vmem:[#allocation13 + $0x30] sm:$0xff] %v3364
    %3373 = vst [vmem:[#allocation13 + $0x38] sm:$0xff] %v3365
    // Predicated region
    $region50: #{tpu_custom_call.1} parent=1 // pred_check
      _
    $region51: #{tpu_custom_call.1} parent=1 // pred_check_branch
      %3375 = sbr.rel (0) target = $region53
    $region52: #{tpu_custom_call.1} parent=1 // pred_region
      %s3377 = ssub.s32 1024, 1024
      %3378 = vsyncadd [#allocation4], %s3377
      %s3379 = sshll.u32 [#allocation13], 4
      %s3380 = int_to_ptr.vmem [resolvable:$true] %s3379
      %3385 = dma.vmem_to_hbm [thread:$0]  %s3380, 1024, %s6, [#allocation4], 512, 512, 32
    $region53: #{tpu_custom_call.1} parent=1 // pred_fallthru
      _
    // Predicated region
    $region54: #{tpu_custom_call.1} parent=1 // pred_check
      _
    $region55: #{tpu_custom_call.1} parent=1 // pred_check_branch
      %3387 = sbr.rel (0) target = $region57
    $region56: #{tpu_custom_call.1} parent=1 // pred_region
      %s3389 = ssub.s32 1024, 1024
      %3390 = vsyncadd [#allocation15], %s3389
      %s3391 = sshll.u32 [#allocation14], 4
      %s3392 = int_to_ptr.vmem [resolvable:$true] %s3391
      %3397 = dma.vmem_to_hbm [thread:$0]  %s3392, 1024, %s7, [#allocation15], 512, 512, 32
    $region57: #{tpu_custom_call.1} parent=1 // pred_fallthru
      _
    // Predicated region
    $region58: #{tpu_custom_call.1} parent=1 // pred_check
      _
    $region59: #{tpu_custom_call.1} parent=1 // pred_check_branch
      %3399 = sbr.rel (0) target = $region61
    $region60: #{tpu_custom_call.1} parent=1 // pred_region
      %3400 = dma.done [#allocation4], 1024
    $region61: #{tpu_custom_call.1} parent=1 // pred_fallthru
      _
    // Predicated region
    $region62: #{tpu_custom_call.1} parent=1 // pred_check
      _
    $region63: #{tpu_custom_call.1} parent=1 // pred_check_branch
      %3402 = sbr.rel (0) target = $region65
    $region64: #{tpu_custom_call.1} parent=1 // pred_region
      %3403 = dma.done [#allocation15], 1024
    $region65: #{tpu_custom_call.1} parent=1 // pred_fallthru
      _
    %3404 = vsyncpa [#allocation3], 1
    %3405 = vsyncpa [#allocation6], 1
    %3406 = vsyncpa [#allocation9], 1
    %3407 = vsyncpa [#allocation12], 1
    %3408 = vsyncpa [#allocation4], 1
    %3409 = vsyncpa [#allocation15], 1

// kernel: tpu_custom_call.1
$region0: #{tpu_custom_call.1}
  #allocation0 [shape = 'u32[]', space=smem, size = 0x4, offset = 0x4, fixed_abs, tag = 'smem constant byte address 0x4 - core index']
  #allocation1 [shape = 'u32[144,128]{1,0:T(1,128)}', space=vmem, size = 0x12000, scoped, tag = 'internal scratch']
  %s0 = inlined_call_operand.hbm [shape: f32[2,8,512], index: 0, kind: input, shape index: {}]
  %s1 = inlined_call_operand.hbm [shape: f32[2,8,512], index: 1, kind: input, shape index: {}]
  %s2 = inlined_call_operand.hbm [shape: f32[2,8,512], index: 2, kind: input, shape index: {}]
  %s3 = inlined_call_operand.hbm [shape: bf16[512,512], index: 3, kind: input, shape index: {}]
  %s4 = inlined_call_operand.hbm [shape: bf16[512,512], index: 4, kind: input, shape index: {}]
  %s5 = inlined_call_operand.hbm [shape: bf16[512,512], index: 5, kind: input, shape index: {}]
  %s6 = inlined_call_operand.hbm [shape: f32[2,8,512], index: 6, kind: output, shape index: {0}]
  %s7 = inlined_call_operand.hbm [shape: f32[2,8,512], index: 7, kind: output, shape index: {1}]
  %8 = xla_tuple %s6, %s7
  %s9 = sld [smem:[#allocation0]]
  $region66: #{tpu_custom_call.1} parent=0
    _
  %s11 = ssub.s32 1, %s9
  %s12 = scalar_select 0, %s11, %s9
  $region1: #{tpu_custom_call.1} parent=0
    #allocation2 [shape = 'u8[32768]{0}', space=vmem, size = 0x8000, scoped, tag = 'input window, operand 0, single buffered']
    #allocation3 [shape = 's32[1]{0}', space=sflag, size = 0x4, scoped, tag = 'scoped memory for tpu_custom_call.1']
    #allocation4 [shape = 's32[1]{0}', space=sflag, size = 0x4, scoped, tag = 'scoped memory for tpu_custom_call.1']
    #allocation5 [shape = 'u8[32768]{0}', space=vmem, size = 0x8000, scoped, tag = 'input window, operand 1, single buffered']
    #allocation6 [shape = 's32[1]{0}', space=sflag, size = 0x4, scoped, tag = 'scoped memory for tpu_custom_call.1']
    #allocation7 [shape = 'u8[32768]{0}', space=vmem, size = 0x8000, scoped, tag = 'input window, operand 2, single buffered']
    #allocation8 [shape = 'u8[524288]{0}', space=vmem, size = 0x80000, scoped, tag = 'input window, operand 3, single buffered']
    #allocation9 [shape = 's32[1]{0}', space=sflag, size = 0x4, scoped, tag = 'scoped memory for tpu_custom_call.1']
    #allocation10 [shape = 'u8[524288]{0}', space=vmem, size = 0x80000, scoped, tag = 'input window, operand 4, single buffered']
    #allocation11 [shape = 'u8[524288]{0}', space=vmem, size = 0x80000, scoped, tag = 'input window, operand 5, single buffered']
    #allocation12 [shape = 's32[1]{0}', space=sflag, size = 0x4, scoped, tag = 'scoped memory for tpu_custom_call.1']
    #allocation13 [shape = 'u8[32768]{0}', space=vmem, size = 0x8000, scoped, tag = 'output window, operand 0, single buffered']
    #allocation14 [shape = 'u8[32768]{0}', space=vmem, size = 0x8000, scoped, tag = 'output window, operand 1, single buffered']
    #allocation15 [shape = 's32[1]{0}', space=sflag, size = 0x4, scoped, tag = 'scoped memory for tpu_custom_call.1']
    %13 = vsyncpa [#allocation3], 0
    %14 = vsyncpa [#allocation6], 0
    %15 = vsyncpa [#allocation9], 0
    %16 = vsyncpa [#allocation12], 0
    %17 = vsyncpa [#allocation4], 0
    %18 = vsyncpa [#allocation15], 0
    // Predicated region
    $region2: #{tpu_custom_call.1} parent=1 // pred_check
      _
    $region3: #{tpu_custom_call.1} parent=1 // pred_check_branch
      %20 = sbr.rel (0) target = $region5
    $region4: #{tpu_custom_call.1} parent=1 // pred_region
      %s22 = ssub.s32 1024, 1024
      %23 = vsyncadd [#allocation3], %s22
      %s24 = sshll.u32 [#allocation2], 4
      %s25 = int_to_ptr.vmem [resolvable:$true] %s24
      %30 = dma.hbm_to_vmem [thread:$0]  %s0, 1024, %s25, [#allocation3], 512, 512, 32
    $region5: #{tpu_custom_call.1} parent=1 // pred_fallthru
      _
    // Predicated region
    $region6: #{tpu_custom_call.1} parent=1 // pred_check
      _
    $region7: #{tpu_custom_call.1} parent=1 // pred_check_branch
      %32 = sbr.rel (0) target = $region9
    $region8: #{tpu_custom_call.1} parent=1 // pred_region
      %s34 = ssub.s32 1024, 1024
      %35 = vsyncadd [#allocation6], %s34
      %s36 = sshll.u32 [#allocation5], 4
      %s37 = int_to_ptr.vmem [resolvable:$true] %s36
      %42 = dma.hbm_to_vmem [thread:$0]  %s1, 1024, %s37, [#allocation6], 512, 512, 32
    $region9: #{tpu_custom_call.1} parent=1 // pred_fallthru
      _
    // Predicated region
    $region10: #{tpu_custom_call.1} parent=1 // pred_check
      _
    $region11: #{tpu_custom_call.1} parent=1 // pred_check_branch
      %44 = sbr.rel (0) target = $region13
    $region12: #{tpu_custom_call.1} parent=1 // pred_region
      %s46 = ssub.s32 1024, 1024
      %47 = vsyncadd [#allocation6], %s46
      %s48 = sshll.u32 [#allocation7], 4
      %s49 = int_to_ptr.vmem [resolvable:$true] %s48
      %54 = dma.hbm_to_vmem [thread:$0]  %s2, 1024, %s49, [#allocation6], 512, 512, 32
    $region13: #{tpu_custom_call.1} parent=1 // pred_fallthru
      _
    // Predicated region
    $region14: #{tpu_custom_call.1} parent=1 // pred_check
      _
    $region15: #{tpu_custom_call.1} parent=1 // pred_check_branch
      %56 = sbr.rel (0) target = $region17
    $region16: #{tpu_custom_call.1} parent=1 // pred_region
      %s58 = ssub.s32 16384, 16384
      %59 = vsyncadd [#allocation9], %s58
      %s60 = sshll.u32 [#allocation8], 4
      %s61 = int_to_ptr.vmem [resolvable:$true] %s60
      %66 = dma.hbm_to_vmem [thread:$0]  %s3, 16384, %s61, [#allocation9], 256, 256, 16
    $region17: #{tpu_custom_call.1} parent=1 // pred_fallthru
      _
    // Predicated region
    $region18: #{tpu_custom_call.1} parent=1 // pred_check
      _
    $region19: #{tpu_custom_call.1} parent=1 // pred_check_branch
      %68 = sbr.rel (0) target = $region21
    $region20: #{tpu_custom_call.1} parent=1 // pred_region
      %s70 = ssub.s32 16384, 16384
      %71 = vsyncadd [#allocation9], %s70
      %s72 = sshll.u32 [#allocation10], 4
      %s73 = int_to_ptr.vmem [resolvable:$true] %s72
      %78 = dma.hbm_to_vmem [thread:$0]  %s4, 16384, %s73, [#allocation9], 256, 256, 16
    $region21: #{tpu_custom_call.1} parent=1 // pred_fallthru
      _
    // Predicated region
    $region22: #{tpu_custom_call.1} parent=1 // pred_check
      _
    $region23: #{tpu_custom_call.1} parent=1 // pred_check_branch
      %80 = sbr.rel (0) target = $region25
    $region24: #{tpu_custom_call.1} parent=1 // pred_region
      %s82 = ssub.s32 16384, 16384
      %83 = vsyncadd [#allocation12], %s82
      %s84 = sshll.u32 [#allocation11], 4
      %s85 = int_to_ptr.vmem [resolvable:$true] %s84
      %90 = dma.hbm_to_vmem [thread:$0]  %s5, 16384, %s85, [#allocation12], 256, 256, 16
    $region25: #{tpu_custom_call.1} parent=1 // pred_fallthru
      _
    // Predicated region
    $region26: #{tpu_custom_call.1} parent=1 // pred_check
      _
    $region27: #{tpu_custom_call.1} parent=1 // pred_check_branch
      %92 = sbr.rel (0) target = $region29
    $region28: #{tpu_custom_call.1} parent=1 // pred_region
      %93 = dma.done [#allocation3], 1024
    $region29: #{tpu_custom_call.1} parent=1 // pred_fallthru
      _
    // Predicated region
    $region30: #{tpu_custom_call.1} parent=1 // pred_check
      _
    $region31: #{tpu_custom_call.1} parent=1 // pred_check_branch
      %95 = sbr.rel (0) target = $region33
    $region32: #{tpu_custom_call.1} parent=1 // pred_region
      %96 = dma.done [#allocation6], 1024
    $region33: #{tpu_custom_call.1} parent=1 // pred_fallthru
      _
    // Predicated region
    $region34: #{tpu_custom_call.1} parent=1 // pred_check
      _
    $region35: #{tpu_custom_call.1} parent=1 // pred_check_branch
      %98 = sbr.rel (0) target = $region37
    $region36: #{tpu_custom_call.1} parent=1 // pred_region
      %99 = dma.done [#allocation6], 1024
    $region37: #{tpu_custom_call.1} parent=1 // pred_fallthru
      _
    // Predicated region
    $region38: #{tpu_custom_call.1} parent=1 // pred_check
      _
    $region39: #{tpu_custom_call.1} parent=1 // pred_check_branch
      %101 = sbr.rel (0) target = $region41
    $region40: #{tpu_custom_call.1} parent=1 // pred_region
      %102 = dma.done [#allocation9], 16384
    $region41: #{tpu_custom_call.1} parent=1 // pred_fallthru
      _
    // Predicated region
    $region42: #{tpu_custom_call.1} parent=1 // pred_check
      _
    $region43: #{tpu_custom_call.1} parent=1 // pred_check_branch
      %104 = sbr.rel (0) target = $region45
    $region44: #{tpu_custom_call.1} parent=1 // pred_region
      %105 = dma.done [#allocation9], 16384
    $region45: #{tpu_custom_call.1} parent=1 // pred_fallthru
      _
    // Predicated region
    $region46: #{tpu_custom_call.1} parent=1 // pred_check
      _
    $region47: #{tpu_custom_call.1} parent=1 // pred_check_branch
      %107 = sbr.rel (0) target = $region49
    $region48: #{tpu_custom_call.1} parent=1 // pred_region
      %108 = dma.done [#allocation12], 16384
    $region49: #{tpu_custom_call.1} parent=1 // pred_fallthru
      _
    %v109 = vld [vmem:[#allocation2] sm:$0xff]
    %v110 = vld [vmem:[#allocation2 + $0x8] sm:$0xff]
    %v111 = vld [vmem:[#allocation2 + $0x10] sm:$0xff]
    %v112 = vld [vmem:[#allocation2 + $0x18] sm:$0xff]
    %v113 = vld [vmem:[#allocation2 + $0x20] sm:$0xff]
    %v114 = vld [vmem:[#allocation2 + $0x28] sm:$0xff]
    %v115 = vld [vmem:[#allocation2 + $0x30] sm:$0xff]
    %v116 = vld [vmem:[#allocation2 + $0x38] sm:$0xff]
    %v117 = vld [vmem:[#allocation7] sm:$0xff]
    %v118 = vld [vmem:[#allocation7 + $0x8] sm:$0xff]
    %v119 = vld [vmem:[#allocation7 + $0x10] sm:$0xff]
    %v120 = vld [vmem:[#allocation7 + $0x18] sm:$0xff]
    %v121 = vld [vmem:[#allocation7 + $0x20] sm:$0xff]
    %v122 = vld [vmem:[#allocation7 + $0x28] sm:$0xff]
    %v123 = vld [vmem:[#allocation7 + $0x30] sm:$0xff]
    %v124 = vld [vmem:[#allocation7 + $0x38] sm:$0xff]
    %v125 = vld [vmem:[#allocation5] sm:$0xff]
    %v126 = vld [vmem:[#allocation5 + $0x8] sm:$0xff]
    %v127 = vld [vmem:[#allocation5 + $0x10] sm:$0xff]
    %v128 = vld [vmem:[#allocation5 + $0x18] sm:$0xff]
    %v129 = vld [vmem:[#allocation5 + $0x20] sm:$0xff]
    %v130 = vld [vmem:[#allocation5 + $0x28] sm:$0xff]
    %v131 = vld [vmem:[#allocation5 + $0x30] sm:$0xff]
    %v132 = vld [vmem:[#allocation5 + $0x38] sm:$0xff]
    %v133 = vrot.slane %v109, 4
    %v134 = vadd.f32 %v109, %v133
    %v135 = vrot.slane %v134, 2
    %v136 = vadd.f32 %v134, %v135
    %v137 = vrot.slane %v136, 1
    %v138 = vadd.f32 %v136, %v137
    %v139 = vrot.slane %v110, 4
    %v140 = vadd.f32 %v110, %v139
    %v141 = vrot.slane %v140, 2
    %v142 = vadd.f32 %v140, %v141
    %v143 = vrot.slane %v142, 1
    %v144 = vadd.f32 %v142, %v143
    %v145 = vrot.slane %v111, 4
    %v146 = vadd.f32 %v111, %v145
    %v147 = vrot.slane %v146, 2
    %v148 = vadd.f32 %v146, %v147
    %v149 = vrot.slane %v148, 1
    %v150 = vadd.f32 %v148, %v149
    %v151 = vrot.slane %v112, 4
    %v152 = vadd.f32 %v112, %v151
    %v153 = vrot.slane %v152, 2
    %v154 = vadd.f32 %v152, %v153
    %v155 = vrot.slane %v154, 1
    %v156 = vadd.f32 %v154, %v155
    %v157 = vrot.slane %v113, 4
    %v158 = vadd.f32 %v113, %v157
    %v159 = vrot.slane %v158, 2
    %v160 = vadd.f32 %v158, %v159
    %v161 = vrot.slane %v160, 1
    %v162 = vadd.f32 %v160, %v161
    %v163 = vrot.slane %v114, 4
    %v164 = vadd.f32 %v114, %v163
    %v165 = vrot.slane %v164, 2
    %v166 = vadd.f32 %v164, %v165
    %v167 = vrot.slane %v166, 1
    %v168 = vadd.f32 %v166, %v167
    %v169 = vrot.slane %v115, 4
    %v170 = vadd.f32 %v115, %v169
    %v171 = vrot.slane %v170, 2
    %v172 = vadd.f32 %v170, %v171
    %v173 = vrot.slane %v172, 1
    %v174 = vadd.f32 %v172, %v173
    %v175 = vrot.slane %v116, 4
    %v176 = vadd.f32 %v116, %v175
    %v177 = vrot.slane %v176, 2
    %v178 = vadd.f32 %v176, %v177
    %v179 = vrot.slane %v178, 1
    %v180 = vadd.f32 %v178, %v179
    %v181 = vrot.slane %v117, 4
    %v182 = vadd.f32 %v117, %v181
    %v183 = vrot.slane %v182, 2
    %v184 = vadd.f32 %v182, %v183
    %v185 = vrot.slane %v184, 1
    %v186 = vadd.f32 %v184, %v185
    %v187 = vrot.slane %v118, 4
    %v188 = vadd.f32 %v118, %v187
    %v189 = vrot.slane %v188, 2
    %v190 = vadd.f32 %v188, %v189
    %v191 = vrot.slane %v190, 1
    %v192 = vadd.f32 %v190, %v191
    %v193 = vrot.slane %v119, 4
    %v194 = vadd.f32 %v119, %v193
    %v195 = vrot.slane %v194, 2
    %v196 = vadd.f32 %v194, %v195
    %v197 = vrot.slane %v196, 1
    %v198 = vadd.f32 %v196, %v197
    %v199 = vrot.slane %v120, 4
    %v200 = vadd.f32 %v120, %v199
    %v201 = vrot.slane %v200, 2
    %v202 = vadd.f32 %v200, %v201
    %v203 = vrot.slane %v202, 1
    %v204 = vadd.f32 %v202, %v203
    %v205 = vrot.slane %v121, 4
    %v206 = vadd.f32 %v121, %v205
    %v207 = vrot.slane %v206, 2
    %v208 = vadd.f32 %v206, %v207
    %v209 = vrot.slane %v208, 1
    %v210 = vadd.f32 %v208, %v209
    %v211 = vrot.slane %v122, 4
    %v212 = vadd.f32 %v122, %v211
    %v213 = vrot.slane %v212, 2
    %v214 = vadd.f32 %v212, %v213
    %v215 = vrot.slane %v214, 1
    %v216 = vadd.f32 %v214, %v215
    %v217 = vrot.slane %v123, 4
    %v218 = vadd.f32 %v123, %v217
    %v219 = vrot.slane %v218, 2
    %v220 = vadd.f32 %v218, %v219
    %v221 = vrot.slane %v220, 1
    %v222 = vadd.f32 %v220, %v221
    %v223 = vrot.slane %v124, 4
    %v224 = vadd.f32 %v124, %v223
    %v225 = vrot.slane %v224, 2
    %v226 = vadd.f32 %v224, %v225
    %v227 = vrot.slane %v226, 1
    %v228 = vadd.f32 %v226, %v227
    %v229 = vpack.c.bf16 %v138, %v138
    %v230 = vpack.c.bf16 %v144, %v144
    %v231 = vpack.c.bf16 %v150, %v150
    %v232 = vpack.c.bf16 %v156, %v156
    %v233 = vpack.c.bf16 %v162, %v162
    %v234 = vpack.c.bf16 %v168, %v168
    %v235 = vpack.c.bf16 %v174, %v174
    %v236 = vpack.c.bf16 %v180, %v180
    %v237 = vld [vmem:[#allocation8] sm:$0xff]
    %v238 = vld [vmem:[#allocation8 + $0x8] sm:$0xff]
    %v239 = vld [vmem:[#allocation8 + $0x10] sm:$0xff]
    %v240 = vld [vmem:[#allocation8 + $0x18] sm:$0xff]
    %v241 = vld [vmem:[#allocation8 + $0x20] sm:$0xff]
    %v242 = vld [vmem:[#allocation8 + $0x28] sm:$0xff]
    %v243 = vld [vmem:[#allocation8 + $0x30] sm:$0xff]
    %v244 = vld [vmem:[#allocation8 + $0x38] sm:$0xff]
    %v245 = vld [vmem:[#allocation8 + $0x40] sm:$0xff]
    %v246 = vld [vmem:[#allocation8 + $0x48] sm:$0xff]
    %v247 = vld [vmem:[#allocation8 + $0x50] sm:$0xff]
    %v248 = vld [vmem:[#allocation8 + $0x58] sm:$0xff]
    %v249 = vld [vmem:[#allocation8 + $0x60] sm:$0xff]
    %v250 = vld [vmem:[#allocation8 + $0x68] sm:$0xff]
    %v251 = vld [vmem:[#allocation8 + $0x70] sm:$0xff]
    %v252 = vld [vmem:[#allocation8 + $0x78] sm:$0xff]
    %v253 = vld [vmem:[#allocation8 + $0x80] sm:$0xff]
    %v254 = vld [vmem:[#allocation8 + $0x88] sm:$0xff]
    %v255 = vld [vmem:[#allocation8 + $0x90] sm:$0xff]
    %v256 = vld [vmem:[#allocation8 + $0x98] sm:$0xff]
    %v257 = vld [vmem:[#allocation8 + $0xa0] sm:$0xff]
    %v258 = vld [vmem:[#allocation8 + $0xa8] sm:$0xff]
    %v259 = vld [vmem:[#allocation8 + $0xb0] sm:$0xff]
    %v260 = vld [vmem:[#allocation8 + $0xb8] sm:$0xff]
    %v261 = vld [vmem:[#allocation8 + $0xc0] sm:$0xff]
    %v262 = vld [vmem:[#allocation8 + $0xc8] sm:$0xff]
    %v263 = vld [vmem:[#allocation8 + $0xd0] sm:$0xff]
    %v264 = vld [vmem:[#allocation8 + $0xd8] sm:$0xff]
    %v265 = vld [vmem:[#allocation8 + $0xe0] sm:$0xff]
    %v266 = vld [vmem:[#allocation8 + $0xe8] sm:$0xff]
    %v267 = vld [vmem:[#allocation8 + $0xf0] sm:$0xff]
    %v268 = vld [vmem:[#allocation8 + $0xf8] sm:$0xff]
    %v269 = vld [vmem:[#allocation8 + $0x100] sm:$0xff]
    %v270 = vld [vmem:[#allocation8 + $0x108] sm:$0xff]
    %v271 = vld [vmem:[#allocation8 + $0x110] sm:$0xff]
    %v272 = vld [vmem:[#allocation8 + $0x118] sm:$0xff]
    %v273 = vld [vmem:[#allocation8 + $0x120] sm:$0xff]
    %v274 = vld [vmem:[#allocation8 + $0x128] sm:$0xff]
    %v275 = vld [vmem:[#allocation8 + $0x130] sm:$0xff]
    %v276 = vld [vmem:[#allocation8 + $0x138] sm:$0xff]
    %v277 = vld [vmem:[#allocation8 + $0x140] sm:$0xff]
    %v278 = vld [vmem:[#allocation8 + $0x148] sm:$0xff]
    %v279 = vld [vmem:[#allocation8 + $0x150] sm:$0xff]
    %v280 = vld [vmem:[#allocation8 + $0x158] sm:$0xff]
    %v281 = vld [vmem:[#allocation8 + $0x160] sm:$0xff]
    %v282 = vld [vmem:[#allocation8 + $0x168] sm:$0xff]
    %v283 = vld [vmem:[#allocation8 + $0x170] sm:$0xff]
    %v284 = vld [vmem:[#allocation8 + $0x178] sm:$0xff]
    %v285 = vld [vmem:[#allocation8 + $0x180] sm:$0xff]
    %v286 = vld [vmem:[#allocation8 + $0x188] sm:$0xff]
    %v287 = vld [vmem:[#allocation8 + $0x190] sm:$0xff]
    %v288 = vld [vmem:[#allocation8 + $0x198] sm:$0xff]
    %v289 = vld [vmem:[#allocation8 + $0x1a0] sm:$0xff]
    %v290 = vld [vmem:[#allocation8 + $0x1a8] sm:$0xff]
    %v291 = vld [vmem:[#allocation8 + $0x1b0] sm:$0xff]
    %v292 = vld [vmem:[#allocation8 + $0x1b8] sm:$0xff]
    %v293 = vld [vmem:[#allocation8 + $0x1c0] sm:$0xff]
    %v294 = vld [vmem:[#allocation8 + $0x1c8] sm:$0xff]
    %v295 = vld [vmem:[#allocation8 + $0x1d0] sm:$0xff]
    %v296 = vld [vmem:[#allocation8 + $0x1d8] sm:$0xff]
    %v297 = vld [vmem:[#allocation8 + $0x1e0] sm:$0xff]
    %v298 = vld [vmem:[#allocation8 + $0x1e8] sm:$0xff]
    %v299 = vld [vmem:[#allocation8 + $0x1f0] sm:$0xff]
    %v300 = vld [vmem:[#allocation8 + $0x1f8] sm:$0xff]
    %v301 = vld [vmem:[#allocation8 + $0x200] sm:$0xff]
    %v302 = vld [vmem:[#allocation8 + $0x208] sm:$0xff]
    %v303 = vld [vmem:[#allocation8 + $0x210] sm:$0xff]
    %v304 = vld [vmem:[#allocation8 + $0x218] sm:$0xff]
    %v305 = vld [vmem:[#allocation8 + $0x220] sm:$0xff]
    %v306 = vld [vmem:[#allocation8 + $0x228] sm:$0xff]
    %v307 = vld [vmem:[#allocation8 + $0x230] sm:$0xff]
    %v308 = vld [vmem:[#allocation8 + $0x238] sm:$0xff]
    %v309 = vld [vmem:[#allocation8 + $0x240] sm:$0xff]
    %v310 = vld [vmem:[#allocation8 + $0x248] sm:$0xff]
    %v311 = vld [vmem:[#allocation8 + $0x250] sm:$0xff]
    %v312 = vld [vmem:[#allocation8 + $0x258] sm:$0xff]
    %v313 = vld [vmem:[#allocation8 + $0x260] sm:$0xff]
    %v314 = vld [vmem:[#allocation8 + $0x268] sm:$0xff]
    %v315 = vld [vmem:[#allocation8 + $0x270] sm:$0xff]
    %v316 = vld [vmem:[#allocation8 + $0x278] sm:$0xff]
    %v317 = vld [vmem:[#allocation8 + $0x280] sm:$0xff]
    %v318 = vld [vmem:[#allocation8 + $0x288] sm:$0xff]
    %v319 = vld [vmem:[#allocation8 + $0x290] sm:$0xff]
    %v320 = vld [vmem:[#allocation8 + $0x298] sm:$0xff]
    %v321 = vld [vmem:[#allocation8 + $0x2a0] sm:$0xff]
    %v322 = vld [vmem:[#allocation8 + $0x2a8] sm:$0xff]
    %v323 = vld [vmem:[#allocation8 + $0x2b0] sm:$0xff]
    %v324 = vld [vmem:[#allocation8 + $0x2b8] sm:$0xff]
    %v325 = vld [vmem:[#allocation8 + $0x2c0] sm:$0xff]
    %v326 = vld [vmem:[#allocation8 + $0x2c8] sm:$0xff]
    %v327 = vld [vmem:[#allocation8 + $0x2d0] sm:$0xff]
    %v328 = vld [vmem:[#allocation8 + $0x2d8] sm:$0xff]
    %v329 = vld [vmem:[#allocation8 + $0x2e0] sm:$0xff]
    %v330 = vld [vmem:[#allocation8 + $0x2e8] sm:$0xff]
    %v331 = vld [vmem:[#allocation8 + $0x2f0] sm:$0xff]
    %v332 = vld [vmem:[#allocation8 + $0x2f8] sm:$0xff]
    %v333 = vld [vmem:[#allocation8 + $0x300] sm:$0xff]
    %v334 = vld [vmem:[#allocation8 + $0x308] sm:$0xff]
    %v335 = vld [vmem:[#allocation8 + $0x310] sm:$0xff]
    %v336 = vld [vmem:[#allocation8 + $0x318] sm:$0xff]
    %v337 = vld [vmem:[#allocation8 + $0x320] sm:$0xff]
    %v338 = vld [vmem:[#allocation8 + $0x328] sm:$0xff]
    %v339 = vld [vmem:[#allocation8 + $0x330] sm:$0xff]
    %v340 = vld [vmem:[#allocation8 + $0x338] sm:$0xff]
    %v341 = vld [vmem:[#allocation8 + $0x340] sm:$0xff]
    %v342 = vld [vmem:[#allocation8 + $0x348] sm:$0xff]
    %v343 = vld [vmem:[#allocation8 + $0x350] sm:$0xff]
    %v344 = vld [vmem:[#allocation8 + $0x358] sm:$0xff]
    %v345 = vld [vmem:[#allocation8 + $0x360] sm:$0xff]
    %v346 = vld [vmem:[#allocation8 + $0x368] sm:$0xff]
    %v347 = vld [vmem:[#allocation8 + $0x370] sm:$0xff]
    %v348 = vld [vmem:[#allocation8 + $0x378] sm:$0xff]
    %v349 = vld [vmem:[#allocation8 + $0x380] sm:$0xff]
    %v350 = vld [vmem:[#allocation8 + $0x388] sm:$0xff]
    %v351 = vld [vmem:[#allocation8 + $0x390] sm:$0xff]
    %v352 = vld [vmem:[#allocation8 + $0x398] sm:$0xff]
    %v353 = vld [vmem:[#allocation8 + $0x3a0] sm:$0xff]
    %v354 = vld [vmem:[#allocation8 + $0x3a8] sm:$0xff]
    %v355 = vld [vmem:[#allocation8 + $0x3b0] sm:$0xff]
    %v356 = vld [vmem:[#allocation8 + $0x3b8] sm:$0xff]
    %v357 = vld [vmem:[#allocation8 + $0x3c0] sm:$0xff]
    %v358 = vld [vmem:[#allocation8 + $0x3c8] sm:$0xff]
    %v359 = vld [vmem:[#allocation8 + $0x3d0] sm:$0xff]
    %v360 = vld [vmem:[#allocation8 + $0x3d8] sm:$0xff]
    %v361 = vld [vmem:[#allocation8 + $0x3e0] sm:$0xff]
    %v362 = vld [vmem:[#allocation8 + $0x3e8] sm:$0xff]
    %v363 = vld [vmem:[#allocation8 + $0x3f0] sm:$0xff]
    %v364 = vld [vmem:[#allocation8 + $0x3f8] sm:$0xff]
    %v373 = vunpack.c.l.b16 %v229
    %v374 = vunpack.c.l.b16 %v230
    %v375 = vunpack.c.l.b16 %v231
    %v376 = vunpack.c.l.b16 %v232
    %v377 = vunpack.c.l.b16 %v233
    %v378 = vunpack.c.l.b16 %v234
    %v379 = vunpack.c.l.b16 %v235
    %v380 = vunpack.c.l.b16 %v236
    %vm381 = vcmask 1041409
    %v382 = vsel %vm381, %v377, %v373
    %v383 = vsel %vm381, %v378, %v374
    %v384 = vsel %vm381, %v379, %v375
    %v385 = vsel %vm381, %v380, %v376
    %v386 = vpack.c.b16 %v382, %v382
    %v387 = vpack.c.b16 %v383, %v383
    %v388 = vpack.c.b16 %v384, %v384
    %v389 = vpack.c.b16 %v385, %v385
    %v522 = vunpack.c.l.b16 %v237
    %v523 = vunpack.c.h.b16 %v237
    %v524 = vunpack.c.l.b16 %v238
    %v525 = vunpack.c.h.b16 %v238
    %v526 = vunpack.c.l.b16 %v239
    %v527 = vunpack.c.h.b16 %v239
    %v528 = vunpack.c.l.b16 %v240
    %v529 = vunpack.c.h.b16 %v240
    %v530 = vunpack.c.l.b16 %v241
    %v531 = vunpack.c.h.b16 %v241
    %v532 = vunpack.c.l.b16 %v242
    %v533 = vunpack.c.h.b16 %v242
    %v534 = vunpack.c.l.b16 %v243
    %v535 = vunpack.c.h.b16 %v243
    %v536 = vunpack.c.l.b16 %v244
    %v537 = vunpack.c.h.b16 %v244
    %v538 = vunpack.c.l.b16 %v245
    %v539 = vunpack.c.h.b16 %v245
    %v540 = vunpack.c.l.b16 %v246
    %v541 = vunpack.c.h.b16 %v246
    %v542 = vunpack.c.l.b16 %v247
    %v543 = vunpack.c.h.b16 %v247
    %v544 = vunpack.c.l.b16 %v248
    %v545 = vunpack.c.h.b16 %v248
    %v546 = vunpack.c.l.b16 %v249
    %v547 = vunpack.c.h.b16 %v249
    %v548 = vunpack.c.l.b16 %v250
    %v549 = vunpack.c.h.b16 %v250
    %v550 = vunpack.c.l.b16 %v251
    %v551 = vunpack.c.h.b16 %v251
    %v552 = vunpack.c.l.b16 %v252
    %v553 = vunpack.c.h.b16 %v252
    %v554 = vunpack.c.l.b16 %v253
    %v555 = vunpack.c.h.b16 %v253
    %v556 = vunpack.c.l.b16 %v254
    %v557 = vunpack.c.h.b16 %v254
    %v558 = vunpack.c.l.b16 %v255
    %v559 = vunpack.c.h.b16 %v255
    %v560 = vunpack.c.l.b16 %v256
    %v561 = vunpack.c.h.b16 %v256
    %v562 = vunpack.c.l.b16 %v257
    %v563 = vunpack.c.h.b16 %v257
    %v564 = vunpack.c.l.b16 %v258
    %v565 = vunpack.c.h.b16 %v258
    %v566 = vunpack.c.l.b16 %v259
    %v567 = vunpack.c.h.b16 %v259
    %v568 = vunpack.c.l.b16 %v260
    %v569 = vunpack.c.h.b16 %v260
    %v570 = vunpack.c.l.b16 %v261
    %v571 = vunpack.c.h.b16 %v261
    %v572 = vunpack.c.l.b16 %v262
    %v573 = vunpack.c.h.b16 %v262
    %v574 = vunpack.c.l.b16 %v263
    %v575 = vunpack.c.h.b16 %v263
    %v576 = vunpack.c.l.b16 %v264
    %v577 = vunpack.c.h.b16 %v264
    %v578 = vunpack.c.l.b16 %v265
    %v579 = vunpack.c.h.b16 %v265
    %v580 = vunpack.c.l.b16 %v266
    %v581 = vunpack.c.h.b16 %v266
    %v582 = vunpack.c.l.b16 %v267
    %v583 = vunpack.c.h.b16 %v267
    %v584 = vunpack.c.l.b16 %v268
    %v585 = vunpack.c.h.b16 %v268
    %v586 = vunpack.c.l.b16 %v269
    %v587 = vunpack.c.h.b16 %v269
    %v588 = vunpack.c.l.b16 %v270
    %v589 = vunpack.c.h.b16 %v270
    %v590 = vunpack.c.l.b16 %v271
    %v591 = vunpack.c.h.b16 %v271
    %v592 = vunpack.c.l.b16 %v272
    %v593 = vunpack.c.h.b16 %v272
    %v594 = vunpack.c.l.b16 %v273
    %v595 = vunpack.c.h.b16 %v273
    %v596 = vunpack.c.l.b16 %v274
    %v597 = vunpack.c.h.b16 %v274
    %v598 = vunpack.c.l.b16 %v275
    %v599 = vunpack.c.h.b16 %v275
    %v600 = vunpack.c.l.b16 %v276
    %v601 = vunpack.c.h.b16 %v276
    %v602 = vunpack.c.l.b16 %v277
    %v603 = vunpack.c.h.b16 %v277
    %v604 = vunpack.c.l.b16 %v278
    %v605 = vunpack.c.h.b16 %v278
    %v606 = vunpack.c.l.b16 %v279
    %v607 = vunpack.c.h.b16 %v279
    %v608 = vunpack.c.l.b16 %v280
    %v609 = vunpack.c.h.b16 %v280
    %v610 = vunpack.c.l.b16 %v281
    %v611 = vunpack.c.h.b16 %v281
    %v612 = vunpack.c.l.b16 %v282
    %v613 = vunpack.c.h.b16 %v282
    %v614 = vunpack.c.l.b16 %v283
    %v615 = vunpack.c.h.b16 %v283
    %v616 = vunpack.c.l.b16 %v284
    %v617 = vunpack.c.h.b16 %v284
    %v618 = vunpack.c.l.b16 %v285
    %v619 = vunpack.c.h.b16 %v285
    %v620 = vunpack.c.l.b16 %v286
    %v621 = vunpack.c.h.b16 %v286
    %v622 = vunpack.c.l.b16 %v287
    %v623 = vunpack.c.h.b16 %v287
    %v624 = vunpack.c.l.b16 %v288
    %v625 = vunpack.c.h.b16 %v288
    %v626 = vunpack.c.l.b16 %v289
    %v627 = vunpack.c.h.b16 %v289
    %v628 = vunpack.c.l.b16 %v290
    %v629 = vunpack.c.h.b16 %v290
    %v630 = vunpack.c.l.b16 %v291
    %v631 = vunpack.c.h.b16 %v291
    %v632 = vunpack.c.l.b16 %v292
    %v633 = vunpack.c.h.b16 %v292
    %v634 = vunpack.c.l.b16 %v293
    %v635 = vunpack.c.h.b16 %v293
    %v636 = vunpack.c.l.b16 %v294
    %v637 = vunpack.c.h.b16 %v294
    %v638 = vunpack.c.l.b16 %v295
    %v639 = vunpack.c.h.b16 %v295
    %v640 = vunpack.c.l.b16 %v296
    %v641 = vunpack.c.h.b16 %v296
    %v642 = vunpack.c.l.b16 %v297
    %v643 = vunpack.c.h.b16 %v297
    %v644 = vunpack.c.l.b16 %v298
    %v645 = vunpack.c.h.b16 %v298
    %v646 = vunpack.c.l.b16 %v299
    %v647 = vunpack.c.h.b16 %v299
    %v648 = vunpack.c.l.b16 %v300
    %v649 = vunpack.c.h.b16 %v300
    %v650 = vunpack.c.l.b16 %v301
    %v651 = vunpack.c.h.b16 %v301
    %v652 = vunpack.c.l.b16 %v302
    %v653 = vunpack.c.h.b16 %v302
    %v654 = vunpack.c.l.b16 %v303
    %v655 = vunpack.c.h.b16 %v303
    %v656 = vunpack.c.l.b16 %v304
    %v657 = vunpack.c.h.b16 %v304
    %v658 = vunpack.c.l.b16 %v305
    %v659 = vunpack.c.h.b16 %v305
    %v660 = vunpack.c.l.b16 %v306
    %v661 = vunpack.c.h.b16 %v306
    %v662 = vunpack.c.l.b16 %v307
    %v663 = vunpack.c.h.b16 %v307
    %v664 = vunpack.c.l.b16 %v308
    %v665 = vunpack.c.h.b16 %v308
    %v666 = vunpack.c.l.b16 %v309
    %v667 = vunpack.c.h.b16 %v309
    %v668 = vunpack.c.l.b16 %v310
    %v669 = vunpack.c.h.b16 %v310
    %v670 = vunpack.c.l.b16 %v311
    %v671 = vunpack.c.h.b16 %v311
    %v672 = vunpack.c.l.b16 %v312
    %v673 = vunpack.c.h.b16 %v312
    %v674 = vunpack.c.l.b16 %v313
    %v675 = vunpack.c.h.b16 %v313
    %v676 = vunpack.c.l.b16 %v314
    %v677 = vunpack.c.h.b16 %v314
    %v678 = vunpack.c.l.b16 %v315
    %v679 = vunpack.c.h.b16 %v315
    %v680 = vunpack.c.l.b16 %v316
    %v681 = vunpack.c.h.b16 %v316
    %v682 = vunpack.c.l.b16 %v317
    %v683 = vunpack.c.h.b16 %v317
    %v684 = vunpack.c.l.b16 %v318
    %v685 = vunpack.c.h.b16 %v318
    %v686 = vunpack.c.l.b16 %v319
    %v687 = vunpack.c.h.b16 %v319
    %v688 = vunpack.c.l.b16 %v320
    %v689 = vunpack.c.h.b16 %v320
    %v690 = vunpack.c.l.b16 %v321
    %v691 = vunpack.c.h.b16 %v321
    %v692 = vunpack.c.l.b16 %v322
    %v693 = vunpack.c.h.b16 %v322
    %v694 = vunpack.c.l.b16 %v323
    %v695 = vunpack.c.h.b16 %v323
    %v696 = vunpack.c.l.b16 %v324
    %v697 = vunpack.c.h.b16 %v324
    %v698 = vunpack.c.l.b16 %v325
    %v699 = vunpack.c.h.b16 %v325
    %v700 = vunpack.c.l.b16 %v326
    %v701 = vunpack.c.h.b16 %v326
    %v702 = vunpack.c.l.b16 %v327
    %v703 = vunpack.c.h.b16 %v327
    %v704 = vunpack.c.l.b16 %v328
    %v705 = vunpack.c.h.b16 %v328
    %v706 = vunpack.c.l.b16 %v329
    %v707 = vunpack.c.h.b16 %v329
    %v708 = vunpack.c.l.b16 %v330
    %v709 = vunpack.c.h.b16 %v330
    %v710 = vunpack.c.l.b16 %v331
    %v711 = vunpack.c.h.b16 %v331
    %v712 = vunpack.c.l.b16 %v332
    %v713 = vunpack.c.h.b16 %v332
    %v714 = vunpack.c.l.b16 %v333
    %v715 = vunpack.c.h.b16 %v333
    %v716 = vunpack.c.l.b16 %v334
    %v717 = vunpack.c.h.b16 %v334
    %v718 = vunpack.c.l.b16 %v335
    %v719 = vunpack.c.h.b16 %v335
    %v720 = vunpack.c.l.b16 %v336
    %v721 = vunpack.c.h.b16 %v336
    %v722 = vunpack.c.l.b16 %v337
    %v723 = vunpack.c.h.b16 %v337
    %v724 = vunpack.c.l.b16 %v338
    %v725 = vunpack.c.h.b16 %v338
    %v726 = vunpack.c.l.b16 %v339
    %v727 = vunpack.c.h.b16 %v339
    %v728 = vunpack.c.l.b16 %v340
    %v729 = vunpack.c.h.b16 %v340
    %v730 = vunpack.c.l.b16 %v341
    %v731 = vunpack.c.h.b16 %v341
    %v732 = vunpack.c.l.b16 %v342
    %v733 = vunpack.c.h.b16 %v342
    %v734 = vunpack.c.l.b16 %v343
    %v735 = vunpack.c.h.b16 %v343
    %v736 = vunpack.c.l.b16 %v344
    %v737 = vunpack.c.h.b16 %v344
    %v738 = vunpack.c.l.b16 %v345
    %v739 = vunpack.c.h.b16 %v345
    %v740 = vunpack.c.l.b16 %v346
    %v741 = vunpack.c.h.b16 %v346
    %v742 = vunpack.c.l.b16 %v347
    %v743 = vunpack.c.h.b16 %v347
    %v744 = vunpack.c.l.b16 %v348
    %v745 = vunpack.c.h.b16 %v348
    %v746 = vunpack.c.l.b16 %v349
    %v747 = vunpack.c.h.b16 %v349
    %v748 = vunpack.c.l.b16 %v350
    %v749 = vunpack.c.h.b16 %v350
    %v750 = vunpack.c.l.b16 %v351
    %v751 = vunpack.c.h.b16 %v351
    %v752 = vunpack.c.l.b16 %v352
    %v753 = vunpack.c.h.b16 %v352
    %v754 = vunpack.c.l.b16 %v353
    %v755 = vunpack.c.h.b16 %v353
    %v756 = vunpack.c.l.b16 %v354
    %v757 = vunpack.c.h.b16 %v354
    %v758 = vunpack.c.l.b16 %v355
    %v759 = vunpack.c.h.b16 %v355
    %v760 = vunpack.c.l.b16 %v356
    %v761 = vunpack.c.h.b16 %v356
    %v762 = vunpack.c.l.b16 %v357
    %v763 = vunpack.c.h.b16 %v357
    %v764 = vunpack.c.l.b16 %v358
    %v765 = vunpack.c.h.b16 %v358
    %v766 = vunpack.c.l.b16 %v359
    %v767 = vunpack.c.h.b16 %v359
    %v768 = vunpack.c.l.b16 %v360
    %v769 = vunpack.c.h.b16 %v360
    %v770 = vunpack.c.l.b16 %v361
    %v771 = vunpack.c.h.b16 %v361
    %v772 = vunpack.c.l.b16 %v362
    %v773 = vunpack.c.h.b16 %v362
    %v774 = vunpack.c.l.b16 %v363
    %v775 = vunpack.c.h.b16 %v363
    %v776 = vunpack.c.l.b16 %v364
    %v777 = vunpack.c.h.b16 %v364
    %v778 = vpack.c.b16 %v526, %v522
    %v779 = vpack.c.b16 %v527, %v523
    %v780 = vpack.c.b16 %v528, %v524
    %v781 = vpack.c.b16 %v529, %v525
    %v782 = vpack.c.b16 %v534, %v530
    %v783 = vpack.c.b16 %v535, %v531
    %v784 = vpack.c.b16 %v536, %v532
    %v785 = vpack.c.b16 %v537, %v533
    %v786 = vpack.c.b16 %v542, %v538
    %v787 = vpack.c.b16 %v543, %v539
    %v788 = vpack.c.b16 %v544, %v540
    %v789 = vpack.c.b16 %v545, %v541
    %v790 = vpack.c.b16 %v550, %v546
    %v791 = vpack.c.b16 %v551, %v547
    %v792 = vpack.c.b16 %v552, %v548
    %v793 = vpack.c.b16 %v553, %v549
    %v794 = vpack.c.b16 %v558, %v554
    %v795 = vpack.c.b16 %v559, %v555
    %v796 = vpack.c.b16 %v560, %v556
    %v797 = vpack.c.b16 %v561, %v557
    %v798 = vpack.c.b16 %v566, %v562
    %v799 = vpack.c.b16 %v567, %v563
    %v800 = vpack.c.b16 %v568, %v564
    %v801 = vpack.c.b16 %v569, %v565
    %v802 = vpack.c.b16 %v574, %v570
    %v803 = vpack.c.b16 %v575, %v571
    %v804 = vpack.c.b16 %v576, %v572
    %v805 = vpack.c.b16 %v577, %v573
    %v806 = vpack.c.b16 %v582, %v578
    %v807 = vpack.c.b16 %v583, %v579
    %v808 = vpack.c.b16 %v584, %v580
    %v809 = vpack.c.b16 %v585, %v581
    %v810 = vpack.c.b16 %v590, %v586
    %v811 = vpack.c.b16 %v591, %v587
    %v812 = vpack.c.b16 %v592, %v588
    %v813 = vpack.c.b16 %v593, %v589
    %v814 = vpack.c.b16 %v598, %v594
    %v815 = vpack.c.b16 %v599, %v595
    %v816 = vpack.c.b16 %v600, %v596
    %v817 = vpack.c.b16 %v601, %v597
    %v818 = vpack.c.b16 %v606, %v602
    %v819 = vpack.c.b16 %v607, %v603
    %v820 = vpack.c.b16 %v608, %v604
    %v821 = vpack.c.b16 %v609, %v605
    %v822 = vpack.c.b16 %v614, %v610
    %v823 = vpack.c.b16 %v615, %v611
    %v824 = vpack.c.b16 %v616, %v612
    %v825 = vpack.c.b16 %v617, %v613
    %v826 = vpack.c.b16 %v622, %v618
    %v827 = vpack.c.b16 %v623, %v619
    %v828 = vpack.c.b16 %v624, %v620
    %v829 = vpack.c.b16 %v625, %v621
    %v830 = vpack.c.b16 %v630, %v626
    %v831 = vpack.c.b16 %v631, %v627
    %v832 = vpack.c.b16 %v632, %v628
    %v833 = vpack.c.b16 %v633, %v629
    %v834 = vpack.c.b16 %v638, %v634
    %v835 = vpack.c.b16 %v639, %v635
    %v836 = vpack.c.b16 %v640, %v636
    %v837 = vpack.c.b16 %v641, %v637
    %v838 = vpack.c.b16 %v646, %v642
    %v839 = vpack.c.b16 %v647, %v643
    %v840 = vpack.c.b16 %v648, %v644
    %v841 = vpack.c.b16 %v649, %v645
    %v842 = vpack.c.b16 %v654, %v650
    %v843 = vpack.c.b16 %v655, %v651
    %v844 = vpack.c.b16 %v656, %v652
    %v845 = vpack.c.b16 %v657, %v653
    %v846 = vpack.c.b16 %v662, %v658
    %v847 = vpack.c.b16 %v663, %v659
    %v848 = vpack.c.b16 %v664, %v660
    %v849 = vpack.c.b16 %v665, %v661
    %v850 = vpack.c.b16 %v670, %v666
    %v851 = vpack.c.b16 %v671, %v667
    %v852 = vpack.c.b16 %v672, %v668
    %v853 = vpack.c.b16 %v673, %v669
    %v854 = vpack.c.b16 %v678, %v674
    %v855 = vpack.c.b16 %v679, %v675
    %v856 = vpack.c.b16 %v680, %v676
    %v857 = vpack.c.b16 %v681, %v677
    %v858 = vpack.c.b16 %v686, %v682
    %v859 = vpack.c.b16 %v687, %v683
    %v860 = vpack.c.b16 %v688, %v684
    %v861 = vpack.c.b16 %v689, %v685
    %v862 = vpack.c.b16 %v694, %v690
    %v863 = vpack.c.b16 %v695, %v691
    %v864 = vpack.c.b16 %v696, %v692
    %v865 = vpack.c.b16 %v697, %v693
    %v866 = vpack.c.b16 %v702, %v698
    %v867 = vpack.c.b16 %v703, %v699
    %v868 = vpack.c.b16 %v704, %v700
    %v869 = vpack.c.b16 %v705, %v701
    %v870 = vpack.c.b16 %v710, %v706
    %v871 = vpack.c.b16 %v711, %v707
    %v872 = vpack.c.b16 %v712, %v708
    %v873 = vpack.c.b16 %v713, %v709
    %v874 = vpack.c.b16 %v718, %v714
    %v875 = vpack.c.b16 %v719, %v715
    %v876 = vpack.c.b16 %v720, %v716
    %v877 = vpack.c.b16 %v721, %v717
    %v878 = vpack.c.b16 %v726, %v722
    %v879 = vpack.c.b16 %v727, %v723
    %v880 = vpack.c.b16 %v728, %v724
    %v881 = vpack.c.b16 %v729, %v725
    %v882 = vpack.c.b16 %v734, %v730
    %v883 = vpack.c.b16 %v735, %v731
    %v884 = vpack.c.b16 %v736, %v732
    %v885 = vpack.c.b16 %v737, %v733
    %v886 = vpack.c.b16 %v742, %v738
    %v887 = vpack.c.b16 %v743, %v739
    %v888 = vpack.c.b16 %v744, %v740
    %v889 = vpack.c.b16 %v745, %v741
    %v890 = vpack.c.b16 %v750, %v746
    %v891 = vpack.c.b16 %v751, %v747
    %v892 = vpack.c.b16 %v752, %v748
    %v893 = vpack.c.b16 %v753, %v749
    %v894 = vpack.c.b16 %v758, %v754
    %v895 = vpack.c.b16 %v759, %v755
    %v896 = vpack.c.b16 %v760, %v756
    %v897 = vpack.c.b16 %v761, %v757
    %v898 = vpack.c.b16 %v766, %v762
    %v899 = vpack.c.b16 %v767, %v763
    %v900 = vpack.c.b16 %v768, %v764
    %v901 = vpack.c.b16 %v769, %v765
    %v902 = vpack.c.b16 %v774, %v770
    %v903 = vpack.c.b16 %v775, %v771
    %v904 = vpack.c.b16 %v776, %v772
    %v905 = vpack.c.b16 %v777, %v773
    %1034 = vmatprep.subr.bf16.mxu0 %v779
    %1035 = vmatpush1.bf16.msra.mxu0 %v778
    %1036 = vmatprep.subr.bf16.mxu0 %v783
    %1037 = vmatpush1.bf16.msra.mxu0 %v782
    %1038 = vmatprep.subr.bf16.mxu0 %v787
    %1039 = vmatpush1.bf16.msra.mxu0 %v786
    %1040 = vmatprep.subr.bf16.mxu0 %v791
    %1041 = vmatpush1.bf16.msra.mxu0 %v790
    %1042 = vmatprep.subr.bf16.mxu0 %v795
    %1043 = vmatpush1.bf16.msra.mxu0 %v794
    %1044 = vmatprep.subr.bf16.mxu0 %v799
    %1045 = vmatpush1.bf16.msra.mxu0 %v798
    %1046 = vmatprep.subr.bf16.mxu0 %v803
    %1047 = vmatpush1.bf16.msra.mxu0 %v802
    %1048 = vmatprep.subr.bf16.mxu0 %v807
    %1049 = vmatpush1.bf16.msra.mxu0 %v806
    %1050 = vmatprep.subr.bf16.mxu0 %v811
    %1051 = vmatpush1.bf16.msra.mxu0 %v810
    %1052 = vmatprep.subr.bf16.mxu0 %v815
    %1053 = vmatpush1.bf16.msra.mxu0 %v814
    %1054 = vmatprep.subr.bf16.mxu0 %v819
    %1055 = vmatpush1.bf16.msra.mxu0 %v818
    %1056 = vmatprep.subr.bf16.mxu0 %v823
    %1057 = vmatpush1.bf16.msra.mxu0 %v822
    %1058 = vmatprep.subr.bf16.mxu0 %v827
    %1059 = vmatpush1.bf16.msra.mxu0 %v826
    %1060 = vmatprep.subr.bf16.mxu0 %v831
    %1061 = vmatpush1.bf16.msra.mxu0 %v830
    %1062 = vmatprep.subr.bf16.mxu0 %v835
    %1063 = vmatpush1.bf16.msra.mxu0 %v834
    %1064 = vmatprep.subr.bf16.mxu0 %v839
    %1065 = vmatpush1.bf16.msra.mxu0 %v838
    %1066 = vmatprep.mubr.bf16.mxu0 %v387
    %1067 = vmatmul.mubr.bf16.gmra.mrb[0].mxu0 %v386
    %v1068 = vpop.f32.mrb[0].mxu0
    %v1069 = vadd.f32 0.0, %v1068
    %v1070 = vpop.f32.mrb[0].mxu0
    %v1071 = vadd.f32 0.0, %v1070
    %v1072 = vpop.f32.mrb[0].mxu0
    %v1073 = vpop.f32.mrb[0].mxu0
    %1074 = vdwg.mxu0
    %1075 = vmatprep.subr.bf16.mxu0 %v843
    %1076 = vmatpush1.bf16.msra.mxu0 %v842
    %1077 = vmatprep.subr.bf16.mxu0 %v847
    %1078 = vmatpush1.bf16.msra.mxu0 %v846
    %1079 = vmatprep.subr.bf16.mxu0 %v851
    %1080 = vmatpush1.bf16.msra.mxu0 %v850
    %1081 = vmatprep.subr.bf16.mxu0 %v855
    %1082 = vmatpush1.bf16.msra.mxu0 %v854
    %1083 = vmatprep.subr.bf16.mxu0 %v859
    %1084 = vmatpush1.bf16.msra.mxu0 %v858
    %1085 = vmatprep.subr.bf16.mxu0 %v863
    %1086 = vmatpush1.bf16.msra.mxu0 %v862
    %1087 = vmatprep.subr.bf16.mxu0 %v867
    %1088 = vmatpush1.bf16.msra.mxu0 %v866
    %1089 = vmatprep.subr.bf16.mxu0 %v871
    %1090 = vmatpush1.bf16.msra.mxu0 %v870
    %1091 = vmatprep.subr.bf16.mxu0 %v875
    %1092 = vmatpush1.bf16.msra.mxu0 %v874
    %1093 = vmatprep.subr.bf16.mxu0 %v879
    %1094 = vmatpush1.bf16.msra.mxu0 %v878
    %1095 = vmatprep.subr.bf16.mxu0 %v883
    %1096 = vmatpush1.bf16.msra.mxu0 %v882
    %1097 = vmatprep.subr.bf16.mxu0 %v887
    %1098 = vmatpush1.bf16.msra.mxu0 %v886
    %1099 = vmatprep.subr.bf16.mxu0 %v891
    %1100 = vmatpush1.bf16.msra.mxu0 %v890
    %1101 = vmatprep.subr.bf16.mxu0 %v895
    %1102 = vmatpush1.bf16.msra.mxu0 %v894
    %1103 = vmatprep.subr.bf16.mxu0 %v899
    %1104 = vmatpush1.bf16.msra.mxu0 %v898
    %1105 = vmatprep.subr.bf16.mxu0 %v903
    %1106 = vmatpush1.bf16.msra.mxu0 %v902
    %1107 = vmatprep.mubr.bf16.mxu0 %v389
    %1108 = vmatmul.mubr.bf16.gmra.mrb[0].mxu0 %v388
    %v1109 = vpop.f32.mrb[0].mxu0
    %v1110 = vadd.f32 %v1069, %v1109
    %v1111 = vpop.f32.mrb[0].mxu0
    %v1112 = vadd.f32 %v1071, %v1111
    %v1113 = vpop.f32.mrb[0].mxu0
    %v1114 = vpop.f32.mrb[0].mxu0
    %1115 = vdwg.mxu0
    %1116 = vmatprep.subr.bf16.mxu0 %v781
    %1117 = vmatpush1.bf16.msra.mxu0 %v780
    %1118 = vmatprep.subr.bf16.mxu0 %v785
    %1119 = vmatpush1.bf16.msra.mxu0 %v784
    %1120 = vmatprep.subr.bf16.mxu0 %v789
    %1121 = vmatpush1.bf16.msra.mxu0 %v788
    %1122 = vmatprep.subr.bf16.mxu0 %v793
    %1123 = vmatpush1.bf16.msra.mxu0 %v792
    %1124 = vmatprep.subr.bf16.mxu0 %v797
    %1125 = vmatpush1.bf16.msra.mxu0 %v796
    %1126 = vmatprep.subr.bf16.mxu0 %v801
    %1127 = vmatpush1.bf16.msra.mxu0 %v800
    %1128 = vmatprep.subr.bf16.mxu0 %v805
    %1129 = vmatpush1.bf16.msra.mxu0 %v804
    %1130 = vmatprep.subr.bf16.mxu0 %v809
    %1131 = vmatpush1.bf16.msra.mxu0 %v808
    %1132 = vmatprep.subr.bf16.mxu0 %v813
    %1133 = vmatpush1.bf16.msra.mxu0 %v812
    %1134 = vmatprep.subr.bf16.mxu0 %v817
    %1135 = vmatpush1.bf16.msra.mxu0 %v816
    %1136 = vmatprep.subr.bf16.mxu0 %v821
    %1137 = vmatpush1.bf16.msra.mxu0 %v820
    %1138 = vmatprep.subr.bf16.mxu0 %v825
    %1139 = vmatpush1.bf16.msra.mxu0 %v824
    %1140 = vmatprep.subr.bf16.mxu0 %v829
    %1141 = vmatpush1.bf16.msra.mxu0 %v828
    %1142 = vmatprep.subr.bf16.mxu0 %v833
    %1143 = vmatpush1.bf16.msra.mxu0 %v832
    %1144 = vmatprep.subr.bf16.mxu0 %v837
    %1145 = vmatpush1.bf16.msra.mxu0 %v836
    %1146 = vmatprep.subr.bf16.mxu0 %v841
    %1147 = vmatpush1.bf16.msra.mxu0 %v840
    %1148 = vmatprep.mubr.bf16.mxu0 %v387
    %1149 = vmatmul.mubr.bf16.gmra.mrb[0].mxu0 %v386
    %v1150 = vpop.f32.mrb[0].mxu0
    %v1151 = vadd.f32 0.0, %v1150
    %v1152 = vpop.f32.mrb[0].mxu0
    %v1153 = vadd.f32 0.0, %v1152
    %v1154 = vpop.f32.mrb[0].mxu0
    %v1155 = vpop.f32.mrb[0].mxu0
    %1156 = vdwg.mxu0
    %1157 = vmatprep.subr.bf16.mxu0 %v845
    %1158 = vmatpush1.bf16.msra.mxu0 %v844
    %1159 = vmatprep.subr.bf16.mxu0 %v849
    %1160 = vmatpush1.bf16.msra.mxu0 %v848
    %1161 = vmatprep.subr.bf16.mxu0 %v853
    %1162 = vmatpush1.bf16.msra.mxu0 %v852
    %1163 = vmatprep.subr.bf16.mxu0 %v857
    %1164 = vmatpush1.bf16.msra.mxu0 %v856
    %1165 = vmatprep.subr.bf16.mxu0 %v861
    %1166 = vmatpush1.bf16.msra.mxu0 %v860
    %1167 = vmatprep.subr.bf16.mxu0 %v865
    %1168 = vmatpush1.bf16.msra.mxu0 %v864
    %1169 = vmatprep.subr.bf16.mxu0 %v869
    %1170 = vmatpush1.bf16.msra.mxu0 %v868
    %1171 = vmatprep.subr.bf16.mxu0 %v873
    %1172 = vmatpush1.bf16.msra.mxu0 %v872
    %1173 = vmatprep.subr.bf16.mxu0 %v877
    %1174 = vmatpush1.bf16.msra.mxu0 %v876
    %1175 = vmatprep.subr.bf16.mxu0 %v881
    %1176 = vmatpush1.bf16.msra.mxu0 %v880
    %1177 = vmatprep.subr.bf16.mxu0 %v885
    %1178 = vmatpush1.bf16.msra.mxu0 %v884
    %1179 = vmatprep.subr.bf16.mxu0 %v889
    %1180 = vmatpush1.bf16.msra.mxu0 %v888
    %1181 = vmatprep.subr.bf16.mxu0 %v893
    %1182 = vmatpush1.bf16.msra.mxu0 %v892
    %1183 = vmatprep.subr.bf16.mxu0 %v897
    %1184 = vmatpush1.bf16.msra.mxu0 %v896
    %1185 = vmatprep.subr.bf16.mxu0 %v901
    %1186 = vmatpush1.bf16.msra.mxu0 %v900
    %1187 = vmatprep.subr.bf16.mxu0 %v905
    %1188 = vmatpush1.bf16.msra.mxu0 %v904
    %1189 = vmatprep.mubr.bf16.mxu0 %v389
    %1190 = vmatmul.mubr.bf16.gmra.mrb[0].mxu0 %v388
    %v1191 = vpop.f32.mrb[0].mxu0
    %v1192 = vadd.f32 %v1151, %v1191
    %v1193 = vpop.f32.mrb[0].mxu0
    %v1194 = vadd.f32 %v1153, %v1193
    %v1195 = vpop.f32.mrb[0].mxu0
    %v1196 = vpop.f32.mrb[0].mxu0
    %1197 = vdwg.mxu0
    %v1198 = vmax.f32 %v186, 1.0
    %v1199 = vmax.f32 %v192, 1.0
    %v1200 = vmax.f32 %v198, 1.0
    %v1201 = vmax.f32 %v204, 1.0
    %v1202 = vmax.f32 %v210, 1.0
    %v1203 = vmax.f32 %v216, 1.0
    %v1204 = vmax.f32 %v222, 1.0
    %v1205 = vmax.f32 %v228, 1.0
    %v1206 = vrcp.pop %v1198
    %v1207 = vrcp.pop %v1199
    %v1208 = vrcp.pop %v1200
    %v1209 = vrcp.pop %v1201
    %v1210 = vrcp.pop %v1202
    %v1211 = vrcp.pop %v1203
    %v1212 = vrcp.pop %v1204
    %v1213 = vrcp.pop %v1205
    %v1222 = vsel %vm381, %v1210, %v1206
    %v1223 = vsel %vm381, %v1211, %v1207
    %v1224 = vsel %vm381, %v1212, %v1208
    %v1225 = vsel %vm381, %v1213, %v1209
    %v1230 = vmul.f32 %v1110, %v1222
    %v1231 = vmul.f32 %v1112, %v1223
    %v1232 = vmul.f32 %v1192, %v1224
    %v1233 = vmul.f32 %v1194, %v1225
    %v1234 = vpack.c.bf16 %v113, %v109
    %v1235 = vpack.c.bf16 %v114, %v110
    %v1236 = vpack.c.bf16 %v115, %v111
    %v1237 = vpack.c.bf16 %v116, %v112
    %v1238 = vld [vmem:[#allocation10] sm:$0xff]
    %v1239 = vld [vmem:[#allocation10 + $0x8] sm:$0xff]
    %v1240 = vld [vmem:[#allocation10 + $0x10] sm:$0xff]
    %v1241 = vld [vmem:[#allocation10 + $0x18] sm:$0xff]
    %v1242 = vld [vmem:[#allocation10 + $0x20] sm:$0xff]
    %v1243 = vld [vmem:[#allocation10 + $0x28] sm:$0xff]
    %v1244 = vld [vmem:[#allocation10 + $0x30] sm:$0xff]
    %v1245 = vld [vmem:[#allocation10 + $0x38] sm:$0xff]
    %v1246 = vld [vmem:[#allocation10 + $0x40] sm:$0xff]
    %v1247 = vld [vmem:[#allocation10 + $0x48] sm:$0xff]
    %v1248 = vld [vmem:[#allocation10 + $0x50] sm:$0xff]
    %v1249 = vld [vmem:[#allocation10 + $0x58] sm:$0xff]
    %v1250 = vld [vmem:[#allocation10 + $0x60] sm:$0xff]
    %v1251 = vld [vmem:[#allocation10 + $0x68] sm:$0xff]
    %v1252 = vld [vmem:[#allocation10 + $0x70] sm:$0xff]
    %v1253 = vld [vmem:[#allocation10 + $0x78] sm:$0xff]
    %v1254 = vld [vmem:[#allocation10 + $0x80] sm:$0xff]
    %v1255 = vld [vmem:[#allocation10 + $0x88] sm:$0xff]
    %v1256 = vld [vmem:[#allocation10 + $0x90] sm:$0xff]
    %v1257 = vld [vmem:[#allocation10 + $0x98] sm:$0xff]
    %v1258 = vld [vmem:[#allocation10 + $0xa0] sm:$0xff]
    %v1259 = vld [vmem:[#allocation10 + $0xa8] sm:$0xff]
    %v1260 = vld [vmem:[#allocation10 + $0xb0] sm:$0xff]
    %v1261 = vld [vmem:[#allocation10 + $0xb8] sm:$0xff]
    %v1262 = vld [vmem:[#allocation10 + $0xc0] sm:$0xff]
    %v1263 = vld [vmem:[#allocation10 + $0xc8] sm:$0xff]
    %v1264 = vld [vmem:[#allocation10 + $0xd0] sm:$0xff]
    %v1265 = vld [vmem:[#allocation10 + $0xd8] sm:$0xff]
    %v1266 = vld [vmem:[#allocation10 + $0xe0] sm:$0xff]
    %v1267 = vld [vmem:[#allocation10 + $0xe8] sm:$0xff]
    %v1268 = vld [vmem:[#allocation10 + $0xf0] sm:$0xff]
    %v1269 = vld [vmem:[#allocation10 + $0xf8] sm:$0xff]
    %v1270 = vld [vmem:[#allocation10 + $0x100] sm:$0xff]
    %v1271 = vld [vmem:[#allocation10 + $0x108] sm:$0xff]
    %v1272 = vld [vmem:[#allocation10 + $0x110] sm:$0xff]
    %v1273 = vld [vmem:[#allocation10 + $0x118] sm:$0xff]
    %v1274 = vld [vmem:[#allocation10 + $0x120] sm:$0xff]
    %v1275 = vld [vmem:[#allocation10 + $0x128] sm:$0xff]
    %v1276 = vld [vmem:[#allocation10 + $0x130] sm:$0xff]
    %v1277 = vld [vmem:[#allocation10 + $0x138] sm:$0xff]
    %v1278 = vld [vmem:[#allocation10 + $0x140] sm:$0xff]
    %v1279 = vld [vmem:[#allocation10 + $0x148] sm:$0xff]
    %v1280 = vld [vmem:[#allocation10 + $0x150] sm:$0xff]
    %v1281 = vld [vmem:[#allocation10 + $0x158] sm:$0xff]
    %v1282 = vld [vmem:[#allocation10 + $0x160] sm:$0xff]
    %v1283 = vld [vmem:[#allocation10 + $0x168] sm:$0xff]
    %v1284 = vld [vmem:[#allocation10 + $0x170] sm:$0xff]
    %v1285 = vld [vmem:[#allocation10 + $0x178] sm:$0xff]
    %v1286 = vld [vmem:[#allocation10 + $0x180] sm:$0xff]
    %v1287 = vld [vmem:[#allocation10 + $0x188] sm:$0xff]
    %v1288 = vld [vmem:[#allocation10 + $0x190] sm:$0xff]
    %v1289 = vld [vmem:[#allocation10 + $0x198] sm:$0xff]
    %v1290 = vld [vmem:[#allocation10 + $0x1a0] sm:$0xff]
    %v1291 = vld [vmem:[#allocation10 + $0x1a8] sm:$0xff]
    %v1292 = vld [vmem:[#allocation10 + $0x1b0] sm:$0xff]
    %v1293 = vld [vmem:[#allocation10 + $0x1b8] sm:$0xff]
    %v1294 = vld [vmem:[#allocation10 + $0x1c0] sm:$0xff]
    %v1295 = vld [vmem:[#allocation10 + $0x1c8] sm:$0xff]
    %v1296 = vld [vmem:[#allocation10 + $0x1d0] sm:$0xff]
    %v1297 = vld [vmem:[#allocation10 + $0x1d8] sm:$0xff]
    %v1298 = vld [vmem:[#allocation10 + $0x1e0] sm:$0xff]
    %v1299 = vld [vmem:[#allocation10 + $0x1e8] sm:$0xff]
    %v1300 = vld [vmem:[#allocation10 + $0x1f0] sm:$0xff]
    %v1301 = vld [vmem:[#allocation10 + $0x1f8] sm:$0xff]
    %v1302 = vld [vmem:[#allocation10 + $0x200] sm:$0xff]
    %v1303 = vld [vmem:[#allocation10 + $0x208] sm:$0xff]
    %v1304 = vld [vmem:[#allocation10 + $0x210] sm:$0xff]
    %v1305 = vld [vmem:[#allocation10 + $0x218] sm:$0xff]
    %v1306 = vld [vmem:[#allocation10 + $0x220] sm:$0xff]
    %v1307 = vld [vmem:[#allocation10 + $0x228] sm:$0xff]
    %v1308 = vld [vmem:[#allocation10 + $0x230] sm:$0xff]
    %v1309 = vld [vmem:[#allocation10 + $0x238] sm:$0xff]
    %v1310 = vld [vmem:[#allocation10 + $0x240] sm:$0xff]
    %v1311 = vld [vmem:[#allocation10 + $0x248] sm:$0xff]
    %v1312 = vld [vmem:[#allocation10 + $0x250] sm:$0xff]
    %v1313 = vld [vmem:[#allocation10 + $0x258] sm:$0xff]
    %v1314 = vld [vmem:[#allocation10 + $0x260] sm:$0xff]
    %v1315 = vld [vmem:[#allocation10 + $0x268] sm:$0xff]
    %v1316 = vld [vmem:[#allocation10 + $0x270] sm:$0xff]
    %v1317 = vld [vmem:[#allocation10 + $0x278] sm:$0xff]
    %v1318 = vld [vmem:[#allocation10 + $0x280] sm:$0xff]
    %v1319 = vld [vmem:[#allocation10 + $0x288] sm:$0xff]
    %v1320 = vld [vmem:[#allocation10 + $0x290] sm:$0xff]
    %v1321 = vld [vmem:[#allocation10 + $0x298] sm:$0xff]
    %v1322 = vld [vmem:[#allocation10 + $0x2a0] sm:$0xff]
    %v1323 = vld [vmem:[#allocation10 + $0x2a8] sm:$0xff]
    %v1324 = vld [vmem:[#allocation10 + $0x2b0] sm:$0xff]
    %v1325 = vld [vmem:[#allocation10 + $0x2b8] sm:$0xff]
    %v1326 = vld [vmem:[#allocation10 + $0x2c0] sm:$0xff]
    %v1327 = vld [vmem:[#allocation10 + $0x2c8] sm:$0xff]
    %v1328 = vld [vmem:[#allocation10 + $0x2d0] sm:$0xff]
    %v1329 = vld [vmem:[#allocation10 + $0x2d8] sm:$0xff]
    %v1330 = vld [vmem:[#allocation10 + $0x2e0] sm:$0xff]
    %v1331 = vld [vmem:[#allocation10 + $0x2e8] sm:$0xff]
    %v1332 = vld [vmem:[#allocation10 + $0x2f0] sm:$0xff]
    %v1333 = vld [vmem:[#allocation10 + $0x2f8] sm:$0xff]
    %v1334 = vld [vmem:[#allocation10 + $0x300] sm:$0xff]
    %v1335 = vld [vmem:[#allocation10 + $0x308] sm:$0xff]
    %v1336 = vld [vmem:[#allocation10 + $0x310] sm:$0xff]
    %v1337 = vld [vmem:[#allocation10 + $0x318] sm:$0xff]
    %v1338 = vld [vmem:[#allocation10 + $0x320] sm:$0xff]
    %v1339 = vld [vmem:[#allocation10 + $0x328] sm:$0xff]
    %v1340 = vld [vmem:[#allocation10 + $0x330] sm:$0xff]
    %v1341 = vld [vmem:[#allocation10 + $0x338] sm:$0xff]
    %v1342 = vld [vmem:[#allocation10 + $0x340] sm:$0xff]
    %v1343 = vld [vmem:[#allocation10 + $0x348] sm:$0xff]
    %v1344 = vld [vmem:[#allocation10 + $0x350] sm:$0xff]
    %v1345 = vld [vmem:[#allocation10 + $0x358] sm:$0xff]
    %v1346 = vld [vmem:[#allocation10 + $0x360] sm:$0xff]
    %v1347 = vld [vmem:[#allocation10 + $0x368] sm:$0xff]
    %v1348 = vld [vmem:[#allocation10 + $0x370] sm:$0xff]
    %v1349 = vld [vmem:[#allocation10 + $0x378] sm:$0xff]
    %v1350 = vld [vmem:[#allocation10 + $0x380] sm:$0xff]
    %v1351 = vld [vmem:[#allocation10 + $0x388] sm:$0xff]
    %v1352 = vld [vmem:[#allocation10 + $0x390] sm:$0xff]
    %v1353 = vld [vmem:[#allocation10 + $0x398] sm:$0xff]
    %v1354 = vld [vmem:[#allocation10 + $0x3a0] sm:$0xff]
    %v1355 = vld [vmem:[#allocation10 + $0x3a8] sm:$0xff]
    %v1356 = vld [vmem:[#allocation10 + $0x3b0] sm:$0xff]
    %v1357 = vld [vmem:[#allocation10 + $0x3b8] sm:$0xff]
    %v1358 = vld [vmem:[#allocation10 + $0x3c0] sm:$0xff]
    %v1359 = vld [vmem:[#allocation10 + $0x3c8] sm:$0xff]
    %v1360 = vld [vmem:[#allocation10 + $0x3d0] sm:$0xff]
    %v1361 = vld [vmem:[#allocation10 + $0x3d8] sm:$0xff]
    %v1362 = vld [vmem:[#allocation10 + $0x3e0] sm:$0xff]
    %v1363 = vld [vmem:[#allocation10 + $0x3e8] sm:$0xff]
    %v1364 = vld [vmem:[#allocation10 + $0x3f0] sm:$0xff]
    %v1365 = vld [vmem:[#allocation10 + $0x3f8] sm:$0xff]
    %v1494 = vunpack.c.l.b16 %v1238
    %v1495 = vunpack.c.h.b16 %v1238
    %v1496 = vunpack.c.l.b16 %v1239
    %v1497 = vunpack.c.h.b16 %v1239
    %v1498 = vunpack.c.l.b16 %v1240
    %v1499 = vunpack.c.h.b16 %v1240
    %v1500 = vunpack.c.l.b16 %v1241
    %v1501 = vunpack.c.h.b16 %v1241
    %v1502 = vunpack.c.l.b16 %v1242
    %v1503 = vunpack.c.h.b16 %v1242
    %v1504 = vunpack.c.l.b16 %v1243
    %v1505 = vunpack.c.h.b16 %v1243
    %v1506 = vunpack.c.l.b16 %v1244
    %v1507 = vunpack.c.h.b16 %v1244
    %v1508 = vunpack.c.l.b16 %v1245
    %v1509 = vunpack.c.h.b16 %v1245
    %v1510 = vunpack.c.l.b16 %v1246
    %v1511 = vunpack.c.h.b16 %v1246
    %v1512 = vunpack.c.l.b16 %v1247
    %v1513 = vunpack.c.h.b16 %v1247
    %v1514 = vunpack.c.l.b16 %v1248
    %v1515 = vunpack.c.h.b16 %v1248
    %v1516 = vunpack.c.l.b16 %v1249
    %v1517 = vunpack.c.h.b16 %v1249
    %v1518 = vunpack.c.l.b16 %v1250
    %v1519 = vunpack.c.h.b16 %v1250
    %v1520 = vunpack.c.l.b16 %v1251
    %v1521 = vunpack.c.h.b16 %v1251
    %v1522 = vunpack.c.l.b16 %v1252
    %v1523 = vunpack.c.h.b16 %v1252
    %v1524 = vunpack.c.l.b16 %v1253
    %v1525 = vunpack.c.h.b16 %v1253
    %v1526 = vunpack.c.l.b16 %v1254
    %v1527 = vunpack.c.h.b16 %v1254
    %v1528 = vunpack.c.l.b16 %v1255
    %v1529 = vunpack.c.h.b16 %v1255
    %v1530 = vunpack.c.l.b16 %v1256
    %v1531 = vunpack.c.h.b16 %v1256
    %v1532 = vunpack.c.l.b16 %v1257
    %v1533 = vunpack.c.h.b16 %v1257
    %v1534 = vunpack.c.l.b16 %v1258
    %v1535 = vunpack.c.h.b16 %v1258
    %v1536 = vunpack.c.l.b16 %v1259
    %v1537 = vunpack.c.h.b16 %v1259
    %v1538 = vunpack.c.l.b16 %v1260
    %v1539 = vunpack.c.h.b16 %v1260
    %v1540 = vunpack.c.l.b16 %v1261
    %v1541 = vunpack.c.h.b16 %v1261
    %v1542 = vunpack.c.l.b16 %v1262
    %v1543 = vunpack.c.h.b16 %v1262
    %v1544 = vunpack.c.l.b16 %v1263
    %v1545 = vunpack.c.h.b16 %v1263
    %v1546 = vunpack.c.l.b16 %v1264
    %v1547 = vunpack.c.h.b16 %v1264
    %v1548 = vunpack.c.l.b16 %v1265
    %v1549 = vunpack.c.h.b16 %v1265
    %v1550 = vunpack.c.l.b16 %v1266
    %v1551 = vunpack.c.h.b16 %v1266
    %v1552 = vunpack.c.l.b16 %v1267
    %v1553 = vunpack.c.h.b16 %v1267
    %v1554 = vunpack.c.l.b16 %v1268
    %v1555 = vunpack.c.h.b16 %v1268
    %v1556 = vunpack.c.l.b16 %v1269
    %v1557 = vunpack.c.h.b16 %v1269
    %v1558 = vunpack.c.l.b16 %v1270
    %v1559 = vunpack.c.h.b16 %v1270
    %v1560 = vunpack.c.l.b16 %v1271
    %v1561 = vunpack.c.h.b16 %v1271
    %v1562 = vunpack.c.l.b16 %v1272
    %v1563 = vunpack.c.h.b16 %v1272
    %v1564 = vunpack.c.l.b16 %v1273
    %v1565 = vunpack.c.h.b16 %v1273
    %v1566 = vunpack.c.l.b16 %v1274
    %v1567 = vunpack.c.h.b16 %v1274
    %v1568 = vunpack.c.l.b16 %v1275
    %v1569 = vunpack.c.h.b16 %v1275
    %v1570 = vunpack.c.l.b16 %v1276
    %v1571 = vunpack.c.h.b16 %v1276
    %v1572 = vunpack.c.l.b16 %v1277
    %v1573 = vunpack.c.h.b16 %v1277
    %v1574 = vunpack.c.l.b16 %v1278
    %v1575 = vunpack.c.h.b16 %v1278
    %v1576 = vunpack.c.l.b16 %v1279
    %v1577 = vunpack.c.h.b16 %v1279
    %v1578 = vunpack.c.l.b16 %v1280
    %v1579 = vunpack.c.h.b16 %v1280
    %v1580 = vunpack.c.l.b16 %v1281
    %v1581 = vunpack.c.h.b16 %v1281
    %v1582 = vunpack.c.l.b16 %v1282
    %v1583 = vunpack.c.h.b16 %v1282
    %v1584 = vunpack.c.l.b16 %v1283
    %v1585 = vunpack.c.h.b16 %v1283
    %v1586 = vunpack.c.l.b16 %v1284
    %v1587 = vunpack.c.h.b16 %v1284
    %v1588 = vunpack.c.l.b16 %v1285
    %v1589 = vunpack.c.h.b16 %v1285
    %v1590 = vunpack.c.l.b16 %v1286
    %v1591 = vunpack.c.h.b16 %v1286
    %v1592 = vunpack.c.l.b16 %v1287
    %v1593 = vunpack.c.h.b16 %v1287
    %v1594 = vunpack.c.l.b16 %v1288
    %v1595 = vunpack.c.h.b16 %v1288
    %v1596 = vunpack.c.l.b16 %v1289
    %v1597 = vunpack.c.h.b16 %v1289
    %v1598 = vunpack.c.l.b16 %v1290
    %v1599 = vunpack.c.h.b16 %v1290
    %v1600 = vunpack.c.l.b16 %v1291
    %v1601 = vunpack.c.h.b16 %v1291
    %v1602 = vunpack.c.l.b16 %v1292
    %v1603 = vunpack.c.h.b16 %v1292
    %v1604 = vunpack.c.l.b16 %v1293
    %v1605 = vunpack.c.h.b16 %v1293
    %v1606 = vunpack.c.l.b16 %v1294
    %v1607 = vunpack.c.h.b16 %v1294
    %v1608 = vunpack.c.l.b16 %v1295
    %v1609 = vunpack.c.h.b16 %v1295
    %v1610 = vunpack.c.l.b16 %v1296
    %v1611 = vunpack.c.h.b16 %v1296
    %v1612 = vunpack.c.l.b16 %v1297
    %v1613 = vunpack.c.h.b16 %v1297
    %v1614 = vunpack.c.l.b16 %v1298
    %v1615 = vunpack.c.h.b16 %v1298
    %v1616 = vunpack.c.l.b16 %v1299
    %v1617 = vunpack.c.h.b16 %v1299
    %v1618 = vunpack.c.l.b16 %v1300
    %v1619 = vunpack.c.h.b16 %v1300
    %v1620 = vunpack.c.l.b16 %v1301
    %v1621 = vunpack.c.h.b16 %v1301
    %v1622 = vunpack.c.l.b16 %v1302
    %v1623 = vunpack.c.h.b16 %v1302
    %v1624 = vunpack.c.l.b16 %v1303
    %v1625 = vunpack.c.h.b16 %v1303
    %v1626 = vunpack.c.l.b16 %v1304
    %v1627 = vunpack.c.h.b16 %v1304
    %v1628 = vunpack.c.l.b16 %v1305
    %v1629 = vunpack.c.h.b16 %v1305
    %v1630 = vunpack.c.l.b16 %v1306
    %v1631 = vunpack.c.h.b16 %v1306
    %v1632 = vunpack.c.l.b16 %v1307
    %v1633 = vunpack.c.h.b16 %v1307
    %v1634 = vunpack.c.l.b16 %v1308
    %v1635 = vunpack.c.h.b16 %v1308
    %v1636 = vunpack.c.l.b16 %v1309
    %v1637 = vunpack.c.h.b16 %v1309
    %v1638 = vunpack.c.l.b16 %v1310
    %v1639 = vunpack.c.h.b16 %v1310
    %v1640 = vunpack.c.l.b16 %v1311
    %v1641 = vunpack.c.h.b16 %v1311
    %v1642 = vunpack.c.l.b16 %v1312
    %v1643 = vunpack.c.h.b16 %v1312
    %v1644 = vunpack.c.l.b16 %v1313
    %v1645 = vunpack.c.h.b16 %v1313
    %v1646 = vunpack.c.l.b16 %v1314
    %v1647 = vunpack.c.h.b16 %v1314
    %v1648 = vunpack.c.l.b16 %v1315
    %v1649 = vunpack.c.h.b16 %v1315
    %v1650 = vunpack.c.l.b16 %v1316
    %v1651 = vunpack.c.h.b16 %v1316
    %v1652 = vunpack.c.l.b16 %v1317
    %v1653 = vunpack.c.h.b16 %v1317
    %v1654 = vunpack.c.l.b16 %v1318
    %v1655 = vunpack.c.h.b16 %v1318
    %v1656 = vunpack.c.l.b16 %v1319
    %v1657 = vunpack.c.h.b16 %v1319
    %v1658 = vunpack.c.l.b16 %v1320
    %v1659 = vunpack.c.h.b16 %v1320
    %v1660 = vunpack.c.l.b16 %v1321
    %v1661 = vunpack.c.h.b16 %v1321
    %v1662 = vunpack.c.l.b16 %v1322
    %v1663 = vunpack.c.h.b16 %v1322
    %v1664 = vunpack.c.l.b16 %v1323
    %v1665 = vunpack.c.h.b16 %v1323
    %v1666 = vunpack.c.l.b16 %v1324
    %v1667 = vunpack.c.h.b16 %v1324
    %v1668 = vunpack.c.l.b16 %v1325
    %v1669 = vunpack.c.h.b16 %v1325
    %v1670 = vunpack.c.l.b16 %v1326
    %v1671 = vunpack.c.h.b16 %v1326
    %v1672 = vunpack.c.l.b16 %v1327
    %v1673 = vunpack.c.h.b16 %v1327
    %v1674 = vunpack.c.l.b16 %v1328
    %v1675 = vunpack.c.h.b16 %v1328
    %v1676 = vunpack.c.l.b16 %v1329
    %v1677 = vunpack.c.h.b16 %v1329
    %v1678 = vunpack.c.l.b16 %v1330
    %v1679 = vunpack.c.h.b16 %v1330
    %v1680 = vunpack.c.l.b16 %v1331
    %v1681 = vunpack.c.h.b16 %v1331
    %v1682 = vunpack.c.l.b16 %v1332
    %v1683 = vunpack.c.h.b16 %v1332
    %v1684 = vunpack.c.l.b16 %v1333
    %v1685 = vunpack.c.h.b16 %v1333
    %v1686 = vunpack.c.l.b16 %v1334
    %v1687 = vunpack.c.h.b16 %v1334
    %v1688 = vunpack.c.l.b16 %v1335
    %v1689 = vunpack.c.h.b16 %v1335
    %v1690 = vunpack.c.l.b16 %v1336
    %v1691 = vunpack.c.h.b16 %v1336
    %v1692 = vunpack.c.l.b16 %v1337
    %v1693 = vunpack.c.h.b16 %v1337
    %v1694 = vunpack.c.l.b16 %v1338
    %v1695 = vunpack.c.h.b16 %v1338
    %v1696 = vunpack.c.l.b16 %v1339
    %v1697 = vunpack.c.h.b16 %v1339
    %v1698 = vunpack.c.l.b16 %v1340
    %v1699 = vunpack.c.h.b16 %v1340
    %v1700 = vunpack.c.l.b16 %v1341
    %v1701 = vunpack.c.h.b16 %v1341
    %v1702 = vunpack.c.l.b16 %v1342
    %v1703 = vunpack.c.h.b16 %v1342
    %v1704 = vunpack.c.l.b16 %v1343
    %v1705 = vunpack.c.h.b16 %v1343
    %v1706 = vunpack.c.l.b16 %v1344
    %v1707 = vunpack.c.h.b16 %v1344
    %v1708 = vunpack.c.l.b16 %v1345
    %v1709 = vunpack.c.h.b16 %v1345
    %v1710 = vunpack.c.l.b16 %v1346
    %v1711 = vunpack.c.h.b16 %v1346
    %v1712 = vunpack.c.l.b16 %v1347
    %v1713 = vunpack.c.h.b16 %v1347
    %v1714 = vunpack.c.l.b16 %v1348
    %v1715 = vunpack.c.h.b16 %v1348
    %v1716 = vunpack.c.l.b16 %v1349
    %v1717 = vunpack.c.h.b16 %v1349
    %v1718 = vunpack.c.l.b16 %v1350
    %v1719 = vunpack.c.h.b16 %v1350
    %v1720 = vunpack.c.l.b16 %v1351
    %v1721 = vunpack.c.h.b16 %v1351
    %v1722 = vunpack.c.l.b16 %v1352
    %v1723 = vunpack.c.h.b16 %v1352
    %v1724 = vunpack.c.l.b16 %v1353
    %v1725 = vunpack.c.h.b16 %v1353
    %v1726 = vunpack.c.l.b16 %v1354
    %v1727 = vunpack.c.h.b16 %v1354
    %v1728 = vunpack.c.l.b16 %v1355
    %v1729 = vunpack.c.h.b16 %v1355
    %v1730 = vunpack.c.l.b16 %v1356
    %v1731 = vunpack.c.h.b16 %v1356
    %v1732 = vunpack.c.l.b16 %v1357
    %v1733 = vunpack.c.h.b16 %v1357
    %v1734 = vunpack.c.l.b16 %v1358
    %v1735 = vunpack.c.h.b16 %v1358
    %v1736 = vunpack.c.l.b16 %v1359
    %v1737 = vunpack.c.h.b16 %v1359
    %v1738 = vunpack.c.l.b16 %v1360
    %v1739 = vunpack.c.h.b16 %v1360
    %v1740 = vunpack.c.l.b16 %v1361
    %v1741 = vunpack.c.h.b16 %v1361
    %v1742 = vunpack.c.l.b16 %v1362
    %v1743 = vunpack.c.h.b16 %v1362
    %v1744 = vunpack.c.l.b16 %v1363
    %v1745 = vunpack.c.h.b16 %v1363
    %v1746 = vunpack.c.l.b16 %v1364
    %v1747 = vunpack.c.h.b16 %v1364
    %v1748 = vunpack.c.l.b16 %v1365
    %v1749 = vunpack.c.h.b16 %v1365
    %v1750 = vpack.c.b16 %v1498, %v1494
    %v1751 = vpack.c.b16 %v1499, %v1495
    %v1752 = vpack.c.b16 %v1500, %v1496
    %v1753 = vpack.c.b16 %v1501, %v1497
    %v1754 = vpack.c.b16 %v1506, %v1502
    %v1755 = vpack.c.b16 %v1507, %v1503
    %v1756 = vpack.c.b16 %v1508, %v1504
    %v1757 = vpack.c.b16 %v1509, %v1505
    %v1758 = vpack.c.b16 %v1514, %v1510
    %v1759 = vpack.c.b16 %v1515, %v1511
    %v1760 = vpack.c.b16 %v1516, %v1512
    %v1761 = vpack.c.b16 %v1517, %v1513
    %v1762 = vpack.c.b16 %v1522, %v1518
    %v1763 = vpack.c.b16 %v1523, %v1519
    %v1764 = vpack.c.b16 %v1524, %v1520
    %v1765 = vpack.c.b16 %v1525, %v1521
    %v1766 = vpack.c.b16 %v1530, %v1526
    %v1767 = vpack.c.b16 %v1531, %v1527
    %v1768 = vpack.c.b16 %v1532, %v1528
    %v1769 = vpack.c.b16 %v1533, %v1529
    %v1770 = vpack.c.b16 %v1538, %v1534
    %v1771 = vpack.c.b16 %v1539, %v1535
    %v1772 = vpack.c.b16 %v1540, %v1536
    %v1773 = vpack.c.b16 %v1541, %v1537
    %v1774 = vpack.c.b16 %v1546, %v1542
    %v1775 = vpack.c.b16 %v1547, %v1543
    %v1776 = vpack.c.b16 %v1548, %v1544
    %v1777 = vpack.c.b16 %v1549, %v1545
    %v1778 = vpack.c.b16 %v1554, %v1550
    %v1779 = vpack.c.b16 %v1555, %v1551
    %v1780 = vpack.c.b16 %v1556, %v1552
    %v1781 = vpack.c.b16 %v1557, %v1553
    %v1782 = vpack.c.b16 %v1562, %v1558
    %v1783 = vpack.c.b16 %v1563, %v1559
    %v1784 = vpack.c.b16 %v1564, %v1560
    %v1785 = vpack.c.b16 %v1565, %v1561
    %v1786 = vpack.c.b16 %v1570, %v1566
    %v1787 = vpack.c.b16 %v1571, %v1567
    %v1788 = vpack.c.b16 %v1572, %v1568
    %v1789 = vpack.c.b16 %v1573, %v1569
    %v1790 = vpack.c.b16 %v1578, %v1574
    %v1791 = vpack.c.b16 %v1579, %v1575
    %v1792 = vpack.c.b16 %v1580, %v1576
    %v1793 = vpack.c.b16 %v1581, %v1577
    %v1794 = vpack.c.b16 %v1586, %v1582
    %v1795 = vpack.c.b16 %v1587, %v1583
    %v1796 = vpack.c.b16 %v1588, %v1584
    %v1797 = vpack.c.b16 %v1589, %v1585
    %v1798 = vpack.c.b16 %v1594, %v1590
    %v1799 = vpack.c.b16 %v1595, %v1591
    %v1800 = vpack.c.b16 %v1596, %v1592
    %v1801 = vpack.c.b16 %v1597, %v1593
    %v1802 = vpack.c.b16 %v1602, %v1598
    %v1803 = vpack.c.b16 %v1603, %v1599
    %v1804 = vpack.c.b16 %v1604, %v1600
    %v1805 = vpack.c.b16 %v1605, %v1601
    %v1806 = vpack.c.b16 %v1610, %v1606
    %v1807 = vpack.c.b16 %v1611, %v1607
    %v1808 = vpack.c.b16 %v1612, %v1608
    %v1809 = vpack.c.b16 %v1613, %v1609
    %v1810 = vpack.c.b16 %v1618, %v1614
    %v1811 = vpack.c.b16 %v1619, %v1615
    %v1812 = vpack.c.b16 %v1620, %v1616
    %v1813 = vpack.c.b16 %v1621, %v1617
    %v1814 = vpack.c.b16 %v1626, %v1622
    %v1815 = vpack.c.b16 %v1627, %v1623
    %v1816 = vpack.c.b16 %v1628, %v1624
    %v1817 = vpack.c.b16 %v1629, %v1625
    %v1818 = vpack.c.b16 %v1634, %v1630
    %v1819 = vpack.c.b16 %v1635, %v1631
    %v1820 = vpack.c.b16 %v1636, %v1632
    %v1821 = vpack.c.b16 %v1637, %v1633
    %v1822 = vpack.c.b16 %v1642, %v1638
    %v1823 = vpack.c.b16 %v1643, %v1639
    %v1824 = vpack.c.b16 %v1644, %v1640
    %v1825 = vpack.c.b16 %v1645, %v1641
    %v1826 = vpack.c.b16 %v1650, %v1646
    %v1827 = vpack.c.b16 %v1651, %v1647
    %v1828 = vpack.c.b16 %v1652, %v1648
    %v1829 = vpack.c.b16 %v1653, %v1649
    %v1830 = vpack.c.b16 %v1658, %v1654
    %v1831 = vpack.c.b16 %v1659, %v1655
    %v1832 = vpack.c.b16 %v1660, %v1656
    %v1833 = vpack.c.b16 %v1661, %v1657
    %v1834 = vpack.c.b16 %v1666, %v1662
    %v1835 = vpack.c.b16 %v1667, %v1663
    %v1836 = vpack.c.b16 %v1668, %v1664
    %v1837 = vpack.c.b16 %v1669, %v1665
    %v1838 = vpack.c.b16 %v1674, %v1670
    %v1839 = vpack.c.b16 %v1675, %v1671
    %v1840 = vpack.c.b16 %v1676, %v1672
    %v1841 = vpack.c.b16 %v1677, %v1673
    %v1842 = vpack.c.b16 %v1682, %v1678
    %v1843 = vpack.c.b16 %v1683, %v1679
    %v1844 = vpack.c.b16 %v1684, %v1680
    %v1845 = vpack.c.b16 %v1685, %v1681
    %v1846 = vpack.c.b16 %v1690, %v1686
    %v1847 = vpack.c.b16 %v1691, %v1687
    %v1848 = vpack.c.b16 %v1692, %v1688
    %v1849 = vpack.c.b16 %v1693, %v1689
    %v1850 = vpack.c.b16 %v1698, %v1694
    %v1851 = vpack.c.b16 %v1699, %v1695
    %v1852 = vpack.c.b16 %v1700, %v1696
    %v1853 = vpack.c.b16 %v1701, %v1697
    %v1854 = vpack.c.b16 %v1706, %v1702
    %v1855 = vpack.c.b16 %v1707, %v1703
    %v1856 = vpack.c.b16 %v1708, %v1704
    %v1857 = vpack.c.b16 %v1709, %v1705
    %v1858 = vpack.c.b16 %v1714, %v1710
    %v1859 = vpack.c.b16 %v1715, %v1711
    %v1860 = vpack.c.b16 %v1716, %v1712
    %v1861 = vpack.c.b16 %v1717, %v1713
    %v1862 = vpack.c.b16 %v1722, %v1718
    %v1863 = vpack.c.b16 %v1723, %v1719
    %v1864 = vpack.c.b16 %v1724, %v1720
    %v1865 = vpack.c.b16 %v1725, %v1721
    %v1866 = vpack.c.b16 %v1730, %v1726
    %v1867 = vpack.c.b16 %v1731, %v1727
    %v1868 = vpack.c.b16 %v1732, %v1728
    %v1869 = vpack.c.b16 %v1733, %v1729
    %v1870 = vpack.c.b16 %v1738, %v1734
    %v1871 = vpack.c.b16 %v1739, %v1735
    %v1872 = vpack.c.b16 %v1740, %v1736
    %v1873 = vpack.c.b16 %v1741, %v1737
    %v1874 = vpack.c.b16 %v1746, %v1742
    %v1875 = vpack.c.b16 %v1747, %v1743
    %v1876 = vpack.c.b16 %v1748, %v1744
    %v1877 = vpack.c.b16 %v1749, %v1745
    %2006 = vmatprep.subr.bf16.mxu0 %v1751
    %2007 = vmatpush1.bf16.msra.mxu0 %v1750
    %2008 = vmatprep.subr.bf16.mxu0 %v1755
    %2009 = vmatpush1.bf16.msra.mxu0 %v1754
    %2010 = vmatprep.subr.bf16.mxu0 %v1759
    %2011 = vmatpush1.bf16.msra.mxu0 %v1758
    %2012 = vmatprep.subr.bf16.mxu0 %v1763
    %2013 = vmatpush1.bf16.msra.mxu0 %v1762
    %2014 = vmatprep.subr.bf16.mxu0 %v1767
    %2015 = vmatpush1.bf16.msra.mxu0 %v1766
    %2016 = vmatprep.subr.bf16.mxu0 %v1771
    %2017 = vmatpush1.bf16.msra.mxu0 %v1770
    %2018 = vmatprep.subr.bf16.mxu0 %v1775
    %2019 = vmatpush1.bf16.msra.mxu0 %v1774
    %2020 = vmatprep.subr.bf16.mxu0 %v1779
    %2021 = vmatpush1.bf16.msra.mxu0 %v1778
    %2022 = vmatprep.subr.bf16.mxu0 %v1783
    %2023 = vmatpush1.bf16.msra.mxu0 %v1782
    %2024 = vmatprep.subr.bf16.mxu0 %v1787
    %2025 = vmatpush1.bf16.msra.mxu0 %v1786
    %2026 = vmatprep.subr.bf16.mxu0 %v1791
    %2027 = vmatpush1.bf16.msra.mxu0 %v1790
    %2028 = vmatprep.subr.bf16.mxu0 %v1795
    %2029 = vmatpush1.bf16.msra.mxu0 %v1794
    %2030 = vmatprep.subr.bf16.mxu0 %v1799
    %2031 = vmatpush1.bf16.msra.mxu0 %v1798
    %2032 = vmatprep.subr.bf16.mxu0 %v1803
    %2033 = vmatpush1.bf16.msra.mxu0 %v1802
    %2034 = vmatprep.subr.bf16.mxu0 %v1807
    %2035 = vmatpush1.bf16.msra.mxu0 %v1806
    %2036 = vmatprep.subr.bf16.mxu0 %v1811
    %2037 = vmatpush1.bf16.msra.mxu0 %v1810
    %2038 = vmatprep.mubr.bf16.mxu0 %v1235
    %2039 = vmatmul.mubr.bf16.gmra.mrb[0].mxu0 %v1234
    %v2040 = vpop.f32.mrb[0].mxu0
    %v2041 = vadd.f32 0.0, %v2040
    %v2042 = vpop.f32.mrb[0].mxu0
    %v2043 = vadd.f32 0.0, %v2042
    %v2044 = vpop.f32.mrb[0].mxu0
    %v2045 = vadd.f32 0.0, %v2044
    %v2046 = vpop.f32.mrb[0].mxu0
    %v2047 = vadd.f32 0.0, %v2046
    %2048 = vdwg.mxu0
    %2049 = vmatprep.subr.bf16.mxu0 %v1815
    %2050 = vmatpush1.bf16.msra.mxu0 %v1814
    %2051 = vmatprep.subr.bf16.mxu0 %v1819
    %2052 = vmatpush1.bf16.msra.mxu0 %v1818
    %2053 = vmatprep.subr.bf16.mxu0 %v1823
    %2054 = vmatpush1.bf16.msra.mxu0 %v1822
    %2055 = vmatprep.subr.bf16.mxu0 %v1827
    %2056 = vmatpush1.bf16.msra.mxu0 %v1826
    %2057 = vmatprep.subr.bf16.mxu0 %v1831
    %2058 = vmatpush1.bf16.msra.mxu0 %v1830
    %2059 = vmatprep.subr.bf16.mxu0 %v1835
    %2060 = vmatpush1.bf16.msra.mxu0 %v1834
    %2061 = vmatprep.subr.bf16.mxu0 %v1839
    %2062 = vmatpush1.bf16.msra.mxu0 %v1838
    %2063 = vmatprep.subr.bf16.mxu0 %v1843
    %2064 = vmatpush1.bf16.msra.mxu0 %v1842
    %2065 = vmatprep.subr.bf16.mxu0 %v1847
    %2066 = vmatpush1.bf16.msra.mxu0 %v1846
    %2067 = vmatprep.subr.bf16.mxu0 %v1851
    %2068 = vmatpush1.bf16.msra.mxu0 %v1850
    %2069 = vmatprep.subr.bf16.mxu0 %v1855
    %2070 = vmatpush1.bf16.msra.mxu0 %v1854
    %2071 = vmatprep.subr.bf16.mxu0 %v1859
    %2072 = vmatpush1.bf16.msra.mxu0 %v1858
    %2073 = vmatprep.subr.bf16.mxu0 %v1863
    %2074 = vmatpush1.bf16.msra.mxu0 %v1862
    %2075 = vmatprep.subr.bf16.mxu0 %v1867
    %2076 = vmatpush1.bf16.msra.mxu0 %v1866
    %2077 = vmatprep.subr.bf16.mxu0 %v1871
    %2078 = vmatpush1.bf16.msra.mxu0 %v1870
    %2079 = vmatprep.subr.bf16.mxu0 %v1875
    %2080 = vmatpush1.bf16.msra.mxu0 %v1874
    %2081 = vmatprep.mubr.bf16.mxu0 %v1237
    %2082 = vmatmul.mubr.bf16.gmra.mrb[0].mxu0 %v1236
    %v2083 = vpop.f32.mrb[0].mxu0
    %v2084 = vadd.f32 %v2041, %v2083
    %v2085 = vpop.f32.mrb[0].mxu0
    %v2086 = vadd.f32 %v2043, %v2085
    %v2087 = vpop.f32.mrb[0].mxu0
    %v2088 = vadd.f32 %v2045, %v2087
    %v2089 = vpop.f32.mrb[0].mxu0
    %v2090 = vadd.f32 %v2047, %v2089
    %2091 = vdwg.mxu0
    %2092 = vmatprep.subr.bf16.mxu0 %v1753
    %2093 = vmatpush1.bf16.msra.mxu0 %v1752
    %2094 = vmatprep.subr.bf16.mxu0 %v1757
    %2095 = vmatpush1.bf16.msra.mxu0 %v1756
    %2096 = vmatprep.subr.bf16.mxu0 %v1761
    %2097 = vmatpush1.bf16.msra.mxu0 %v1760
    %2098 = vmatprep.subr.bf16.mxu0 %v1765
    %2099 = vmatpush1.bf16.msra.mxu0 %v1764
    %2100 = vmatprep.subr.bf16.mxu0 %v1769
    %2101 = vmatpush1.bf16.msra.mxu0 %v1768
    %2102 = vmatprep.subr.bf16.mxu0 %v1773
    %2103 = vmatpush1.bf16.msra.mxu0 %v1772
    %2104 = vmatprep.subr.bf16.mxu0 %v1777
    %2105 = vmatpush1.bf16.msra.mxu0 %v1776
    %2106 = vmatprep.subr.bf16.mxu0 %v1781
    %2107 = vmatpush1.bf16.msra.mxu0 %v1780
    %2108 = vmatprep.subr.bf16.mxu0 %v1785
    %2109 = vmatpush1.bf16.msra.mxu0 %v1784
    %2110 = vmatprep.subr.bf16.mxu0 %v1789
    %2111 = vmatpush1.bf16.msra.mxu0 %v1788
    %2112 = vmatprep.subr.bf16.mxu0 %v1793
    %2113 = vmatpush1.bf16.msra.mxu0 %v1792
    %2114 = vmatprep.subr.bf16.mxu0 %v1797
    %2115 = vmatpush1.bf16.msra.mxu0 %v1796
    %2116 = vmatprep.subr.bf16.mxu0 %v1801
    %2117 = vmatpush1.bf16.msra.mxu0 %v1800
    %2118 = vmatprep.subr.bf16.mxu0 %v1805
    %2119 = vmatpush1.bf16.msra.mxu0 %v1804
    %2120 = vmatprep.subr.bf16.mxu0 %v1809
    %2121 = vmatpush1.bf16.msra.mxu0 %v1808
    %2122 = vmatprep.subr.bf16.mxu0 %v1813
    %2123 = vmatpush1.bf16.msra.mxu0 %v1812
    %2124 = vmatprep.mubr.bf16.mxu0 %v1235
    %2125 = vmatmul.mubr.bf16.gmra.mrb[0].mxu0 %v1234
    %v2126 = vpop.f32.mrb[0].mxu0
    %v2127 = vadd.f32 0.0, %v2126
    %v2128 = vpop.f32.mrb[0].mxu0
    %v2129 = vadd.f32 0.0, %v2128
    %v2130 = vpop.f32.mrb[0].mxu0
    %v2131 = vadd.f32 0.0, %v2130
    %v2132 = vpop.f32.mrb[0].mxu0
    %v2133 = vadd.f32 0.0, %v2132
    %2134 = vdwg.mxu0
    %2135 = vmatprep.subr.bf16.mxu0 %v1817
    %2136 = vmatpush1.bf16.msra.mxu0 %v1816
    %2137 = vmatprep.subr.bf16.mxu0 %v1821
    %2138 = vmatpush1.bf16.msra.mxu0 %v1820
    %2139 = vmatprep.subr.bf16.mxu0 %v1825
    %2140 = vmatpush1.bf16.msra.mxu0 %v1824
    %2141 = vmatprep.subr.bf16.mxu0 %v1829
    %2142 = vmatpush1.bf16.msra.mxu0 %v1828
    %2143 = vmatprep.subr.bf16.mxu0 %v1833
    %2144 = vmatpush1.bf16.msra.mxu0 %v1832
    %2145 = vmatprep.subr.bf16.mxu0 %v1837
    %2146 = vmatpush1.bf16.msra.mxu0 %v1836
    %2147 = vmatprep.subr.bf16.mxu0 %v1841
    %2148 = vmatpush1.bf16.msra.mxu0 %v1840
    %2149 = vmatprep.subr.bf16.mxu0 %v1845
    %2150 = vmatpush1.bf16.msra.mxu0 %v1844
    %2151 = vmatprep.subr.bf16.mxu0 %v1849
    %2152 = vmatpush1.bf16.msra.mxu0 %v1848
    %2153 = vmatprep.subr.bf16.mxu0 %v1853
    %2154 = vmatpush1.bf16.msra.mxu0 %v1852
    %2155 = vmatprep.subr.bf16.mxu0 %v1857
    %2156 = vmatpush1.bf16.msra.mxu0 %v1856
    %2157 = vmatprep.subr.bf16.mxu0 %v1861
    %2158 = vmatpush1.bf16.msra.mxu0 %v1860
    %2159 = vmatprep.subr.bf16.mxu0 %v1865
    %2160 = vmatpush1.bf16.msra.mxu0 %v1864
    %2161 = vmatprep.subr.bf16.mxu0 %v1869
    %2162 = vmatpush1.bf16.msra.mxu0 %v1868
    %2163 = vmatprep.subr.bf16.mxu0 %v1873
    %2164 = vmatpush1.bf16.msra.mxu0 %v1872
    %2165 = vmatprep.subr.bf16.mxu0 %v1877
    %2166 = vmatpush1.bf16.msra.mxu0 %v1876
    %2167 = vmatprep.mubr.bf16.mxu0 %v1237
    %2168 = vmatmul.mubr.bf16.gmra.mrb[0].mxu0 %v1236
    %v2169 = vpop.f32.mrb[0].mxu0
    %v2170 = vadd.f32 %v2127, %v2169
    %v2171 = vpop.f32.mrb[0].mxu0
    %v2172 = vadd.f32 %v2129, %v2171
    %v2173 = vpop.f32.mrb[0].mxu0
    %v2174 = vadd.f32 %v2131, %v2173
    %v2175 = vpop.f32.mrb[0].mxu0
    %v2176 = vadd.f32 %v2133, %v2175
    %2177 = vdwg.mxu0
    %v2182 = vcombine.low %v1230, %v1231
    %v2183 = vcombine.low %v1232, %v1233
    %v2185 = vunpack.c.l.s4 1966171168
    %v2186 = vunpack.c.0.s8 %v2185
    %v2187 = vlaneseq
    %v2188 = vshrl.u32 %v2187, 7
    %v2189 = vsub.s32 %v2186, %v2188
    %v2190 = vrot.slane %v2182, %v2189
    %v2192 = vunpack.c.l.s4 1966171168
    %v2193 = vunpack.c.0.s8 %v2192
    %v2194 = vlaneseq
    %v2195 = vshrl.u32 %v2194, 7
    %v2196 = vsub.s32 %v2193, %v2195
    %v2197 = vrot.slane %v2183, %v2196
    %v2198 = vcombine.low %v2190, %v2197
    %v2199 = vcombine.high %v2190, %v2197
    %v2201 = vunpack.c.l.s4 1966171168
    %v2202 = vunpack.c.0.s8 %v2201
    %v2203 = vlaneseq
    %v2204 = vshrl.u32 %v2203, 7
    %v2205 = vsub.s32 %v2202, %v2204
    %v2206 = vrot.slane %v2198, %v2205
    %v2208 = vunpack.c.l.s4 1966171168
    %v2209 = vunpack.c.0.s8 %v2208
    %v2210 = vlaneseq
    %v2211 = vshrl.u32 %v2210, 7
    %v2212 = vsub.s32 %v2209, %v2211
    %v2213 = vrot.slane %v2199, %v2212
    %v2214 = vlaneseq
    %v2215 = vshrl.u32 %v2214, 7
    %v2216 = vsub.s32 0, %v2215
    %v2217 = vrot.slane %v2206, %v2216
    %v2218 = vlaneseq
    %v2219 = vshrl.u32 %v2218, 7
    %v2220 = vsub.s32 1, %v2219
    %v2221 = vrot.slane %v2206, %v2220
    %v2222 = vlaneseq
    %v2223 = vshrl.u32 %v2222, 7
    %v2224 = vsub.s32 2, %v2223
    %v2225 = vrot.slane %v2206, %v2224
    %v2226 = vlaneseq
    %v2227 = vshrl.u32 %v2226, 7
    %v2228 = vsub.s32 3, %v2227
    %v2229 = vrot.slane %v2206, %v2228
    %v2230 = vlaneseq
    %v2231 = vshrl.u32 %v2230, 7
    %v2232 = vsub.s32 0, %v2231
    %v2233 = vrot.slane %v2213, %v2232
    %v2234 = vlaneseq
    %v2235 = vshrl.u32 %v2234, 7
    %v2236 = vsub.s32 1, %v2235
    %v2237 = vrot.slane %v2213, %v2236
    %v2238 = vlaneseq
    %v2239 = vshrl.u32 %v2238, 7
    %v2240 = vsub.s32 2, %v2239
    %v2241 = vrot.slane %v2213, %v2240
    %v2242 = vlaneseq
    %v2243 = vshrl.u32 %v2242, 7
    %v2244 = vsub.s32 3, %v2243
    %v2245 = vrot.slane %v2213, %v2244
    %v2254 = vsub.f32 %v125, %v2217
    %v2255 = vsub.f32 %v126, %v2221
    %v2256 = vsub.f32 %v127, %v2225
    %v2257 = vsub.f32 %v128, %v2229
    %v2258 = vsub.f32 %v129, %v2233
    %v2259 = vsub.f32 %v130, %v2237
    %v2260 = vsub.f32 %v131, %v2241
    %v2261 = vsub.f32 %v132, %v2245
    %v2262 = vmul.f32 %v117, %v2254
    %v2263 = vmul.f32 %v118, %v2255
    %v2264 = vmul.f32 %v121, %v2258
    %v2265 = vmul.f32 %v122, %v2259
    %v2266 = vmul.f32 %v119, %v2256
    %v2267 = vmul.f32 %v120, %v2257
    %v2268 = vmul.f32 %v123, %v2260
    %v2269 = vmul.f32 %v124, %v2261
    %v2270 = vsub.f32 %v2262, %v2266
    %v2271 = vsub.f32 %v2263, %v2267
    %v2272 = vsub.f32 %v2264, %v2268
    %v2273 = vsub.f32 %v2265, %v2269
    %v2274 = vmul.f32 %v117, %v2256
    %v2275 = vmul.f32 %v118, %v2257
    %v2276 = vmul.f32 %v121, %v2260
    %v2277 = vmul.f32 %v122, %v2261
    %v2278 = vmul.f32 %v119, %v2254
    %v2279 = vmul.f32 %v120, %v2255
    %v2280 = vmul.f32 %v123, %v2258
    %v2281 = vmul.f32 %v124, %v2259
    %v2282 = vadd.f32 %v2274, %v2278
    %v2283 = vadd.f32 %v2275, %v2279
    %v2284 = vadd.f32 %v2276, %v2280
    %v2285 = vadd.f32 %v2277, %v2281
    %v2286 = vadd.f32 %v2217, %v2270
    %v2287 = vadd.f32 %v2221, %v2271
    %v2288 = vadd.f32 %v2225, %v2282
    %v2289 = vadd.f32 %v2229, %v2283
    %v2290 = vadd.f32 %v2233, %v2272
    %v2291 = vadd.f32 %v2237, %v2273
    %v2292 = vadd.f32 %v2241, %v2284
    %v2293 = vadd.f32 %v2245, %v2285
    %v2294 = vpack.c.bf16 %v2290, %v2286
    %v2295 = vpack.c.bf16 %v2291, %v2287
    %v2296 = vpack.c.bf16 %v2292, %v2288
    %v2297 = vpack.c.bf16 %v2293, %v2289
    %v2298 = vpack.c.bf16 %v1230, %v1230
    %v2299 = vpack.c.bf16 %v1231, %v1231
    %v2300 = vpack.c.bf16 %v1232, %v1232
    %v2301 = vpack.c.bf16 %v1233, %v1233
    %v2302 = vld [vmem:[#allocation11] sm:$0xff]
    %v2303 = vld [vmem:[#allocation11 + $0x8] sm:$0xff]
    %v2304 = vld [vmem:[#allocation11 + $0x10] sm:$0xff]
    %v2305 = vld [vmem:[#allocation11 + $0x18] sm:$0xff]
    %v2306 = vld [vmem:[#allocation11 + $0x20] sm:$0xff]
    %v2307 = vld [vmem:[#allocation11 + $0x28] sm:$0xff]
    %v2308 = vld [vmem:[#allocation11 + $0x30] sm:$0xff]
    %v2309 = vld [vmem:[#allocation11 + $0x38] sm:$0xff]
    %v2310 = vld [vmem:[#allocation11 + $0x40] sm:$0xff]
    %v2311 = vld [vmem:[#allocation11 + $0x48] sm:$0xff]
    %v2312 = vld [vmem:[#allocation11 + $0x50] sm:$0xff]
    %v2313 = vld [vmem:[#allocation11 + $0x58] sm:$0xff]
    %v2314 = vld [vmem:[#allocation11 + $0x60] sm:$0xff]
    %v2315 = vld [vmem:[#allocation11 + $0x68] sm:$0xff]
    %v2316 = vld [vmem:[#allocation11 + $0x70] sm:$0xff]
    %v2317 = vld [vmem:[#allocation11 + $0x78] sm:$0xff]
    %v2318 = vld [vmem:[#allocation11 + $0x80] sm:$0xff]
    %v2319 = vld [vmem:[#allocation11 + $0x88] sm:$0xff]
    %v2320 = vld [vmem:[#allocation11 + $0x90] sm:$0xff]
    %v2321 = vld [vmem:[#allocation11 + $0x98] sm:$0xff]
    %v2322 = vld [vmem:[#allocation11 + $0xa0] sm:$0xff]
    %v2323 = vld [vmem:[#allocation11 + $0xa8] sm:$0xff]
    %v2324 = vld [vmem:[#allocation11 + $0xb0] sm:$0xff]
    %v2325 = vld [vmem:[#allocation11 + $0xb8] sm:$0xff]
    %v2326 = vld [vmem:[#allocation11 + $0xc0] sm:$0xff]
    %v2327 = vld [vmem:[#allocation11 + $0xc8] sm:$0xff]
    %v2328 = vld [vmem:[#allocation11 + $0xd0] sm:$0xff]
    %v2329 = vld [vmem:[#allocation11 + $0xd8] sm:$0xff]
    %v2330 = vld [vmem:[#allocation11 + $0xe0] sm:$0xff]
    %v2331 = vld [vmem:[#allocation11 + $0xe8] sm:$0xff]
    %v2332 = vld [vmem:[#allocation11 + $0xf0] sm:$0xff]
    %v2333 = vld [vmem:[#allocation11 + $0xf8] sm:$0xff]
    %v2334 = vld [vmem:[#allocation11 + $0x100] sm:$0xff]
    %v2335 = vld [vmem:[#allocation11 + $0x108] sm:$0xff]
    %v2336 = vld [vmem:[#allocation11 + $0x110] sm:$0xff]
    %v2337 = vld [vmem:[#allocation11 + $0x118] sm:$0xff]
    %v2338 = vld [vmem:[#allocation11 + $0x120] sm:$0xff]
    %v2339 = vld [vmem:[#allocation11 + $0x128] sm:$0xff]
    %v2340 = vld [vmem:[#allocation11 + $0x130] sm:$0xff]
    %v2341 = vld [vmem:[#allocation11 + $0x138] sm:$0xff]
    %v2342 = vld [vmem:[#allocation11 + $0x140] sm:$0xff]
    %v2343 = vld [vmem:[#allocation11 + $0x148] sm:$0xff]
    %v2344 = vld [vmem:[#allocation11 + $0x150] sm:$0xff]
    %v2345 = vld [vmem:[#allocation11 + $0x158] sm:$0xff]
    %v2346 = vld [vmem:[#allocation11 + $0x160] sm:$0xff]
    %v2347 = vld [vmem:[#allocation11 + $0x168] sm:$0xff]
    %v2348 = vld [vmem:[#allocation11 + $0x170] sm:$0xff]
    %v2349 = vld [vmem:[#allocation11 + $0x178] sm:$0xff]
    %v2350 = vld [vmem:[#allocation11 + $0x180] sm:$0xff]
    %v2351 = vld [vmem:[#allocation11 + $0x188] sm:$0xff]
    %v2352 = vld [vmem:[#allocation11 + $0x190] sm:$0xff]
    %v2353 = vld [vmem:[#allocation11 + $0x198] sm:$0xff]
    %v2354 = vld [vmem:[#allocation11 + $0x1a0] sm:$0xff]
    %v2355 = vld [vmem:[#allocation11 + $0x1a8] sm:$0xff]
    %v2356 = vld [vmem:[#allocation11 + $0x1b0] sm:$0xff]
    %v2357 = vld [vmem:[#allocation11 + $0x1b8] sm:$0xff]
    %v2358 = vld [vmem:[#allocation11 + $0x1c0] sm:$0xff]
    %v2359 = vld [vmem:[#allocation11 + $0x1c8] sm:$0xff]
    %v2360 = vld [vmem:[#allocation11 + $0x1d0] sm:$0xff]
    %v2361 = vld [vmem:[#allocation11 + $0x1d8] sm:$0xff]
    %v2362 = vld [vmem:[#allocation11 + $0x1e0] sm:$0xff]
    %v2363 = vld [vmem:[#allocation11 + $0x1e8] sm:$0xff]
    %v2364 = vld [vmem:[#allocation11 + $0x1f0] sm:$0xff]
    %v2365 = vld [vmem:[#allocation11 + $0x1f8] sm:$0xff]
    %v2366 = vld [vmem:[#allocation11 + $0x200] sm:$0xff]
    %v2367 = vld [vmem:[#allocation11 + $0x208] sm:$0xff]
    %v2368 = vld [vmem:[#allocation11 + $0x210] sm:$0xff]
    %v2369 = vld [vmem:[#allocation11 + $0x218] sm:$0xff]
    %v2370 = vld [vmem:[#allocation11 + $0x220] sm:$0xff]
    %v2371 = vld [vmem:[#allocation11 + $0x228] sm:$0xff]
    %v2372 = vld [vmem:[#allocation11 + $0x230] sm:$0xff]
    %v2373 = vld [vmem:[#allocation11 + $0x238] sm:$0xff]
    %v2374 = vld [vmem:[#allocation11 + $0x240] sm:$0xff]
    %v2375 = vld [vmem:[#allocation11 + $0x248] sm:$0xff]
    %v2376 = vld [vmem:[#allocation11 + $0x250] sm:$0xff]
    %v2377 = vld [vmem:[#allocation11 + $0x258] sm:$0xff]
    %v2378 = vld [vmem:[#allocation11 + $0x260] sm:$0xff]
    %v2379 = vld [vmem:[#allocation11 + $0x268] sm:$0xff]
    %v2380 = vld [vmem:[#allocation11 + $0x270] sm:$0xff]
    %v2381 = vld [vmem:[#allocation11 + $0x278] sm:$0xff]
    %v2382 = vld [vmem:[#allocation11 + $0x280] sm:$0xff]
    %v2383 = vld [vmem:[#allocation11 + $0x288] sm:$0xff]
    %v2384 = vld [vmem:[#allocation11 + $0x290] sm:$0xff]
    %v2385 = vld [vmem:[#allocation11 + $0x298] sm:$0xff]
    %v2386 = vld [vmem:[#allocation11 + $0x2a0] sm:$0xff]
    %v2387 = vld [vmem:[#allocation11 + $0x2a8] sm:$0xff]
    %v2388 = vld [vmem:[#allocation11 + $0x2b0] sm:$0xff]
    %v2389 = vld [vmem:[#allocation11 + $0x2b8] sm:$0xff]
    %v2390 = vld [vmem:[#allocation11 + $0x2c0] sm:$0xff]
    %v2391 = vld [vmem:[#allocation11 + $0x2c8] sm:$0xff]
    %v2392 = vld [vmem:[#allocation11 + $0x2d0] sm:$0xff]
    %v2393 = vld [vmem:[#allocation11 + $0x2d8] sm:$0xff]
    %v2394 = vld [vmem:[#allocation11 + $0x2e0] sm:$0xff]
    %v2395 = vld [vmem:[#allocation11 + $0x2e8] sm:$0xff]
    %v2396 = vld [vmem:[#allocation11 + $0x2f0] sm:$0xff]
    %v2397 = vld [vmem:[#allocation11 + $0x2f8] sm:$0xff]
    %v2398 = vld [vmem:[#allocation11 + $0x300] sm:$0xff]
    %v2399 = vld [vmem:[#allocation11 + $0x308] sm:$0xff]
    %v2400 = vld [vmem:[#allocation11 + $0x310] sm:$0xff]
    %v2401 = vld [vmem:[#allocation11 + $0x318] sm:$0xff]
    %v2402 = vld [vmem:[#allocation11 + $0x320] sm:$0xff]
    %v2403 = vld [vmem:[#allocation11 + $0x328] sm:$0xff]
    %v2404 = vld [vmem:[#allocation11 + $0x330] sm:$0xff]
    %v2405 = vld [vmem:[#allocation11 + $0x338] sm:$0xff]
    %v2406 = vld [vmem:[#allocation11 + $0x340] sm:$0xff]
    %v2407 = vld [vmem:[#allocation11 + $0x348] sm:$0xff]
    %v2408 = vld [vmem:[#allocation11 + $0x350] sm:$0xff]
    %v2409 = vld [vmem:[#allocation11 + $0x358] sm:$0xff]
    %v2410 = vld [vmem:[#allocation11 + $0x360] sm:$0xff]
    %v2411 = vld [vmem:[#allocation11 + $0x368] sm:$0xff]
    %v2412 = vld [vmem:[#allocation11 + $0x370] sm:$0xff]
    %v2413 = vld [vmem:[#allocation11 + $0x378] sm:$0xff]
    %v2414 = vld [vmem:[#allocation11 + $0x380] sm:$0xff]
    %v2415 = vld [vmem:[#allocation11 + $0x388] sm:$0xff]
    %v2416 = vld [vmem:[#allocation11 + $0x390] sm:$0xff]
    %v2417 = vld [vmem:[#allocation11 + $0x398] sm:$0xff]
    %v2418 = vld [vmem:[#allocation11 + $0x3a0] sm:$0xff]
    %v2419 = vld [vmem:[#allocation11 + $0x3a8] sm:$0xff]
    %v2420 = vld [vmem:[#allocation11 + $0x3b0] sm:$0xff]
    %v2421 = vld [vmem:[#allocation11 + $0x3b8] sm:$0xff]
    %v2422 = vld [vmem:[#allocation11 + $0x3c0] sm:$0xff]
    %v2423 = vld [vmem:[#allocation11 + $0x3c8] sm:$0xff]
    %v2424 = vld [vmem:[#allocation11 + $0x3d0] sm:$0xff]
    %v2425 = vld [vmem:[#allocation11 + $0x3d8] sm:$0xff]
    %v2426 = vld [vmem:[#allocation11 + $0x3e0] sm:$0xff]
    %v2427 = vld [vmem:[#allocation11 + $0x3e8] sm:$0xff]
    %v2428 = vld [vmem:[#allocation11 + $0x3f0] sm:$0xff]
    %v2429 = vld [vmem:[#allocation11 + $0x3f8] sm:$0xff]
    %v2558 = vunpack.c.l.b16 %v2302
    %v2559 = vunpack.c.h.b16 %v2302
    %v2560 = vunpack.c.l.b16 %v2303
    %v2561 = vunpack.c.h.b16 %v2303
    %v2562 = vunpack.c.l.b16 %v2304
    %v2563 = vunpack.c.h.b16 %v2304
    %v2564 = vunpack.c.l.b16 %v2305
    %v2565 = vunpack.c.h.b16 %v2305
    %v2566 = vunpack.c.l.b16 %v2306
    %v2567 = vunpack.c.h.b16 %v2306
    %v2568 = vunpack.c.l.b16 %v2307
    %v2569 = vunpack.c.h.b16 %v2307
    %v2570 = vunpack.c.l.b16 %v2308
    %v2571 = vunpack.c.h.b16 %v2308
    %v2572 = vunpack.c.l.b16 %v2309
    %v2573 = vunpack.c.h.b16 %v2309
    %v2574 = vunpack.c.l.b16 %v2310
    %v2575 = vunpack.c.h.b16 %v2310
    %v2576 = vunpack.c.l.b16 %v2311
    %v2577 = vunpack.c.h.b16 %v2311
    %v2578 = vunpack.c.l.b16 %v2312
    %v2579 = vunpack.c.h.b16 %v2312
    %v2580 = vunpack.c.l.b16 %v2313
    %v2581 = vunpack.c.h.b16 %v2313
    %v2582 = vunpack.c.l.b16 %v2314
    %v2583 = vunpack.c.h.b16 %v2314
    %v2584 = vunpack.c.l.b16 %v2315
    %v2585 = vunpack.c.h.b16 %v2315
    %v2586 = vunpack.c.l.b16 %v2316
    %v2587 = vunpack.c.h.b16 %v2316
    %v2588 = vunpack.c.l.b16 %v2317
    %v2589 = vunpack.c.h.b16 %v2317
    %v2590 = vunpack.c.l.b16 %v2318
    %v2591 = vunpack.c.h.b16 %v2318
    %v2592 = vunpack.c.l.b16 %v2319
    %v2593 = vunpack.c.h.b16 %v2319
    %v2594 = vunpack.c.l.b16 %v2320
    %v2595 = vunpack.c.h.b16 %v2320
    %v2596 = vunpack.c.l.b16 %v2321
    %v2597 = vunpack.c.h.b16 %v2321
    %v2598 = vunpack.c.l.b16 %v2322
    %v2599 = vunpack.c.h.b16 %v2322
    %v2600 = vunpack.c.l.b16 %v2323
    %v2601 = vunpack.c.h.b16 %v2323
    %v2602 = vunpack.c.l.b16 %v2324
    %v2603 = vunpack.c.h.b16 %v2324
    %v2604 = vunpack.c.l.b16 %v2325
    %v2605 = vunpack.c.h.b16 %v2325
    %v2606 = vunpack.c.l.b16 %v2326
    %v2607 = vunpack.c.h.b16 %v2326
    %v2608 = vunpack.c.l.b16 %v2327
    %v2609 = vunpack.c.h.b16 %v2327
    %v2610 = vunpack.c.l.b16 %v2328
    %v2611 = vunpack.c.h.b16 %v2328
    %v2612 = vunpack.c.l.b16 %v2329
    %v2613 = vunpack.c.h.b16 %v2329
    %v2614 = vunpack.c.l.b16 %v2330
    %v2615 = vunpack.c.h.b16 %v2330
    %v2616 = vunpack.c.l.b16 %v2331
    %v2617 = vunpack.c.h.b16 %v2331
    %v2618 = vunpack.c.l.b16 %v2332
    %v2619 = vunpack.c.h.b16 %v2332
    %v2620 = vunpack.c.l.b16 %v2333
    %v2621 = vunpack.c.h.b16 %v2333
    %v2622 = vunpack.c.l.b16 %v2334
    %v2623 = vunpack.c.h.b16 %v2334
    %v2624 = vunpack.c.l.b16 %v2335
    %v2625 = vunpack.c.h.b16 %v2335
    %v2626 = vunpack.c.l.b16 %v2336
    %v2627 = vunpack.c.h.b16 %v2336
    %v2628 = vunpack.c.l.b16 %v2337
    %v2629 = vunpack.c.h.b16 %v2337
    %v2630 = vunpack.c.l.b16 %v2338
    %v2631 = vunpack.c.h.b16 %v2338
    %v2632 = vunpack.c.l.b16 %v2339
    %v2633 = vunpack.c.h.b16 %v2339
    %v2634 = vunpack.c.l.b16 %v2340
    %v2635 = vunpack.c.h.b16 %v2340
    %v2636 = vunpack.c.l.b16 %v2341
    %v2637 = vunpack.c.h.b16 %v2341
    %v2638 = vunpack.c.l.b16 %v2342
    %v2639 = vunpack.c.h.b16 %v2342
    %v2640 = vunpack.c.l.b16 %v2343
    %v2641 = vunpack.c.h.b16 %v2343
    %v2642 = vunpack.c.l.b16 %v2344
    %v2643 = vunpack.c.h.b16 %v2344
    %v2644 = vunpack.c.l.b16 %v2345
    %v2645 = vunpack.c.h.b16 %v2345
    %v2646 = vunpack.c.l.b16 %v2346
    %v2647 = vunpack.c.h.b16 %v2346
    %v2648 = vunpack.c.l.b16 %v2347
    %v2649 = vunpack.c.h.b16 %v2347
    %v2650 = vunpack.c.l.b16 %v2348
    %v2651 = vunpack.c.h.b16 %v2348
    %v2652 = vunpack.c.l.b16 %v2349
    %v2653 = vunpack.c.h.b16 %v2349
    %v2654 = vunpack.c.l.b16 %v2350
    %v2655 = vunpack.c.h.b16 %v2350
    %v2656 = vunpack.c.l.b16 %v2351
    %v2657 = vunpack.c.h.b16 %v2351
    %v2658 = vunpack.c.l.b16 %v2352
    %v2659 = vunpack.c.h.b16 %v2352
    %v2660 = vunpack.c.l.b16 %v2353
    %v2661 = vunpack.c.h.b16 %v2353
    %v2662 = vunpack.c.l.b16 %v2354
    %v2663 = vunpack.c.h.b16 %v2354
    %v2664 = vunpack.c.l.b16 %v2355
    %v2665 = vunpack.c.h.b16 %v2355
    %v2666 = vunpack.c.l.b16 %v2356
    %v2667 = vunpack.c.h.b16 %v2356
    %v2668 = vunpack.c.l.b16 %v2357
    %v2669 = vunpack.c.h.b16 %v2357
    %v2670 = vunpack.c.l.b16 %v2358
    %v2671 = vunpack.c.h.b16 %v2358
    %v2672 = vunpack.c.l.b16 %v2359
    %v2673 = vunpack.c.h.b16 %v2359
    %v2674 = vunpack.c.l.b16 %v2360
    %v2675 = vunpack.c.h.b16 %v2360
    %v2676 = vunpack.c.l.b16 %v2361
    %v2677 = vunpack.c.h.b16 %v2361
    %v2678 = vunpack.c.l.b16 %v2362
    %v2679 = vunpack.c.h.b16 %v2362
    %v2680 = vunpack.c.l.b16 %v2363
    %v2681 = vunpack.c.h.b16 %v2363
    %v2682 = vunpack.c.l.b16 %v2364
    %v2683 = vunpack.c.h.b16 %v2364
    %v2684 = vunpack.c.l.b16 %v2365
    %v2685 = vunpack.c.h.b16 %v2365
    %v2686 = vunpack.c.l.b16 %v2366
    %v2687 = vunpack.c.h.b16 %v2366
    %v2688 = vunpack.c.l.b16 %v2367
    %v2689 = vunpack.c.h.b16 %v2367
    %v2690 = vunpack.c.l.b16 %v2368
    %v2691 = vunpack.c.h.b16 %v2368
    %v2692 = vunpack.c.l.b16 %v2369
    %v2693 = vunpack.c.h.b16 %v2369
    %v2694 = vunpack.c.l.b16 %v2370
    %v2695 = vunpack.c.h.b16 %v2370
    %v2696 = vunpack.c.l.b16 %v2371
    %v2697 = vunpack.c.h.b16 %v2371
    %v2698 = vunpack.c.l.b16 %v2372
    %v2699 = vunpack.c.h.b16 %v2372
    %v2700 = vunpack.c.l.b16 %v2373
    %v2701 = vunpack.c.h.b16 %v2373
    %v2702 = vunpack.c.l.b16 %v2374
    %v2703 = vunpack.c.h.b16 %v2374
    %v2704 = vunpack.c.l.b16 %v2375
    %v2705 = vunpack.c.h.b16 %v2375
    %v2706 = vunpack.c.l.b16 %v2376
    %v2707 = vunpack.c.h.b16 %v2376
    %v2708 = vunpack.c.l.b16 %v2377
    %v2709 = vunpack.c.h.b16 %v2377
    %v2710 = vunpack.c.l.b16 %v2378
    %v2711 = vunpack.c.h.b16 %v2378
    %v2712 = vunpack.c.l.b16 %v2379
    %v2713 = vunpack.c.h.b16 %v2379
    %v2714 = vunpack.c.l.b16 %v2380
    %v2715 = vunpack.c.h.b16 %v2380
    %v2716 = vunpack.c.l.b16 %v2381
    %v2717 = vunpack.c.h.b16 %v2381
    %v2718 = vunpack.c.l.b16 %v2382
    %v2719 = vunpack.c.h.b16 %v2382
    %v2720 = vunpack.c.l.b16 %v2383
    %v2721 = vunpack.c.h.b16 %v2383
    %v2722 = vunpack.c.l.b16 %v2384
    %v2723 = vunpack.c.h.b16 %v2384
    %v2724 = vunpack.c.l.b16 %v2385
    %v2725 = vunpack.c.h.b16 %v2385
    %v2726 = vunpack.c.l.b16 %v2386
    %v2727 = vunpack.c.h.b16 %v2386
    %v2728 = vunpack.c.l.b16 %v2387
    %v2729 = vunpack.c.h.b16 %v2387
    %v2730 = vunpack.c.l.b16 %v2388
    %v2731 = vunpack.c.h.b16 %v2388
    %v2732 = vunpack.c.l.b16 %v2389
    %v2733 = vunpack.c.h.b16 %v2389
    %v2734 = vunpack.c.l.b16 %v2390
    %v2735 = vunpack.c.h.b16 %v2390
    %v2736 = vunpack.c.l.b16 %v2391
    %v2737 = vunpack.c.h.b16 %v2391
    %v2738 = vunpack.c.l.b16 %v2392
    %v2739 = vunpack.c.h.b16 %v2392
    %v2740 = vunpack.c.l.b16 %v2393
    %v2741 = vunpack.c.h.b16 %v2393
    %v2742 = vunpack.c.l.b16 %v2394
    %v2743 = vunpack.c.h.b16 %v2394
    %v2744 = vunpack.c.l.b16 %v2395
    %v2745 = vunpack.c.h.b16 %v2395
    %v2746 = vunpack.c.l.b16 %v2396
    %v2747 = vunpack.c.h.b16 %v2396
    %v2748 = vunpack.c.l.b16 %v2397
    %v2749 = vunpack.c.h.b16 %v2397
    %v2750 = vunpack.c.l.b16 %v2398
    %v2751 = vunpack.c.h.b16 %v2398
    %v2752 = vunpack.c.l.b16 %v2399
    %v2753 = vunpack.c.h.b16 %v2399
    %v2754 = vunpack.c.l.b16 %v2400
    %v2755 = vunpack.c.h.b16 %v2400
    %v2756 = vunpack.c.l.b16 %v2401
    %v2757 = vunpack.c.h.b16 %v2401
    %v2758 = vunpack.c.l.b16 %v2402
    %v2759 = vunpack.c.h.b16 %v2402
    %v2760 = vunpack.c.l.b16 %v2403
    %v2761 = vunpack.c.h.b16 %v2403
    %v2762 = vunpack.c.l.b16 %v2404
    %v2763 = vunpack.c.h.b16 %v2404
    %v2764 = vunpack.c.l.b16 %v2405
    %v2765 = vunpack.c.h.b16 %v2405
    %v2766 = vunpack.c.l.b16 %v2406
    %v2767 = vunpack.c.h.b16 %v2406
    %v2768 = vunpack.c.l.b16 %v2407
    %v2769 = vunpack.c.h.b16 %v2407
    %v2770 = vunpack.c.l.b16 %v2408
    %v2771 = vunpack.c.h.b16 %v2408
    %v2772 = vunpack.c.l.b16 %v2409
    %v2773 = vunpack.c.h.b16 %v2409
    %v2774 = vunpack.c.l.b16 %v2410
    %v2775 = vunpack.c.h.b16 %v2410
    %v2776 = vunpack.c.l.b16 %v2411
    %v2777 = vunpack.c.h.b16 %v2411
    %v2778 = vunpack.c.l.b16 %v2412
    %v2779 = vunpack.c.h.b16 %v2412
    %v2780 = vunpack.c.l.b16 %v2413
    %v2781 = vunpack.c.h.b16 %v2413
    %v2782 = vunpack.c.l.b16 %v2414
    %v2783 = vunpack.c.h.b16 %v2414
    %v2784 = vunpack.c.l.b16 %v2415
    %v2785 = vunpack.c.h.b16 %v2415
    %v2786 = vunpack.c.l.b16 %v2416
    %v2787 = vunpack.c.h.b16 %v2416
    %v2788 = vunpack.c.l.b16 %v2417
    %v2789 = vunpack.c.h.b16 %v2417
    %v2790 = vunpack.c.l.b16 %v2418
    %v2791 = vunpack.c.h.b16 %v2418
    %v2792 = vunpack.c.l.b16 %v2419
    %v2793 = vunpack.c.h.b16 %v2419
    %v2794 = vunpack.c.l.b16 %v2420
    %v2795 = vunpack.c.h.b16 %v2420
    %v2796 = vunpack.c.l.b16 %v2421
    %v2797 = vunpack.c.h.b16 %v2421
    %v2798 = vunpack.c.l.b16 %v2422
    %v2799 = vunpack.c.h.b16 %v2422
    %v2800 = vunpack.c.l.b16 %v2423
    %v2801 = vunpack.c.h.b16 %v2423
    %v2802 = vunpack.c.l.b16 %v2424
    %v2803 = vunpack.c.h.b16 %v2424
    %v2804 = vunpack.c.l.b16 %v2425
    %v2805 = vunpack.c.h.b16 %v2425
    %v2806 = vunpack.c.l.b16 %v2426
    %v2807 = vunpack.c.h.b16 %v2426
    %v2808 = vunpack.c.l.b16 %v2427
    %v2809 = vunpack.c.h.b16 %v2427
    %v2810 = vunpack.c.l.b16 %v2428
    %v2811 = vunpack.c.h.b16 %v2428
    %v2812 = vunpack.c.l.b16 %v2429
    %v2813 = vunpack.c.h.b16 %v2429
    %v2814 = vpack.c.b16 %v2562, %v2558
    %v2815 = vpack.c.b16 %v2563, %v2559
    %v2816 = vpack.c.b16 %v2564, %v2560
    %v2817 = vpack.c.b16 %v2565, %v2561
    %v2818 = vpack.c.b16 %v2570, %v2566
    %v2819 = vpack.c.b16 %v2571, %v2567
    %v2820 = vpack.c.b16 %v2572, %v2568
    %v2821 = vpack.c.b16 %v2573, %v2569
    %v2822 = vpack.c.b16 %v2578, %v2574
    %v2823 = vpack.c.b16 %v2579, %v2575
    %v2824 = vpack.c.b16 %v2580, %v2576
    %v2825 = vpack.c.b16 %v2581, %v2577
    %v2826 = vpack.c.b16 %v2586, %v2582
    %v2827 = vpack.c.b16 %v2587, %v2583
    %v2828 = vpack.c.b16 %v2588, %v2584
    %v2829 = vpack.c.b16 %v2589, %v2585
    %v2830 = vpack.c.b16 %v2594, %v2590
    %v2831 = vpack.c.b16 %v2595, %v2591
    %v2832 = vpack.c.b16 %v2596, %v2592
    %v2833 = vpack.c.b16 %v2597, %v2593
    %v2834 = vpack.c.b16 %v2602, %v2598
    %v2835 = vpack.c.b16 %v2603, %v2599
    %v2836 = vpack.c.b16 %v2604, %v2600
    %v2837 = vpack.c.b16 %v2605, %v2601
    %v2838 = vpack.c.b16 %v2610, %v2606
    %v2839 = vpack.c.b16 %v2611, %v2607
    %v2840 = vpack.c.b16 %v2612, %v2608
    %v2841 = vpack.c.b16 %v2613, %v2609
    %v2842 = vpack.c.b16 %v2618, %v2614
    %v2843 = vpack.c.b16 %v2619, %v2615
    %v2844 = vpack.c.b16 %v2620, %v2616
    %v2845 = vpack.c.b16 %v2621, %v2617
    %v2846 = vpack.c.b16 %v2626, %v2622
    %v2847 = vpack.c.b16 %v2627, %v2623
    %v2848 = vpack.c.b16 %v2628, %v2624
    %v2849 = vpack.c.b16 %v2629, %v2625
    %v2850 = vpack.c.b16 %v2634, %v2630
    %v2851 = vpack.c.b16 %v2635, %v2631
    %v2852 = vpack.c.b16 %v2636, %v2632
    %v2853 = vpack.c.b16 %v2637, %v2633
    %v2854 = vpack.c.b16 %v2642, %v2638
    %v2855 = vpack.c.b16 %v2643, %v2639
    %v2856 = vpack.c.b16 %v2644, %v2640
    %v2857 = vpack.c.b16 %v2645, %v2641
    %v2858 = vpack.c.b16 %v2650, %v2646
    %v2859 = vpack.c.b16 %v2651, %v2647
    %v2860 = vpack.c.b16 %v2652, %v2648
    %v2861 = vpack.c.b16 %v2653, %v2649
    %v2862 = vpack.c.b16 %v2658, %v2654
    %v2863 = vpack.c.b16 %v2659, %v2655
    %v2864 = vpack.c.b16 %v2660, %v2656
    %v2865 = vpack.c.b16 %v2661, %v2657
    %v2866 = vpack.c.b16 %v2666, %v2662
    %v2867 = vpack.c.b16 %v2667, %v2663
    %v2868 = vpack.c.b16 %v2668, %v2664
    %v2869 = vpack.c.b16 %v2669, %v2665
    %v2870 = vpack.c.b16 %v2674, %v2670
    %v2871 = vpack.c.b16 %v2675, %v2671
    %v2872 = vpack.c.b16 %v2676, %v2672
    %v2873 = vpack.c.b16 %v2677, %v2673
    %v2874 = vpack.c.b16 %v2682, %v2678
    %v2875 = vpack.c.b16 %v2683, %v2679
    %v2876 = vpack.c.b16 %v2684, %v2680
    %v2877 = vpack.c.b16 %v2685, %v2681
    %v2878 = vpack.c.b16 %v2690, %v2686
    %v2879 = vpack.c.b16 %v2691, %v2687
    %v2880 = vpack.c.b16 %v2692, %v2688
    %v2881 = vpack.c.b16 %v2693, %v2689
    %v2882 = vpack.c.b16 %v2698, %v2694
    %v2883 = vpack.c.b16 %v2699, %v2695
    %v2884 = vpack.c.b16 %v2700, %v2696
    %v2885 = vpack.c.b16 %v2701, %v2697
    %v2886 = vpack.c.b16 %v2706, %v2702
    %v2887 = vpack.c.b16 %v2707, %v2703
    %v2888 = vpack.c.b16 %v2708, %v2704
    %v2889 = vpack.c.b16 %v2709, %v2705
    %v2890 = vpack.c.b16 %v2714, %v2710
    %v2891 = vpack.c.b16 %v2715, %v2711
    %v2892 = vpack.c.b16 %v2716, %v2712
    %v2893 = vpack.c.b16 %v2717, %v2713
    %v2894 = vpack.c.b16 %v2722, %v2718
    %v2895 = vpack.c.b16 %v2723, %v2719
    %v2896 = vpack.c.b16 %v2724, %v2720
    %v2897 = vpack.c.b16 %v2725, %v2721
    %v2898 = vpack.c.b16 %v2730, %v2726
    %v2899 = vpack.c.b16 %v2731, %v2727
    %v2900 = vpack.c.b16 %v2732, %v2728
    %v2901 = vpack.c.b16 %v2733, %v2729
    %v2902 = vpack.c.b16 %v2738, %v2734
    %v2903 = vpack.c.b16 %v2739, %v2735
    %v2904 = vpack.c.b16 %v2740, %v2736
    %v2905 = vpack.c.b16 %v2741, %v2737
    %v2906 = vpack.c.b16 %v2746, %v2742
    %v2907 = vpack.c.b16 %v2747, %v2743
    %v2908 = vpack.c.b16 %v2748, %v2744
    %v2909 = vpack.c.b16 %v2749, %v2745
    %v2910 = vpack.c.b16 %v2754, %v2750
    %v2911 = vpack.c.b16 %v2755, %v2751
    %v2912 = vpack.c.b16 %v2756, %v2752
    %v2913 = vpack.c.b16 %v2757, %v2753
    %v2914 = vpack.c.b16 %v2762, %v2758
    %v2915 = vpack.c.b16 %v2763, %v2759
    %v2916 = vpack.c.b16 %v2764, %v2760
    %v2917 = vpack.c.b16 %v2765, %v2761
    %v2918 = vpack.c.b16 %v2770, %v2766
    %v2919 = vpack.c.b16 %v2771, %v2767
    %v2920 = vpack.c.b16 %v2772, %v2768
    %v2921 = vpack.c.b16 %v2773, %v2769
    %v2922 = vpack.c.b16 %v2778, %v2774
    %v2923 = vpack.c.b16 %v2779, %v2775
    %v2924 = vpack.c.b16 %v2780, %v2776
    %v2925 = vpack.c.b16 %v2781, %v2777
    %v2926 = vpack.c.b16 %v2786, %v2782
    %v2927 = vpack.c.b16 %v2787, %v2783
    %v2928 = vpack.c.b16 %v2788, %v2784
    %v2929 = vpack.c.b16 %v2789, %v2785
    %v2930 = vpack.c.b16 %v2794, %v2790
    %v2931 = vpack.c.b16 %v2795, %v2791
    %v2932 = vpack.c.b16 %v2796, %v2792
    %v2933 = vpack.c.b16 %v2797, %v2793
    %v2934 = vpack.c.b16 %v2802, %v2798
    %v2935 = vpack.c.b16 %v2803, %v2799
    %v2936 = vpack.c.b16 %v2804, %v2800
    %v2937 = vpack.c.b16 %v2805, %v2801
    %v2938 = vpack.c.b16 %v2810, %v2806
    %v2939 = vpack.c.b16 %v2811, %v2807
    %v2940 = vpack.c.b16 %v2812, %v2808
    %v2941 = vpack.c.b16 %v2813, %v2809
    %3070 = vmatprep.subr.bf16.mxu0 %v2815
    %3071 = vmatpush1.bf16.msra.mxu0 %v2814
    %3072 = vmatprep.subr.bf16.mxu0 %v2819
    %3073 = vmatpush1.bf16.msra.mxu0 %v2818
    %3074 = vmatprep.subr.bf16.mxu0 %v2823
    %3075 = vmatpush1.bf16.msra.mxu0 %v2822
    %3076 = vmatprep.subr.bf16.mxu0 %v2827
    %3077 = vmatpush1.bf16.msra.mxu0 %v2826
    %3078 = vmatprep.subr.bf16.mxu0 %v2831
    %3079 = vmatpush1.bf16.msra.mxu0 %v2830
    %3080 = vmatprep.subr.bf16.mxu0 %v2835
    %3081 = vmatpush1.bf16.msra.mxu0 %v2834
    %3082 = vmatprep.subr.bf16.mxu0 %v2839
    %3083 = vmatpush1.bf16.msra.mxu0 %v2838
    %3084 = vmatprep.subr.bf16.mxu0 %v2843
    %3085 = vmatpush1.bf16.msra.mxu0 %v2842
    %3086 = vmatprep.subr.bf16.mxu0 %v2847
    %3087 = vmatpush1.bf16.msra.mxu0 %v2846
    %3088 = vmatprep.subr.bf16.mxu0 %v2851
    %3089 = vmatpush1.bf16.msra.mxu0 %v2850
    %3090 = vmatprep.subr.bf16.mxu0 %v2855
    %3091 = vmatpush1.bf16.msra.mxu0 %v2854
    %3092 = vmatprep.subr.bf16.mxu0 %v2859
    %3093 = vmatpush1.bf16.msra.mxu0 %v2858
    %3094 = vmatprep.subr.bf16.mxu0 %v2863
    %3095 = vmatpush1.bf16.msra.mxu0 %v2862
    %3096 = vmatprep.subr.bf16.mxu0 %v2867
    %3097 = vmatpush1.bf16.msra.mxu0 %v2866
    %3098 = vmatprep.subr.bf16.mxu0 %v2871
    %3099 = vmatpush1.bf16.msra.mxu0 %v2870
    %3100 = vmatprep.subr.bf16.mxu0 %v2875
    %3101 = vmatpush1.bf16.msra.mxu0 %v2874
    %3102 = vmatprep.mubr.bf16.mxu0 %v2295
    %3103 = vmatmul.mubr.bf16.gmra.mrb[0].mxu0 %v2294
    %v3104 = vpop.f32.mrb[0].mxu0
    %v3105 = vadd.f32 0.0, %v3104
    %v3106 = vpop.f32.mrb[0].mxu0
    %v3107 = vadd.f32 0.0, %v3106
    %v3108 = vpop.f32.mrb[0].mxu0
    %v3109 = vadd.f32 0.0, %v3108
    %v3110 = vpop.f32.mrb[0].mxu0
    %v3111 = vadd.f32 0.0, %v3110
    %3112 = vmatprep.mubr.bf16.mxu0 %v2299
    %3113 = vmatmul.mubr.bf16.gmra.mrb[0].mxu0 %v2298
    %v3114 = vpop.f32.mrb[0].mxu0
    %v3115 = vadd.f32 0.0, %v3114
    %v3116 = vpop.f32.mrb[0].mxu0
    %v3117 = vadd.f32 0.0, %v3116
    %v3118 = vpop.f32.mrb[0].mxu0
    %v3119 = vpop.f32.mrb[0].mxu0
    %3120 = vdwg.mxu0
    %3121 = vmatprep.subr.bf16.mxu0 %v2879
    %3122 = vmatpush1.bf16.msra.mxu0 %v2878
    %3123 = vmatprep.subr.bf16.mxu0 %v2883
    %3124 = vmatpush1.bf16.msra.mxu0 %v2882
    %3125 = vmatprep.subr.bf16.mxu0 %v2887
    %3126 = vmatpush1.bf16.msra.mxu0 %v2886
    %3127 = vmatprep.subr.bf16.mxu0 %v2891
    %3128 = vmatpush1.bf16.msra.mxu0 %v2890
    %3129 = vmatprep.subr.bf16.mxu0 %v2895
    %3130 = vmatpush1.bf16.msra.mxu0 %v2894
    %3131 = vmatprep.subr.bf16.mxu0 %v2899
    %3132 = vmatpush1.bf16.msra.mxu0 %v2898
    %3133 = vmatprep.subr.bf16.mxu0 %v2903
    %3134 = vmatpush1.bf16.msra.mxu0 %v2902
    %3135 = vmatprep.subr.bf16.mxu0 %v2907
    %3136 = vmatpush1.bf16.msra.mxu0 %v2906
    %3137 = vmatprep.subr.bf16.mxu0 %v2911
    %3138 = vmatpush1.bf16.msra.mxu0 %v2910
    %3139 = vmatprep.subr.bf16.mxu0 %v2915
    %3140 = vmatpush1.bf16.msra.mxu0 %v2914
    %3141 = vmatprep.subr.bf16.mxu0 %v2919
    %3142 = vmatpush1.bf16.msra.mxu0 %v2918
    %3143 = vmatprep.subr.bf16.mxu0 %v2923
    %3144 = vmatpush1.bf16.msra.mxu0 %v2922
    %3145 = vmatprep.subr.bf16.mxu0 %v2927
    %3146 = vmatpush1.bf16.msra.mxu0 %v2926
    %3147 = vmatprep.subr.bf16.mxu0 %v2931
    %3148 = vmatpush1.bf16.msra.mxu0 %v2930
    %3149 = vmatprep.subr.bf16.mxu0 %v2935
    %3150 = vmatpush1.bf16.msra.mxu0 %v2934
    %3151 = vmatprep.subr.bf16.mxu0 %v2939
    %3152 = vmatpush1.bf16.msra.mxu0 %v2938
    %3153 = vmatprep.mubr.bf16.mxu0 %v2297
    %3154 = vmatmul.mubr.bf16.gmra.mrb[0].mxu0 %v2296
    %v3155 = vpop.f32.mrb[0].mxu0
    %v3156 = vadd.f32 %v3105, %v3155
    %v3157 = vpop.f32.mrb[0].mxu0
    %v3158 = vadd.f32 %v3107, %v3157
    %v3159 = vpop.f32.mrb[0].mxu0
    %v3160 = vadd.f32 %v3109, %v3159
    %v3161 = vpop.f32.mrb[0].mxu0
    %v3162 = vadd.f32 %v3111, %v3161
    %3163 = vmatprep.mubr.bf16.mxu0 %v2301
    %3164 = vmatmul.mubr.bf16.gmra.mrb[0].mxu0 %v2300
    %v3165 = vpop.f32.mrb[0].mxu0
    %v3166 = vadd.f32 %v3115, %v3165
    %v3167 = vpop.f32.mrb[0].mxu0
    %v3168 = vadd.f32 %v3117, %v3167
    %v3169 = vpop.f32.mrb[0].mxu0
    %v3170 = vpop.f32.mrb[0].mxu0
    %3171 = vdwg.mxu0
    %3172 = vmatprep.subr.bf16.mxu0 %v2817
    %3173 = vmatpush1.bf16.msra.mxu0 %v2816
    %3174 = vmatprep.subr.bf16.mxu0 %v2821
    %3175 = vmatpush1.bf16.msra.mxu0 %v2820
    %3176 = vmatprep.subr.bf16.mxu0 %v2825
    %3177 = vmatpush1.bf16.msra.mxu0 %v2824
    %3178 = vmatprep.subr.bf16.mxu0 %v2829
    %3179 = vmatpush1.bf16.msra.mxu0 %v2828
    %3180 = vmatprep.subr.bf16.mxu0 %v2833
    %3181 = vmatpush1.bf16.msra.mxu0 %v2832
    %3182 = vmatprep.subr.bf16.mxu0 %v2837
    %3183 = vmatpush1.bf16.msra.mxu0 %v2836
    %3184 = vmatprep.subr.bf16.mxu0 %v2841
    %3185 = vmatpush1.bf16.msra.mxu0 %v2840
    %3186 = vmatprep.subr.bf16.mxu0 %v2845
    %3187 = vmatpush1.bf16.msra.mxu0 %v2844
    %3188 = vmatprep.subr.bf16.mxu0 %v2849
    %3189 = vmatpush1.bf16.msra.mxu0 %v2848
    %3190 = vmatprep.subr.bf16.mxu0 %v2853
    %3191 = vmatpush1.bf16.msra.mxu0 %v2852
    %3192 = vmatprep.subr.bf16.mxu0 %v2857
    %3193 = vmatpush1.bf16.msra.mxu0 %v2856
    %3194 = vmatprep.subr.bf16.mxu0 %v2861
    %3195 = vmatpush1.bf16.msra.mxu0 %v2860
    %3196 = vmatprep.subr.bf16.mxu0 %v2865
    %3197 = vmatpush1.bf16.msra.mxu0 %v2864
    %3198 = vmatprep.subr.bf16.mxu0 %v2869
    %3199 = vmatpush1.bf16.msra.mxu0 %v2868
    %3200 = vmatprep.subr.bf16.mxu0 %v2873
    %3201 = vmatpush1.bf16.msra.mxu0 %v2872
    %3202 = vmatprep.subr.bf16.mxu0 %v2877
    %3203 = vmatpush1.bf16.msra.mxu0 %v2876
    %3204 = vmatprep.mubr.bf16.mxu0 %v2295
    %3205 = vmatmul.mubr.bf16.gmra.mrb[0].mxu0 %v2294
    %v3206 = vpop.f32.mrb[0].mxu0
    %v3207 = vadd.f32 0.0, %v3206
    %v3208 = vpop.f32.mrb[0].mxu0
    %v3209 = vadd.f32 0.0, %v3208
    %v3210 = vpop.f32.mrb[0].mxu0
    %v3211 = vadd.f32 0.0, %v3210
    %v3212 = vpop.f32.mrb[0].mxu0
    %v3213 = vadd.f32 0.0, %v3212
    %3214 = vmatprep.mubr.bf16.mxu0 %v2299
    %3215 = vmatmul.mubr.bf16.gmra.mrb[0].mxu0 %v2298
    %v3216 = vpop.f32.mrb[0].mxu0
    %v3217 = vadd.f32 0.0, %v3216
    %v3218 = vpop.f32.mrb[0].mxu0
    %v3219 = vadd.f32 0.0, %v3218
    %v3220 = vpop.f32.mrb[0].mxu0
    %v3221 = vpop.f32.mrb[0].mxu0
    %3222 = vdwg.mxu0
    %3223 = vmatprep.subr.bf16.mxu0 %v2881
    %3224 = vmatpush1.bf16.msra.mxu0 %v2880
    %3225 = vmatprep.subr.bf16.mxu0 %v2885
    %3226 = vmatpush1.bf16.msra.mxu0 %v2884
    %3227 = vmatprep.subr.bf16.mxu0 %v2889
    %3228 = vmatpush1.bf16.msra.mxu0 %v2888
    %3229 = vmatprep.subr.bf16.mxu0 %v2893
    %3230 = vmatpush1.bf16.msra.mxu0 %v2892
    %3231 = vmatprep.subr.bf16.mxu0 %v2897
    %3232 = vmatpush1.bf16.msra.mxu0 %v2896
    %3233 = vmatprep.subr.bf16.mxu0 %v2901
    %3234 = vmatpush1.bf16.msra.mxu0 %v2900
    %3235 = vmatprep.subr.bf16.mxu0 %v2905
    %3236 = vmatpush1.bf16.msra.mxu0 %v2904
    %3237 = vmatprep.subr.bf16.mxu0 %v2909
    %3238 = vmatpush1.bf16.msra.mxu0 %v2908
    %3239 = vmatprep.subr.bf16.mxu0 %v2913
    %3240 = vmatpush1.bf16.msra.mxu0 %v2912
    %3241 = vmatprep.subr.bf16.mxu0 %v2917
    %3242 = vmatpush1.bf16.msra.mxu0 %v2916
    %3243 = vmatprep.subr.bf16.mxu0 %v2921
    %3244 = vmatpush1.bf16.msra.mxu0 %v2920
    %3245 = vmatprep.subr.bf16.mxu0 %v2925
    %3246 = vmatpush1.bf16.msra.mxu0 %v2924
    %3247 = vmatprep.subr.bf16.mxu0 %v2929
    %3248 = vmatpush1.bf16.msra.mxu0 %v2928
    %3249 = vmatprep.subr.bf16.mxu0 %v2933
    %3250 = vmatpush1.bf16.msra.mxu0 %v2932
    %3251 = vmatprep.subr.bf16.mxu0 %v2937
    %3252 = vmatpush1.bf16.msra.mxu0 %v2936
    %3253 = vmatprep.subr.bf16.mxu0 %v2941
    %3254 = vmatpush1.bf16.msra.mxu0 %v2940
    %3255 = vmatprep.mubr.bf16.mxu0 %v2297
    %3256 = vmatmul.mubr.bf16.gmra.mrb[0].mxu0 %v2296
    %v3257 = vpop.f32.mrb[0].mxu0
    %v3258 = vadd.f32 %v3207, %v3257
    %v3259 = vpop.f32.mrb[0].mxu0
    %v3260 = vadd.f32 %v3209, %v3259
    %v3261 = vpop.f32.mrb[0].mxu0
    %v3262 = vadd.f32 %v3211, %v3261
    %v3263 = vpop.f32.mrb[0].mxu0
    %v3264 = vadd.f32 %v3213, %v3263
    %3265 = vmatprep.mubr.bf16.mxu0 %v2301
    %3266 = vmatmul.mubr.bf16.gmra.mrb[0].mxu0 %v2300
    %v3267 = vpop.f32.mrb[0].mxu0
    %v3268 = vadd.f32 %v3217, %v3267
    %v3269 = vpop.f32.mrb[0].mxu0
    %v3270 = vadd.f32 %v3219, %v3269
    %v3271 = vpop.f32.mrb[0].mxu0
    %v3272 = vpop.f32.mrb[0].mxu0
    %3273 = vdwg.mxu0
    %3274 = vst [vmem:[#allocation14] sm:$0xff] %v3156
    %3275 = vst [vmem:[#allocation14 + $0x8] sm:$0xff] %v3158
    %3276 = vst [vmem:[#allocation14 + $0x10] sm:$0xff] %v3258
    %3277 = vst [vmem:[#allocation14 + $0x18] sm:$0xff] %v3260
    %3278 = vst [vmem:[#allocation14 + $0x20] sm:$0xff] %v3160
    %3279 = vst [vmem:[#allocation14 + $0x28] sm:$0xff] %v3162
    %3280 = vst [vmem:[#allocation14 + $0x30] sm:$0xff] %v3262
    %3281 = vst [vmem:[#allocation14 + $0x38] sm:$0xff] %v3264
    %v3286 = vcombine.low %v3166, %v3168
    %v3287 = vcombine.low %v3268, %v3270
    %v3289 = vunpack.c.l.s4 1966171168
    %v3290 = vunpack.c.0.s8 %v3289
    %v3291 = vlaneseq
    %v3292 = vshrl.u32 %v3291, 7
    %v3293 = vsub.s32 %v3290, %v3292
    %v3294 = vrot.slane %v3286, %v3293
    %v3296 = vunpack.c.l.s4 1966171168
    %v3297 = vunpack.c.0.s8 %v3296
    %v3298 = vlaneseq
    %v3299 = vshrl.u32 %v3298, 7
    %v3300 = vsub.s32 %v3297, %v3299
    %v3301 = vrot.slane %v3287, %v3300
    %v3302 = vcombine.low %v3294, %v3301
    %v3303 = vcombine.high %v3294, %v3301
    %v3305 = vunpack.c.l.s4 1966171168
    %v3306 = vunpack.c.0.s8 %v3305
    %v3307 = vlaneseq
    %v3308 = vshrl.u32 %v3307, 7
    %v3309 = vsub.s32 %v3306, %v3308
    %v3310 = vrot.slane %v3302, %v3309
    %v3312 = vunpack.c.l.s4 1966171168
    %v3313 = vunpack.c.0.s8 %v3312
    %v3314 = vlaneseq
    %v3315 = vshrl.u32 %v3314, 7
    %v3316 = vsub.s32 %v3313, %v3315
    %v3317 = vrot.slane %v3303, %v3316
    %v3318 = vlaneseq
    %v3319 = vshrl.u32 %v3318, 7
    %v3320 = vsub.s32 0, %v3319
    %v3321 = vrot.slane %v3310, %v3320
    %v3322 = vlaneseq
    %v3323 = vshrl.u32 %v3322, 7
    %v3324 = vsub.s32 1, %v3323
    %v3325 = vrot.slane %v3310, %v3324
    %v3326 = vlaneseq
    %v3327 = vshrl.u32 %v3326, 7
    %v3328 = vsub.s32 2, %v3327
    %v3329 = vrot.slane %v3310, %v3328
    %v3330 = vlaneseq
    %v3331 = vshrl.u32 %v3330, 7
    %v3332 = vsub.s32 3, %v3331
    %v3333 = vrot.slane %v3310, %v3332
    %v3334 = vlaneseq
    %v3335 = vshrl.u32 %v3334, 7
    %v3336 = vsub.s32 0, %v3335
    %v3337 = vrot.slane %v3317, %v3336
    %v3338 = vlaneseq
    %v3339 = vshrl.u32 %v3338, 7
    %v3340 = vsub.s32 1, %v3339
    %v3341 = vrot.slane %v3317, %v3340
    %v3342 = vlaneseq
    %v3343 = vshrl.u32 %v3342, 7
    %v3344 = vsub.s32 2, %v3343
    %v3345 = vrot.slane %v3317, %v3344
    %v3346 = vlaneseq
    %v3347 = vshrl.u32 %v3346, 7
    %v3348 = vsub.s32 3, %v3347
    %v3349 = vrot.slane %v3317, %v3348
    %v3358 = vsub.f32 %v2084, %v3321
    %v3359 = vsub.f32 %v2086, %v3325
    %v3360 = vsub.f32 %v2170, %v3329
    %v3361 = vsub.f32 %v2172, %v3333
    %v3362 = vsub.f32 %v2088, %v3337
    %v3363 = vsub.f32 %v2090, %v3341
    %v3364 = vsub.f32 %v2174, %v3345
    %v3365 = vsub.f32 %v2176, %v3349
    %3366 = vst [vmem:[#allocation13] sm:$0xff] %v3358
    %3367 = vst [vmem:[#allocation13 + $0x8] sm:$0xff] %v3359
    %3368 = vst [vmem:[#allocation13 + $0x10] sm:$0xff] %v3360
    %3369 = vst [vmem:[#allocation13 + $0x18] sm:$0xff] %v3361
    %3370 = vst [vmem:[#allocation13 + $0x20] sm:$0xff] %v3362
    %3371 = vst [vmem:[#allocation13 + $0x28] sm:$0xff] %v3363
    %3372 = vst [vmem:[#allocation13 + $0x30] sm:$0xff] %v3364
    %3373 = vst [vmem:[#allocation13 + $0x38] sm:$0xff] %v3365
    // Predicated region
    $region50: #{tpu_custom_call.1} parent=1 // pred_check
      _
    $region51: #{tpu_custom_call.1} parent=1 // pred_check_branch
      %3375 = sbr.rel (0) target = $region53
    $region52: #{tpu_custom_call.1} parent=1 // pred_region
      %s3377 = ssub.s32 1024, 1024
      %3378 = vsyncadd [#allocation4], %s3377
      %s3379 = sshll.u32 [#allocation13], 4
      %s3380 = int_to_ptr.vmem [resolvable:$true] %s3379
      %3385 = dma.vmem_to_hbm [thread:$0]  %s3380, 1024, %s6, [#allocation4], 512, 512, 32
    $region53: #{tpu_custom_call.1} parent=1 // pred_fallthru
      _
    // Predicated region
    $region54: #{tpu_custom_call.1} parent=1 // pred_check
      _
    $region55: #{tpu_custom_call.1} parent=1 // pred_check_branch
      %3387 = sbr.rel (0) target = $region57
    $region56: #{tpu_custom_call.1} parent=1 // pred_region
      %s3389 = ssub.s32 1024, 1024
      %3390 = vsyncadd [#allocation15], %s3389
      %s3391 = sshll.u32 [#allocation14], 4
      %s3392 = int_to_ptr.vmem [resolvable:$true] %s3391
      %3397 = dma.vmem_to_hbm [thread:$0]  %s3392, 1024, %s7, [#allocation15], 512, 512, 32
    $region57: #{tpu_custom_call.1} parent=1 // pred_fallthru
      _
    // Predicated region
    $region58: #{tpu_custom_call.1} parent=1 // pred_check
      _
    $region59: #{tpu_custom_call.1} parent=1 // pred_check_branch
      %3399 = sbr.rel (0) target = $region61
    $region60: #{tpu_custom_call.1} parent=1 // pred_region
      %3400 = dma.done [#allocation4], 1024
    $region61: #{tpu_custom_call.1} parent=1 // pred_fallthru
      _
    // Predicated region
    $region62: #{tpu_custom_call.1} parent=1 // pred_check
      _
    $region63: #{tpu_custom_call.1} parent=1 // pred_check_branch
      %3402 = sbr.rel (0) target = $region65
    $region64: #{tpu_custom_call.1} parent=1 // pred_region
      %3403 = dma.done [#allocation15], 1024
    $region65: #{tpu_custom_call.1} parent=1 // pred_fallthru
      _
    %3404 = vsyncpa [#allocation3], 1
    %3405 = vsyncpa [#allocation6], 1
    %3406 = vsyncpa [#allocation9], 1
    %3407 = vsyncpa [#allocation12], 1
    %3408 = vsyncpa [#allocation4], 1
    %3409 = vsyncpa [#allocation15], 1

</llo_original>
